<compile_context>
chip_gen: v7x
topology: tpu7x:2x2x1
jax: 0.10.0
libtpu: 0.0.40
codegen_flags: <defaults>
</compile_context>

<pallas_src>
import math
import functools

import jax
import jax.numpy as jnp
from jax.experimental import pallas as pl
from jax.experimental.pallas import tpu as pltpu

# ---- model hyperparameters (small, deterministic synthetic config) ----------
N_VOCAB = 50
D_MODEL = 32
N_HEAD = 4
HEAD_DIM = D_MODEL // N_HEAD
N_LAYERS = 2
D_FF = 64          # TODO(synk): PyTorch default dim_feedforward=2048; scaled down.
SEQ_LEN = 8
BATCH = 2
MAX_LEN = 64
LN_EPS = 1e-5
V_PAD = 128        # lane-dense padded vocab width for the final projection
NEG_INF = -1e30    # finite stand-in for log(0) in the causal mask
EMB_SCALE = math.sqrt(N_VOCAB)   # module multiplies by sqrt(n_vocab), not sqrt(d_model)


# ---- in-kernel helpers -------------------------------------------------------
def _layernorm(x, w, b):
    mu = jnp.mean(x, axis=-1, keepdims=True)
    xc = x - mu
    var = jnp.mean(xc * xc, axis=-1, keepdims=True)
    return xc * jax.lax.rsqrt(var + LN_EPS) * w + b


# ---- single fused forward kernel --------------------------------------------
def _fused_forward_kernel(batch, seq,
                          tok_ref, emb_ref, pe_ref,
                          w_in_ref, b_in_ref, w_out_ref, b_out_ref,
                          ln1_w_ref, ln1_b_ref,
                          w_ff1_ref, b_ff1_ref, w_ff2_ref, b_ff2_ref,
                          ln2_w_ref, ln2_b_ref,
                          fc_w_ref, fc_b_ref, o_ref):
    bs = batch * seq

    # ---- embedding lookup (one-hot matmul) * sqrt(n_vocab) + positional enc ----
    tok = tok_ref[...]                                                 # (BS, 1) int32
    vocab_ids = jax.lax.broadcasted_iota(jnp.int32, (bs, N_VOCAB), 1)  # (BS, V)
    onehot = (tok == vocab_ids).astype(jnp.float32)                    # (BS, V)
    x = jnp.dot(onehot, emb_ref[...], preferred_element_type=jnp.float32)
    x = x * EMB_SCALE + pe_ref[...]                                    # (BS, D)

    # ---- causal mask built in-kernel (0 on/below diag, large-negative above) ----
    row = jax.lax.broadcasted_iota(jnp.int32, (seq, seq), 0)
    col = jax.lax.broadcasted_iota(jnp.int32, (seq, seq), 1)
    mask = jnp.where(col <= row, 0.0, NEG_INF).astype(jnp.float32)     # (S, S)

    # ---- encoder layers (post-norm, ReLU FFN), statically unrolled --------------
    for l in range(N_LAYERS):
        # combined QKV projection; 1/sqrt(head_dim) is folded into the Q weights.
        qkv = jnp.dot(x, w_in_ref[l], preferred_element_type=jnp.float32) + b_in_ref[l]
        q3 = qkv[:, :D_MODEL].reshape(batch, seq, D_MODEL)
        k3 = qkv[:, D_MODEL:2 * D_MODEL].reshape(batch, seq, D_MODEL)
        v3 = qkv[:, 2 * D_MODEL:].reshape(batch, seq, D_MODEL)

        heads = []
        for h in range(N_HEAD):
            sl = slice(h * HEAD_DIM, (h + 1) * HEAD_DIM)
            qh = q3[:, :, sl]                                          # (B, S, hd)
            kh = k3[:, :, sl]
            vh = v3[:, :, sl]
            s = jnp.einsum('bqd,bkd->bqk', qh, kh,
                           preferred_element_type=jnp.float32) + mask  # (B, S, S)
            s = s - jnp.max(s, axis=-1, keepdims=True)
            p = jnp.exp(s)
            p = p / jnp.sum(p, axis=-1, keepdims=True)
            heads.append(jnp.einsum('bqk,bkd->bqd', p, vh,
                                    preferred_element_type=jnp.float32))
        # concatenated heads -> single output projection
        attn = jnp.concatenate(heads, axis=-1).reshape(bs, D_MODEL)
        attn = (jnp.dot(attn, w_out_ref[l], preferred_element_type=jnp.float32)
                + b_out_ref[l])

        # residual + LayerNorm 1
        y = _layernorm(x + attn, ln1_w_ref[l], ln1_b_ref[l])

        # feed-forward (ReLU) + residual + LayerNorm 2
        h1 = jnp.maximum(
            jnp.dot(y, w_ff1_ref[l], preferred_element_type=jnp.float32) + b_ff1_ref[l],
            0.0)
        ff = jnp.dot(h1, w_ff2_ref[l], preferred_element_type=jnp.float32) + b_ff2_ref[l]
        x = _layernorm(y + ff, ln2_w_ref[l], ln2_b_ref[l])

    # ---- lane-dense final vocabulary projection (padded to 128 lanes) ----------
    logits = (jnp.dot(x, fc_w_ref[...], preferred_element_type=jnp.float32)
              + fc_b_ref[...])                                         # (BS, V_PAD)
    o_ref[...] = logits


# ---- full forward pass: single pallas_call, thin layout glue in the wrapper --
@jax.jit
def transformer_forward(tokens, params):
    # tokens: (S, B) int32, seq-first like PyTorch nn.Transformer (batch_first=False)
    S, B = tokens.shape
    tok_bs = jnp.transpose(tokens, (1, 0)).reshape(B * S, 1).astype(jnp.int32)
    pe_bs = jnp.tile(params['pe'][:S], (B, 1))                         # (B*S, D)

    operands = (tok_bs, params['embedding'], pe_bs,
                params['w_in'], params['b_in'], params['w_out'], params['b_out'],
                params['ln1_w'], params['ln1_b'],
                params['w_ff1'], params['b_ff1'], params['w_ff2'], params['b_ff2'],
                params['ln2_w'], params['ln2_b'],
                params['fc_w_pad'], params['fc_b_pad'])

    kernel = functools.partial(_fused_forward_kernel, B, S)
    vmem_spec = pl.BlockSpec(memory_space=pltpu.MemorySpace.VMEM)
    logits_pad = pl.pallas_call(
        kernel,
        out_shape=jax.ShapeDtypeStruct((B * S, V_PAD), jnp.float32),
        in_specs=[vmem_spec] * len(operands),
        out_specs=vmem_spec,
    )(*operands)

    logits = logits_pad[:, :N_VOCAB].reshape(B, S, N_VOCAB)
    return jnp.transpose(logits, (1, 0, 2))                            # (S, B, V)


# ---- deterministic parameter initialization ----------------------------------
def init_params(key):
    keys = jax.random.split(key, 3)
    p = {}
    # matches the module's new-model init: embedding U(-0.1,0.1), fc U(-0.1,0.1), fc bias 0
    p['embedding'] = jax.random.uniform(keys[0], (N_VOCAB, D_MODEL), jnp.float32, -0.1, 0.1)
    fc_w = jax.random.uniform(keys[1], (D_MODEL, N_VOCAB), jnp.float32, -0.1, 0.1)
    p['fc_w_pad'] = jnp.zeros((D_MODEL, V_PAD), jnp.float32).at[:, :N_VOCAB].set(fc_w)
    p['fc_b_pad'] = jnp.zeros((1, V_PAD), jnp.float32)

    # positional-encoding buffer (same formula as PositionalEncoding)
    pos = jnp.arange(MAX_LEN, dtype=jnp.float32)[:, None]
    div = jnp.exp(jnp.arange(0, D_MODEL, 2, dtype=jnp.float32)
                  * (-math.log(10000.0) / D_MODEL))
    pe = jnp.zeros((MAX_LEN, D_MODEL), jnp.float32)
    pe = pe.at[:, 0::2].set(jnp.sin(pos * div))
    pe = pe.at[:, 1::2].set(jnp.cos(pos * div))
    p['pe'] = pe                                                        # (MAX_LEN, D)

    def u(k, shape, fan_in):
        bound = 1.0 / math.sqrt(fan_in)
        return jax.random.uniform(k, shape, jnp.float32, -bound, bound)

    q_scale = 1.0 / math.sqrt(HEAD_DIM)
    cols = {name: [] for name in
            ('w_in', 'b_in', 'w_out', 'b_out', 'ln1_w', 'ln1_b',
             'w_ff1', 'b_ff1', 'w_ff2', 'b_ff2', 'ln2_w', 'ln2_b')}
    for lk in jax.random.split(keys[2], N_LAYERS):
        ks = jax.random.split(lk, 6)
        w_in = u(ks[0], (D_MODEL, 3 * D_MODEL), D_MODEL)       # pre-transposed (in, out)
        # fold the 1/sqrt(head_dim) attention scale into the Q projection columns
        w_in = w_in.at[:, :D_MODEL].multiply(q_scale)
        cols['w_in'].append(w_in)
        cols['b_in'].append(jnp.zeros((1, 3 * D_MODEL), jnp.float32))
        cols['w_out'].append(u(ks[1], (D_MODEL, D_MODEL), D_MODEL))
        cols['b_out'].append(jnp.zeros((1, D_MODEL), jnp.float32))
        cols['ln1_w'].append(jnp.ones((1, D_MODEL), jnp.float32))
        cols['ln1_b'].append(jnp.zeros((1, D_MODEL), jnp.float32))
        cols['w_ff1'].append(u(ks[2], (D_MODEL, D_FF), D_MODEL))
        cols['b_ff1'].append(u(ks[3], (1, D_FF), D_MODEL))
        cols['w_ff2'].append(u(ks[4], (D_FF, D_MODEL), D_FF))
        cols['b_ff2'].append(u(ks[5], (1, D_MODEL), D_FF))
        cols['ln2_w'].append(jnp.ones((1, D_MODEL), jnp.float32))
        cols['ln2_b'].append(jnp.zeros((1, D_MODEL), jnp.float32))

    for name, arrs in cols.items():
        p[name] = jnp.stack(arrs, axis=0)                      # stacked (L, ...) weights
    return p


if __name__ == "__main__":
    root = jax.random.PRNGKey(0)
    pkey, tkey = jax.random.split(root)
    params = init_params(pkey)
    tokens = jax.random.randint(tkey, (SEQ_LEN, BATCH), 0, N_VOCAB, dtype=jnp.int32)

    logits = transformer_forward(tokens, params)
    jax.block_until_ready(logits)

    assert logits.shape == (SEQ_LEN, BATCH, N_VOCAB), logits.shape
    assert bool(jnp.all(jnp.isfinite(logits)))
    print("KERNEL_OK")
</pallas_src>

<mosaic_0001>
module attributes {stable_mosaic.version = 11 : i64} {
  func.func @_fused_forward_kernel(%arg0: memref<16x1xi32, #tpu.memory_space<vmem>>, %arg1: memref<50x32xf32, #tpu.memory_space<vmem>>, %arg2: memref<16x32xf32, #tpu.memory_space<vmem>>, %arg3: memref<2x32x96xf32, #tpu.memory_space<vmem>>, %arg4: memref<2x1x96xf32, #tpu.memory_space<vmem>>, %arg5: memref<2x32x32xf32, #tpu.memory_space<vmem>>, %arg6: memref<2x1x32xf32, #tpu.memory_space<vmem>>, %arg7: memref<2x1x32xf32, #tpu.memory_space<vmem>>, %arg8: memref<2x1x32xf32, #tpu.memory_space<vmem>>, %arg9: memref<2x32x64xf32, #tpu.memory_space<vmem>>, %arg10: memref<2x1x64xf32, #tpu.memory_space<vmem>>, %arg11: memref<2x64x32xf32, #tpu.memory_space<vmem>>, %arg12: memref<2x1x32xf32, #tpu.memory_space<vmem>>, %arg13: memref<2x1x32xf32, #tpu.memory_space<vmem>>, %arg14: memref<2x1x32xf32, #tpu.memory_space<vmem>>, %arg15: memref<32x128xf32, #tpu.memory_space<vmem>>, %arg16: memref<1x128xf32, #tpu.memory_space<vmem>>, %arg17: memref<16x128xf32, #tpu.memory_space<vmem>>) attributes {dimension_semantics = [], scalar_prefetch = 0 : i64, scratch_operands = 0 : i64, tpu.core_type = #tpu.core_type<tc>} {
    %c0 = arith.constant 0 : index
    %c0_0 = arith.constant 0 : index
    %0 = vector.load %arg0[%c0, %c0_0] : memref<16x1xi32, #tpu.memory_space<vmem>>, vector<16x1xi32>
    %1 = tpu.iota {dimensions = array<i32: 1>} : vector<16x50xi32>
    %2 = vector.broadcast %0 : vector<16x1xi32> to vector<16x50xi32>
    %3 = arith.cmpi eq, %2, %1 : vector<16x50xi32>
    %4 = arith.extui %3 : vector<16x50xi1> to vector<16x50xi32>
    %5 = arith.sitofp %4 : vector<16x50xi32> to vector<16x50xf32>
    %c0_1 = arith.constant 0 : index
    %c0_2 = arith.constant 0 : index
    %6 = vector.load %arg1[%c0_1, %c0_2] : memref<50x32xf32, #tpu.memory_space<vmem>>, vector<50x32xf32>
    %cst = arith.constant dense<0.000000e+00> : vector<16x32xf32>
    %7 = tpu.matmul %5, %6, %cst {dimension_numbers = #tpu.dot_dimension_numbers<[1], [0], [0], [1], [0, 0, 1, 1], [], []>} : vector<16x50xf32>, vector<50x32xf32>, vector<16x32xf32> -> vector<16x32xf32>
    %cst_3 = arith.constant 7.07106781 : f32
    %8 = vector.broadcast %cst_3 : f32 to vector<16x32xf32>
    %9 = arith.mulf %7, %8 : vector<16x32xf32>
    %c0_4 = arith.constant 0 : index
    %c0_5 = arith.constant 0 : index
    %10 = vector.load %arg2[%c0_4, %c0_5] : memref<16x32xf32, #tpu.memory_space<vmem>>, vector<16x32xf32>
    %11 = arith.addf %9, %10 : vector<16x32xf32>
    %12 = tpu.iota {dimensions = array<i32: 0>} : vector<8x8xi32>
    %13 = tpu.iota {dimensions = array<i32: 1>} : vector<8x8xi32>
    %14 = arith.cmpi sle, %13, %12 : vector<8x8xi32>
    %cst_6 = arith.constant 0.000000e+00 : f32
    %cst_7 = arith.constant -1.000000e+30 : f32
    %15 = vector.broadcast %cst_6 : f32 to vector<8x8xf32>
    %16 = vector.broadcast %cst_7 : f32 to vector<8x8xf32>
    %17 = arith.select %14, %15, %16 : vector<8x8xi1>, vector<8x8xf32>
    %c0_8 = arith.constant 0 : index
    %c0_9 = arith.constant 0 : index
    %c0_10 = arith.constant 0 : index
    %18 = vector.load %arg3[%c0_8, %c0_9, %c0_10] : memref<2x32x96xf32, #tpu.memory_space<vmem>>, vector<1x32x96xf32>
    %19 = vector.shape_cast %18 : vector<1x32x96xf32> to vector<32x96xf32>
    %cst_11 = arith.constant dense<0.000000e+00> : vector<16x96xf32>
    %20 = tpu.matmul %11, %19, %cst_11 {dimension_numbers = #tpu.dot_dimension_numbers<[1], [0], [0], [1], [0, 0, 1, 1], [], []>} : vector<16x32xf32>, vector<32x96xf32>, vector<16x96xf32> -> vector<16x96xf32>
    %c0_12 = arith.constant 0 : index
    %c0_13 = arith.constant 0 : index
    %c0_14 = arith.constant 0 : index
    %21 = vector.load %arg4[%c0_12, %c0_13, %c0_14] : memref<2x1x96xf32, #tpu.memory_space<vmem>>, vector<1x1x96xf32>
    %22 = vector.shape_cast %21 : vector<1x1x96xf32> to vector<1x96xf32>
    %23 = vector.broadcast %22 : vector<1x96xf32> to vector<16x96xf32>
    %24 = arith.addf %20, %23 : vector<16x96xf32>
    %25 = vector.extract_strided_slice %24 {offsets = [0, 0], sizes = [16, 32], strides = [1, 1]} : vector<16x96xf32> to vector<16x32xf32>
    %26 = vector.shape_cast %25 : vector<16x32xf32> to vector<2x8x32xf32>
    %27 = vector.extract_strided_slice %24 {offsets = [0, 32], sizes = [16, 32], strides = [1, 1]} : vector<16x96xf32> to vector<16x32xf32>
    %28 = vector.shape_cast %27 : vector<16x32xf32> to vector<2x8x32xf32>
    %29 = vector.extract_strided_slice %24 {offsets = [0, 64], sizes = [16, 32], strides = [1, 1]} : vector<16x96xf32> to vector<16x32xf32>
    %30 = vector.shape_cast %29 : vector<16x32xf32> to vector<2x8x32xf32>
    %31 = vector.extract_strided_slice %26 {offsets = [0, 0, 0], sizes = [2, 8, 8], strides = [1, 1, 1]} : vector<2x8x32xf32> to vector<2x8x8xf32>
    %32 = vector.extract_strided_slice %28 {offsets = [0, 0, 0], sizes = [2, 8, 8], strides = [1, 1, 1]} : vector<2x8x32xf32> to vector<2x8x8xf32>
    %33 = vector.extract_strided_slice %30 {offsets = [0, 0, 0], sizes = [2, 8, 8], strides = [1, 1, 1]} : vector<2x8x32xf32> to vector<2x8x8xf32>
    "tpu.trace_start"() <{level = 10 : i32, message = "bqd,bkd->bqk"}> : () -> ()
    %cst_15 = arith.constant dense<0.000000e+00> : vector<2x8x8xf32>
    %34 = tpu.matmul %31, %32, %cst_15 {dimension_numbers = #tpu.dot_dimension_numbers<[2], [2], [1], [1], [0, 0, 0, 1, 1, 1], [0], [0]>} : vector<2x8x8xf32>, vector<2x8x8xf32>, vector<2x8x8xf32> -> vector<2x8x8xf32>
    "tpu.trace_stop"() : () -> ()
    %35 = vector.shape_cast %17 : vector<8x8xf32> to vector<1x8x8xf32>
    %36 = vector.broadcast %35 : vector<1x8x8xf32> to vector<2x8x8xf32>
    %37 = arith.addf %34, %36 : vector<2x8x8xf32>
    %cst_16 = arith.constant dense<0xFF800000> : vector<2x8xf32>
    %38 = vector.multi_reduction <maximumf>, %37, %cst_16 [2] : vector<2x8x8xf32> to vector<2x8xf32>
    %39 = vector.shape_cast %38 : vector<2x8xf32> to vector<2x8x1xf32>
    %40 = vector.broadcast %39 : vector<2x8x1xf32> to vector<2x8x8xf32>
    %41 = arith.subf %37, %40 : vector<2x8x8xf32>
    %42 = math.exp %41 : vector<2x8x8xf32>
    %cst_17 = arith.constant dense<0.000000e+00> : vector<2x8xf32>
    %43 = vector.multi_reduction <add>, %42, %cst_17 [2] : vector<2x8x8xf32> to vector<2x8xf32>
    %44 = vector.shape_cast %43 : vector<2x8xf32> to vector<2x8x1xf32>
    %45 = vector.broadcast %44 : vector<2x8x1xf32> to vector<2x8x8xf32>
    %46 = arith.divf %42, %45 : vector<2x8x8xf32>
    "tpu.trace_start"() <{level = 10 : i32, message = "bqk,bkd->bqd"}> : () -> ()
    %cst_18 = arith.constant dense<0.000000e+00> : vector<2x8x8xf32>
    %47 = tpu.matmul %46, %33, %cst_18 {dimension_numbers = #tpu.dot_dimension_numbers<[2], [1], [1], [2], [0, 0, 0, 1, 1, 2], [0], [0]>} : vector<2x8x8xf32>, vector<2x8x8xf32>, vector<2x8x8xf32> -> vector<2x8x8xf32>
    "tpu.trace_stop"() : () -> ()
    %48 = vector.extract_strided_slice %26 {offsets = [0, 0, 8], sizes = [2, 8, 8], strides = [1, 1, 1]} : vector<2x8x32xf32> to vector<2x8x8xf32>
    %49 = vector.extract_strided_slice %28 {offsets = [0, 0, 8], sizes = [2, 8, 8], strides = [1, 1, 1]} : vector<2x8x32xf32> to vector<2x8x8xf32>
    %50 = vector.extract_strided_slice %30 {offsets = [0, 0, 8], sizes = [2, 8, 8], strides = [1, 1, 1]} : vector<2x8x32xf32> to vector<2x8x8xf32>
    "tpu.trace_start"() <{level = 10 : i32, message = "bqd,bkd->bqk"}> : () -> ()
    %cst_19 = arith.constant dense<0.000000e+00> : vector<2x8x8xf32>
    %51 = tpu.matmul %48, %49, %cst_19 {dimension_numbers = #tpu.dot_dimension_numbers<[2], [2], [1], [1], [0, 0, 0, 1, 1, 1], [0], [0]>} : vector<2x8x8xf32>, vector<2x8x8xf32>, vector<2x8x8xf32> -> vector<2x8x8xf32>
    "tpu.trace_stop"() : () -> ()
    %52 = vector.shape_cast %17 : vector<8x8xf32> to vector<1x8x8xf32>
    %53 = vector.broadcast %52 : vector<1x8x8xf32> to vector<2x8x8xf32>
    %54 = arith.addf %51, %53 : vector<2x8x8xf32>
    %cst_20 = arith.constant dense<0xFF800000> : vector<2x8xf32>
    %55 = vector.multi_reduction <maximumf>, %54, %cst_20 [2] : vector<2x8x8xf32> to vector<2x8xf32>
    %56 = vector.shape_cast %55 : vector<2x8xf32> to vector<2x8x1xf32>
    %57 = vector.broadcast %56 : vector<2x8x1xf32> to vector<2x8x8xf32>
    %58 = arith.subf %54, %57 : vector<2x8x8xf32>
    %59 = math.exp %58 : vector<2x8x8xf32>
    %cst_21 = arith.constant dense<0.000000e+00> : vector<2x8xf32>
    %60 = vector.multi_reduction <add>, %59, %cst_21 [2] : vector<2x8x8xf32> to vector<2x8xf32>
    %61 = vector.shape_cast %60 : vector<2x8xf32> to vector<2x8x1xf32>
    %62 = vector.broadcast %61 : vector<2x8x1xf32> to vector<2x8x8xf32>
    %63 = arith.divf %59, %62 : vector<2x8x8xf32>
    "tpu.trace_start"() <{level = 10 : i32, message = "bqk,bkd->bqd"}> : () -> ()
    %cst_22 = arith.constant dense<0.000000e+00> : vector<2x8x8xf32>
    %64 = tpu.matmul %63, %50, %cst_22 {dimension_numbers = #tpu.dot_dimension_numbers<[2], [1], [1], [2], [0, 0, 0, 1, 1, 2], [0], [0]>} : vector<2x8x8xf32>, vector<2x8x8xf32>, vector<2x8x8xf32> -> vector<2x8x8xf32>
    "tpu.trace_stop"() : () -> ()
    %65 = vector.extract_strided_slice %26 {offsets = [0, 0, 16], sizes = [2, 8, 8], strides = [1, 1, 1]} : vector<2x8x32xf32> to vector<2x8x8xf32>
    %66 = vector.extract_strided_slice %28 {offsets = [0, 0, 16], sizes = [2, 8, 8], strides = [1, 1, 1]} : vector<2x8x32xf32> to vector<2x8x8xf32>
    %67 = vector.extract_strided_slice %30 {offsets = [0, 0, 16], sizes = [2, 8, 8], strides = [1, 1, 1]} : vector<2x8x32xf32> to vector<2x8x8xf32>
    "tpu.trace_start"() <{level = 10 : i32, message = "bqd,bkd->bqk"}> : () -> ()
    %cst_23 = arith.constant dense<0.000000e+00> : vector<2x8x8xf32>
    %68 = tpu.matmul %65, %66, %cst_23 {dimension_numbers = #tpu.dot_dimension_numbers<[2], [2], [1], [1], [0, 0, 0, 1, 1, 1], [0], [0]>} : vector<2x8x8xf32>, vector<2x8x8xf32>, vector<2x8x8xf32> -> vector<2x8x8xf32>
    "tpu.trace_stop"() : () -> ()
    %69 = vector.shape_cast %17 : vector<8x8xf32> to vector<1x8x8xf32>
    %70 = vector.broadcast %69 : vector<1x8x8xf32> to vector<2x8x8xf32>
    %71 = arith.addf %68, %70 : vector<2x8x8xf32>
    %cst_24 = arith.constant dense<0xFF800000> : vector<2x8xf32>
    %72 = vector.multi_reduction <maximumf>, %71, %cst_24 [2] : vector<2x8x8xf32> to vector<2x8xf32>
    %73 = vector.shape_cast %72 : vector<2x8xf32> to vector<2x8x1xf32>
    %74 = vector.broadcast %73 : vector<2x8x1xf32> to vector<2x8x8xf32>
    %75 = arith.subf %71, %74 : vector<2x8x8xf32>
    %76 = math.exp %75 : vector<2x8x8xf32>
    %cst_25 = arith.constant dense<0.000000e+00> : vector<2x8xf32>
    %77 = vector.multi_reduction <add>, %76, %cst_25 [2] : vector<2x8x8xf32> to vector<2x8xf32>
    %78 = vector.shape_cast %77 : vector<2x8xf32> to vector<2x8x1xf32>
    %79 = vector.broadcast %78 : vector<2x8x1xf32> to vector<2x8x8xf32>
    %80 = arith.divf %76, %79 : vector<2x8x8xf32>
    "tpu.trace_start"() <{level = 10 : i32, message = "bqk,bkd->bqd"}> : () -> ()
    %cst_26 = arith.constant dense<0.000000e+00> : vector<2x8x8xf32>
    %81 = tpu.matmul %80, %67, %cst_26 {dimension_numbers = #tpu.dot_dimension_numbers<[2], [1], [1], [2], [0, 0, 0, 1, 1, 2], [0], [0]>} : vector<2x8x8xf32>, vector<2x8x8xf32>, vector<2x8x8xf32> -> vector<2x8x8xf32>
    "tpu.trace_stop"() : () -> ()
    %82 = vector.extract_strided_slice %26 {offsets = [0, 0, 24], sizes = [2, 8, 8], strides = [1, 1, 1]} : vector<2x8x32xf32> to vector<2x8x8xf32>
    %83 = vector.extract_strided_slice %28 {offsets = [0, 0, 24], sizes = [2, 8, 8], strides = [1, 1, 1]} : vector<2x8x32xf32> to vector<2x8x8xf32>
    %84 = vector.extract_strided_slice %30 {offsets = [0, 0, 24], sizes = [2, 8, 8], strides = [1, 1, 1]} : vector<2x8x32xf32> to vector<2x8x8xf32>
    "tpu.trace_start"() <{level = 10 : i32, message = "bqd,bkd->bqk"}> : () -> ()
    %cst_27 = arith.constant dense<0.000000e+00> : vector<2x8x8xf32>
    %85 = tpu.matmul %82, %83, %cst_27 {dimension_numbers = #tpu.dot_dimension_numbers<[2], [2], [1], [1], [0, 0, 0, 1, 1, 1], [0], [0]>} : vector<2x8x8xf32>, vector<2x8x8xf32>, vector<2x8x8xf32> -> vector<2x8x8xf32>
    "tpu.trace_stop"() : () -> ()
    %86 = vector.shape_cast %17 : vector<8x8xf32> to vector<1x8x8xf32>
    %87 = vector.broadcast %86 : vector<1x8x8xf32> to vector<2x8x8xf32>
    %88 = arith.addf %85, %87 : vector<2x8x8xf32>
    %cst_28 = arith.constant dense<0xFF800000> : vector<2x8xf32>
    %89 = vector.multi_reduction <maximumf>, %88, %cst_28 [2] : vector<2x8x8xf32> to vector<2x8xf32>
    %90 = vector.shape_cast %89 : vector<2x8xf32> to vector<2x8x1xf32>
    %91 = vector.broadcast %90 : vector<2x8x1xf32> to vector<2x8x8xf32>
    %92 = arith.subf %88, %91 : vector<2x8x8xf32>
    %93 = math.exp %92 : vector<2x8x8xf32>
    %cst_29 = arith.constant dense<0.000000e+00> : vector<2x8xf32>
    %94 = vector.multi_reduction <add>, %93, %cst_29 [2] : vector<2x8x8xf32> to vector<2x8xf32>
    %95 = vector.shape_cast %94 : vector<2x8xf32> to vector<2x8x1xf32>
    %96 = vector.broadcast %95 : vector<2x8x1xf32> to vector<2x8x8xf32>
    %97 = arith.divf %93, %96 : vector<2x8x8xf32>
    "tpu.trace_start"() <{level = 10 : i32, message = "bqk,bkd->bqd"}> : () -> ()
    %cst_30 = arith.constant dense<0.000000e+00> : vector<2x8x8xf32>
    %98 = tpu.matmul %97, %84, %cst_30 {dimension_numbers = #tpu.dot_dimension_numbers<[2], [1], [1], [2], [0, 0, 0, 1, 1, 2], [0], [0]>} : vector<2x8x8xf32>, vector<2x8x8xf32>, vector<2x8x8xf32> -> vector<2x8x8xf32>
    "tpu.trace_stop"() : () -> ()
    %99 = tpu.concatenate %47, %64, %81, %98 in 2 : vector<2x8x8xf32>, vector<2x8x8xf32>, vector<2x8x8xf32>, vector<2x8x8xf32> -> vector<2x8x32xf32>
    %100 = vector.shape_cast %99 : vector<2x8x32xf32> to vector<16x32xf32>
    %c0_31 = arith.constant 0 : index
    %c0_32 = arith.constant 0 : index
    %c0_33 = arith.constant 0 : index
    %101 = vector.load %arg5[%c0_31, %c0_32, %c0_33] : memref<2x32x32xf32, #tpu.memory_space<vmem>>, vector<1x32x32xf32>
    %102 = vector.shape_cast %101 : vector<1x32x32xf32> to vector<32x32xf32>
    %cst_34 = arith.constant dense<0.000000e+00> : vector<16x32xf32>
    %103 = tpu.matmul %100, %102, %cst_34 {dimension_numbers = #tpu.dot_dimension_numbers<[1], [0], [0], [1], [0, 0, 1, 1], [], []>} : vector<16x32xf32>, vector<32x32xf32>, vector<16x32xf32> -> vector<16x32xf32>
    %c0_35 = arith.constant 0 : index
    %c0_36 = arith.constant 0 : index
    %c0_37 = arith.constant 0 : index
    %104 = vector.load %arg6[%c0_35, %c0_36, %c0_37] : memref<2x1x32xf32, #tpu.memory_space<vmem>>, vector<1x1x32xf32>
    %105 = vector.shape_cast %104 : vector<1x1x32xf32> to vector<1x32xf32>
    %106 = vector.broadcast %105 : vector<1x32xf32> to vector<16x32xf32>
    %107 = arith.addf %103, %106 : vector<16x32xf32>
    %108 = arith.addf %11, %107 : vector<16x32xf32>
    %c0_38 = arith.constant 0 : index
    %c0_39 = arith.constant 0 : index
    %c0_40 = arith.constant 0 : index
    %109 = vector.load %arg7[%c0_38, %c0_39, %c0_40] : memref<2x1x32xf32, #tpu.memory_space<vmem>>, vector<1x1x32xf32>
    %110 = vector.shape_cast %109 : vector<1x1x32xf32> to vector<1x32xf32>
    %c0_41 = arith.constant 0 : index
    %c0_42 = arith.constant 0 : index
    %c0_43 = arith.constant 0 : index
    %111 = vector.load %arg8[%c0_41, %c0_42, %c0_43] : memref<2x1x32xf32, #tpu.memory_space<vmem>>, vector<1x1x32xf32>
    %112 = vector.shape_cast %111 : vector<1x1x32xf32> to vector<1x32xf32>
    %cst_44 = arith.constant dense<0.000000e+00> : vector<16xf32>
    %113 = vector.multi_reduction <add>, %108, %cst_44 [1] : vector<16x32xf32> to vector<16xf32>
    %114 = vector.shape_cast %113 : vector<16xf32> to vector<16x1xf32>
    %cst_45 = arith.constant 3.200000e+01 : f32
    %115 = vector.broadcast %cst_45 : f32 to vector<16x1xf32>
    %116 = arith.divf %114, %115 : vector<16x1xf32>
    %117 = vector.broadcast %116 : vector<16x1xf32> to vector<16x32xf32>
    %118 = arith.subf %108, %117 : vector<16x32xf32>
    %119 = arith.mulf %118, %118 : vector<16x32xf32>
    %cst_46 = arith.constant dense<0.000000e+00> : vector<16xf32>
    %120 = vector.multi_reduction <add>, %119, %cst_46 [1] : vector<16x32xf32> to vector<16xf32>
    %121 = vector.shape_cast %120 : vector<16xf32> to vector<16x1xf32>
    %cst_47 = arith.constant 3.200000e+01 : f32
    %122 = vector.broadcast %cst_47 : f32 to vector<16x1xf32>
    %123 = arith.divf %121, %122 : vector<16x1xf32>
    %cst_48 = arith.constant 9.99999974E-6 : f32
    %124 = vector.broadcast %cst_48 : f32 to vector<16x1xf32>
    %125 = arith.addf %123, %124 : vector<16x1xf32>
    %126 = math.rsqrt %125 : vector<16x1xf32>
    %127 = vector.broadcast %126 : vector<16x1xf32> to vector<16x32xf32>
    %128 = arith.mulf %118, %127 : vector<16x32xf32>
    %129 = vector.broadcast %110 : vector<1x32xf32> to vector<16x32xf32>
    %130 = arith.mulf %128, %129 : vector<16x32xf32>
    %131 = vector.broadcast %112 : vector<1x32xf32> to vector<16x32xf32>
    %132 = arith.addf %130, %131 : vector<16x32xf32>
    %c0_49 = arith.constant 0 : index
    %c0_50 = arith.constant 0 : index
    %c0_51 = arith.constant 0 : index
    %133 = vector.load %arg9[%c0_49, %c0_50, %c0_51] : memref<2x32x64xf32, #tpu.memory_space<vmem>>, vector<1x32x64xf32>
    %134 = vector.shape_cast %133 : vector<1x32x64xf32> to vector<32x64xf32>
    %cst_52 = arith.constant dense<0.000000e+00> : vector<16x64xf32>
    %135 = tpu.matmul %132, %134, %cst_52 {dimension_numbers = #tpu.dot_dimension_numbers<[1], [0], [0], [1], [0, 0, 1, 1], [], []>} : vector<16x32xf32>, vector<32x64xf32>, vector<16x64xf32> -> vector<16x64xf32>
    %c0_53 = arith.constant 0 : index
    %c0_54 = arith.constant 0 : index
    %c0_55 = arith.constant 0 : index
    %136 = vector.load %arg10[%c0_53, %c0_54, %c0_55] : memref<2x1x64xf32, #tpu.memory_space<vmem>>, vector<1x1x64xf32>
    %137 = vector.shape_cast %136 : vector<1x1x64xf32> to vector<1x64xf32>
    %138 = vector.broadcast %137 : vector<1x64xf32> to vector<16x64xf32>
    %139 = arith.addf %135, %138 : vector<16x64xf32>
    %cst_56 = arith.constant 0.000000e+00 : f32
    %140 = vector.broadcast %cst_56 : f32 to vector<16x64xf32>
    %141 = arith.maximumf %139, %140 : vector<16x64xf32>
    %c0_57 = arith.constant 0 : index
    %c0_58 = arith.constant 0 : index
    %c0_59 = arith.constant 0 : index
    %142 = vector.load %arg11[%c0_57, %c0_58, %c0_59] : memref<2x64x32xf32, #tpu.memory_space<vmem>>, vector<1x64x32xf32>
    %143 = vector.shape_cast %142 : vector<1x64x32xf32> to vector<64x32xf32>
    %cst_60 = arith.constant dense<0.000000e+00> : vector<16x32xf32>
    %144 = tpu.matmul %141, %143, %cst_60 {dimension_numbers = #tpu.dot_dimension_numbers<[1], [0], [0], [1], [0, 0, 1, 1], [], []>} : vector<16x64xf32>, vector<64x32xf32>, vector<16x32xf32> -> vector<16x32xf32>
    %c0_61 = arith.constant 0 : index
    %c0_62 = arith.constant 0 : index
    %c0_63 = arith.constant 0 : index
    %145 = vector.load %arg12[%c0_61, %c0_62, %c0_63] : memref<2x1x32xf32, #tpu.memory_space<vmem>>, vector<1x1x32xf32>
    %146 = vector.shape_cast %145 : vector<1x1x32xf32> to vector<1x32xf32>
    %147 = vector.broadcast %146 : vector<1x32xf32> to vector<16x32xf32>
    %148 = arith.addf %144, %147 : vector<16x32xf32>
    %149 = arith.addf %132, %148 : vector<16x32xf32>
    %c0_64 = arith.constant 0 : index
    %c0_65 = arith.constant 0 : index
    %c0_66 = arith.constant 0 : index
    %150 = vector.load %arg13[%c0_64, %c0_65, %c0_66] : memref<2x1x32xf32, #tpu.memory_space<vmem>>, vector<1x1x32xf32>
    %151 = vector.shape_cast %150 : vector<1x1x32xf32> to vector<1x32xf32>
    %c0_67 = arith.constant 0 : index
    %c0_68 = arith.constant 0 : index
    %c0_69 = arith.constant 0 : index
    %152 = vector.load %arg14[%c0_67, %c0_68, %c0_69] : memref<2x1x32xf32, #tpu.memory_space<vmem>>, vector<1x1x32xf32>
    %153 = vector.shape_cast %152 : vector<1x1x32xf32> to vector<1x32xf32>
    %cst_70 = arith.constant dense<0.000000e+00> : vector<16xf32>
    %154 = vector.multi_reduction <add>, %149, %cst_70 [1] : vector<16x32xf32> to vector<16xf32>
    %155 = vector.shape_cast %154 : vector<16xf32> to vector<16x1xf32>
    %cst_71 = arith.constant 3.200000e+01 : f32
    %156 = vector.broadcast %cst_71 : f32 to vector<16x1xf32>
    %157 = arith.divf %155, %156 : vector<16x1xf32>
    %158 = vector.broadcast %157 : vector<16x1xf32> to vector<16x32xf32>
    %159 = arith.subf %149, %158 : vector<16x32xf32>
    %160 = arith.mulf %159, %159 : vector<16x32xf32>
    %cst_72 = arith.constant dense<0.000000e+00> : vector<16xf32>
    %161 = vector.multi_reduction <add>, %160, %cst_72 [1] : vector<16x32xf32> to vector<16xf32>
    %162 = vector.shape_cast %161 : vector<16xf32> to vector<16x1xf32>
    %cst_73 = arith.constant 3.200000e+01 : f32
    %163 = vector.broadcast %cst_73 : f32 to vector<16x1xf32>
    %164 = arith.divf %162, %163 : vector<16x1xf32>
    %cst_74 = arith.constant 9.99999974E-6 : f32
    %165 = vector.broadcast %cst_74 : f32 to vector<16x1xf32>
    %166 = arith.addf %164, %165 : vector<16x1xf32>
    %167 = math.rsqrt %166 : vector<16x1xf32>
    %168 = vector.broadcast %167 : vector<16x1xf32> to vector<16x32xf32>
    %169 = arith.mulf %159, %168 : vector<16x32xf32>
    %170 = vector.broadcast %151 : vector<1x32xf32> to vector<16x32xf32>
    %171 = arith.mulf %169, %170 : vector<16x32xf32>
    %172 = vector.broadcast %153 : vector<1x32xf32> to vector<16x32xf32>
    %173 = arith.addf %171, %172 : vector<16x32xf32>
    %c1 = arith.constant 1 : index
    %c0_75 = arith.constant 0 : index
    %c0_76 = arith.constant 0 : index
    %174 = vector.load %arg3[%c1, %c0_75, %c0_76] : memref<2x32x96xf32, #tpu.memory_space<vmem>>, vector<1x32x96xf32>
    %175 = vector.shape_cast %174 : vector<1x32x96xf32> to vector<32x96xf32>
    %cst_77 = arith.constant dense<0.000000e+00> : vector<16x96xf32>
    %176 = tpu.matmul %173, %175, %cst_77 {dimension_numbers = #tpu.dot_dimension_numbers<[1], [0], [0], [1], [0, 0, 1, 1], [], []>} : vector<16x32xf32>, vector<32x96xf32>, vector<16x96xf32> -> vector<16x96xf32>
    %c1_78 = arith.constant 1 : index
    %c0_79 = arith.constant 0 : index
    %c0_80 = arith.constant 0 : index
    %177 = vector.load %arg4[%c1_78, %c0_79, %c0_80] : memref<2x1x96xf32, #tpu.memory_space<vmem>>, vector<1x1x96xf32>
    %178 = vector.shape_cast %177 : vector<1x1x96xf32> to vector<1x96xf32>
    %179 = vector.broadcast %178 : vector<1x96xf32> to vector<16x96xf32>
    %180 = arith.addf %176, %179 : vector<16x96xf32>
    %181 = vector.extract_strided_slice %180 {offsets = [0, 0], sizes = [16, 32], strides = [1, 1]} : vector<16x96xf32> to vector<16x32xf32>
    %182 = vector.shape_cast %181 : vector<16x32xf32> to vector<2x8x32xf32>
    %183 = vector.extract_strided_slice %180 {offsets = [0, 32], sizes = [16, 32], strides = [1, 1]} : vector<16x96xf32> to vector<16x32xf32>
    %184 = vector.shape_cast %183 : vector<16x32xf32> to vector<2x8x32xf32>
    %185 = vector.extract_strided_slice %180 {offsets = [0, 64], sizes = [16, 32], strides = [1, 1]} : vector<16x96xf32> to vector<16x32xf32>
    %186 = vector.shape_cast %185 : vector<16x32xf32> to vector<2x8x32xf32>
    %187 = vector.extract_strided_slice %182 {offsets = [0, 0, 0], sizes = [2, 8, 8], strides = [1, 1, 1]} : vector<2x8x32xf32> to vector<2x8x8xf32>
    %188 = vector.extract_strided_slice %184 {offsets = [0, 0, 0], sizes = [2, 8, 8], strides = [1, 1, 1]} : vector<2x8x32xf32> to vector<2x8x8xf32>
    %189 = vector.extract_strided_slice %186 {offsets = [0, 0, 0], sizes = [2, 8, 8], strides = [1, 1, 1]} : vector<2x8x32xf32> to vector<2x8x8xf32>
    "tpu.trace_start"() <{level = 10 : i32, message = "bqd,bkd->bqk"}> : () -> ()
    %cst_81 = arith.constant dense<0.000000e+00> : vector<2x8x8xf32>
    %190 = tpu.matmul %187, %188, %cst_81 {dimension_numbers = #tpu.dot_dimension_numbers<[2], [2], [1], [1], [0, 0, 0, 1, 1, 1], [0], [0]>} : vector<2x8x8xf32>, vector<2x8x8xf32>, vector<2x8x8xf32> -> vector<2x8x8xf32>
    "tpu.trace_stop"() : () -> ()
    %191 = vector.shape_cast %17 : vector<8x8xf32> to vector<1x8x8xf32>
    %192 = vector.broadcast %191 : vector<1x8x8xf32> to vector<2x8x8xf32>
    %193 = arith.addf %190, %192 : vector<2x8x8xf32>
    %cst_82 = arith.constant dense<0xFF800000> : vector<2x8xf32>
    %194 = vector.multi_reduction <maximumf>, %193, %cst_82 [2] : vector<2x8x8xf32> to vector<2x8xf32>
    %195 = vector.shape_cast %194 : vector<2x8xf32> to vector<2x8x1xf32>
    %196 = vector.broadcast %195 : vector<2x8x1xf32> to vector<2x8x8xf32>
    %197 = arith.subf %193, %196 : vector<2x8x8xf32>
    %198 = math.exp %197 : vector<2x8x8xf32>
    %cst_83 = arith.constant dense<0.000000e+00> : vector<2x8xf32>
    %199 = vector.multi_reduction <add>, %198, %cst_83 [2] : vector<2x8x8xf32> to vector<2x8xf32>
    %200 = vector.shape_cast %199 : vector<2x8xf32> to vector<2x8x1xf32>
    %201 = vector.broadcast %200 : vector<2x8x1xf32> to vector<2x8x8xf32>
    %202 = arith.divf %198, %201 : vector<2x8x8xf32>
    "tpu.trace_start"() <{level = 10 : i32, message = "bqk,bkd->bqd"}> : () -> ()
    %cst_84 = arith.constant dense<0.000000e+00> : vector<2x8x8xf32>
    %203 = tpu.matmul %202, %189, %cst_84 {dimension_numbers = #tpu.dot_dimension_numbers<[2], [1], [1], [2], [0, 0, 0, 1, 1, 2], [0], [0]>} : vector<2x8x8xf32>, vector<2x8x8xf32>, vector<2x8x8xf32> -> vector<2x8x8xf32>
    "tpu.trace_stop"() : () -> ()
    %204 = vector.extract_strided_slice %182 {offsets = [0, 0, 8], sizes = [2, 8, 8], strides = [1, 1, 1]} : vector<2x8x32xf32> to vector<2x8x8xf32>
    %205 = vector.extract_strided_slice %184 {offsets = [0, 0, 8], sizes = [2, 8, 8], strides = [1, 1, 1]} : vector<2x8x32xf32> to vector<2x8x8xf32>
    %206 = vector.extract_strided_slice %186 {offsets = [0, 0, 8], sizes = [2, 8, 8], strides = [1, 1, 1]} : vector<2x8x32xf32> to vector<2x8x8xf32>
    "tpu.trace_start"() <{level = 10 : i32, message = "bqd,bkd->bqk"}> : () -> ()
    %cst_85 = arith.constant dense<0.000000e+00> : vector<2x8x8xf32>
    %207 = tpu.matmul %204, %205, %cst_85 {dimension_numbers = #tpu.dot_dimension_numbers<[2], [2], [1], [1], [0, 0, 0, 1, 1, 1], [0], [0]>} : vector<2x8x8xf32>, vector<2x8x8xf32>, vector<2x8x8xf32> -> vector<2x8x8xf32>
    "tpu.trace_stop"() : () -> ()
    %208 = vector.shape_cast %17 : vector<8x8xf32> to vector<1x8x8xf32>
    %209 = vector.broadcast %208 : vector<1x8x8xf32> to vector<2x8x8xf32>
    %210 = arith.addf %207, %209 : vector<2x8x8xf32>
    %cst_86 = arith.constant dense<0xFF800000> : vector<2x8xf32>
    %211 = vector.multi_reduction <maximumf>, %210, %cst_86 [2] : vector<2x8x8xf32> to vector<2x8xf32>
    %212 = vector.shape_cast %211 : vector<2x8xf32> to vector<2x8x1xf32>
    %213 = vector.broadcast %212 : vector<2x8x1xf32> to vector<2x8x8xf32>
    %214 = arith.subf %210, %213 : vector<2x8x8xf32>
    %215 = math.exp %214 : vector<2x8x8xf32>
    %cst_87 = arith.constant dense<0.000000e+00> : vector<2x8xf32>
    %216 = vector.multi_reduction <add>, %215, %cst_87 [2] : vector<2x8x8xf32> to vector<2x8xf32>
    %217 = vector.shape_cast %216 : vector<2x8xf32> to vector<2x8x1xf32>
    %218 = vector.broadcast %217 : vector<2x8x1xf32> to vector<2x8x8xf32>
    %219 = arith.divf %215, %218 : vector<2x8x8xf32>
    "tpu.trace_start"() <{level = 10 : i32, message = "bqk,bkd->bqd"}> : () -> ()
    %cst_88 = arith.constant dense<0.000000e+00> : vector<2x8x8xf32>
    %220 = tpu.matmul %219, %206, %cst_88 {dimension_numbers = #tpu.dot_dimension_numbers<[2], [1], [1], [2], [0, 0, 0, 1, 1, 2], [0], [0]>} : vector<2x8x8xf32>, vector<2x8x8xf32>, vector<2x8x8xf32> -> vector<2x8x8xf32>
    "tpu.trace_stop"() : () -> ()
    %221 = vector.extract_strided_slice %182 {offsets = [0, 0, 16], sizes = [2, 8, 8], strides = [1, 1, 1]} : vector<2x8x32xf32> to vector<2x8x8xf32>
    %222 = vector.extract_strided_slice %184 {offsets = [0, 0, 16], sizes = [2, 8, 8], strides = [1, 1, 1]} : vector<2x8x32xf32> to vector<2x8x8xf32>
    %223 = vector.extract_strided_slice %186 {offsets = [0, 0, 16], sizes = [2, 8, 8], strides = [1, 1, 1]} : vector<2x8x32xf32> to vector<2x8x8xf32>
    "tpu.trace_start"() <{level = 10 : i32, message = "bqd,bkd->bqk"}> : () -> ()
    %cst_89 = arith.constant dense<0.000000e+00> : vector<2x8x8xf32>
    %224 = tpu.matmul %221, %222, %cst_89 {dimension_numbers = #tpu.dot_dimension_numbers<[2], [2], [1], [1], [0, 0, 0, 1, 1, 1], [0], [0]>} : vector<2x8x8xf32>, vector<2x8x8xf32>, vector<2x8x8xf32> -> vector<2x8x8xf32>
    "tpu.trace_stop"() : () -> ()
    %225 = vector.shape_cast %17 : vector<8x8xf32> to vector<1x8x8xf32>
    %226 = vector.broadcast %225 : vector<1x8x8xf32> to vector<2x8x8xf32>
    %227 = arith.addf %224, %226 : vector<2x8x8xf32>
    %cst_90 = arith.constant dense<0xFF800000> : vector<2x8xf32>
    %228 = vector.multi_reduction <maximumf>, %227, %cst_90 [2] : vector<2x8x8xf32> to vector<2x8xf32>
    %229 = vector.shape_cast %228 : vector<2x8xf32> to vector<2x8x1xf32>
    %230 = vector.broadcast %229 : vector<2x8x1xf32> to vector<2x8x8xf32>
    %231 = arith.subf %227, %230 : vector<2x8x8xf32>
    %232 = math.exp %231 : vector<2x8x8xf32>
    %cst_91 = arith.constant dense<0.000000e+00> : vector<2x8xf32>
    %233 = vector.multi_reduction <add>, %232, %cst_91 [2] : vector<2x8x8xf32> to vector<2x8xf32>
    %234 = vector.shape_cast %233 : vector<2x8xf32> to vector<2x8x1xf32>
    %235 = vector.broadcast %234 : vector<2x8x1xf32> to vector<2x8x8xf32>
    %236 = arith.divf %232, %235 : vector<2x8x8xf32>
    "tpu.trace_start"() <{level = 10 : i32, message = "bqk,bkd->bqd"}> : () -> ()
    %cst_92 = arith.constant dense<0.000000e+00> : vector<2x8x8xf32>
    %237 = tpu.matmul %236, %223, %cst_92 {dimension_numbers = #tpu.dot_dimension_numbers<[2], [1], [1], [2], [0, 0, 0, 1, 1, 2], [0], [0]>} : vector<2x8x8xf32>, vector<2x8x8xf32>, vector<2x8x8xf32> -> vector<2x8x8xf32>
    "tpu.trace_stop"() : () -> ()
    %238 = vector.extract_strided_slice %182 {offsets = [0, 0, 24], sizes = [2, 8, 8], strides = [1, 1, 1]} : vector<2x8x32xf32> to vector<2x8x8xf32>
    %239 = vector.extract_strided_slice %184 {offsets = [0, 0, 24], sizes = [2, 8, 8], strides = [1, 1, 1]} : vector<2x8x32xf32> to vector<2x8x8xf32>
    %240 = vector.extract_strided_slice %186 {offsets = [0, 0, 24], sizes = [2, 8, 8], strides = [1, 1, 1]} : vector<2x8x32xf32> to vector<2x8x8xf32>
    "tpu.trace_start"() <{level = 10 : i32, message = "bqd,bkd->bqk"}> : () -> ()
    %cst_93 = arith.constant dense<0.000000e+00> : vector<2x8x8xf32>
    %241 = tpu.matmul %238, %239, %cst_93 {dimension_numbers = #tpu.dot_dimension_numbers<[2], [2], [1], [1], [0, 0, 0, 1, 1, 1], [0], [0]>} : vector<2x8x8xf32>, vector<2x8x8xf32>, vector<2x8x8xf32> -> vector<2x8x8xf32>
    "tpu.trace_stop"() : () -> ()
    %242 = vector.shape_cast %17 : vector<8x8xf32> to vector<1x8x8xf32>
    %243 = vector.broadcast %242 : vector<1x8x8xf32> to vector<2x8x8xf32>
    %244 = arith.addf %241, %243 : vector<2x8x8xf32>
    %cst_94 = arith.constant dense<0xFF800000> : vector<2x8xf32>
    %245 = vector.multi_reduction <maximumf>, %244, %cst_94 [2] : vector<2x8x8xf32> to vector<2x8xf32>
    %246 = vector.shape_cast %245 : vector<2x8xf32> to vector<2x8x1xf32>
    %247 = vector.broadcast %246 : vector<2x8x1xf32> to vector<2x8x8xf32>
    %248 = arith.subf %244, %247 : vector<2x8x8xf32>
    %249 = math.exp %248 : vector<2x8x8xf32>
    %cst_95 = arith.constant dense<0.000000e+00> : vector<2x8xf32>
    %250 = vector.multi_reduction <add>, %249, %cst_95 [2] : vector<2x8x8xf32> to vector<2x8xf32>
    %251 = vector.shape_cast %250 : vector<2x8xf32> to vector<2x8x1xf32>
    %252 = vector.broadcast %251 : vector<2x8x1xf32> to vector<2x8x8xf32>
    %253 = arith.divf %249, %252 : vector<2x8x8xf32>
    "tpu.trace_start"() <{level = 10 : i32, message = "bqk,bkd->bqd"}> : () -> ()
    %cst_96 = arith.constant dense<0.000000e+00> : vector<2x8x8xf32>
    %254 = tpu.matmul %253, %240, %cst_96 {dimension_numbers = #tpu.dot_dimension_numbers<[2], [1], [1], [2], [0, 0, 0, 1, 1, 2], [0], [0]>} : vector<2x8x8xf32>, vector<2x8x8xf32>, vector<2x8x8xf32> -> vector<2x8x8xf32>
    "tpu.trace_stop"() : () -> ()
    %255 = tpu.concatenate %203, %220, %237, %254 in 2 : vector<2x8x8xf32>, vector<2x8x8xf32>, vector<2x8x8xf32>, vector<2x8x8xf32> -> vector<2x8x32xf32>
    %256 = vector.shape_cast %255 : vector<2x8x32xf32> to vector<16x32xf32>
    %c1_97 = arith.constant 1 : index
    %c0_98 = arith.constant 0 : index
    %c0_99 = arith.constant 0 : index
    %257 = vector.load %arg5[%c1_97, %c0_98, %c0_99] : memref<2x32x32xf32, #tpu.memory_space<vmem>>, vector<1x32x32xf32>
    %258 = vector.shape_cast %257 : vector<1x32x32xf32> to vector<32x32xf32>
    %cst_100 = arith.constant dense<0.000000e+00> : vector<16x32xf32>
    %259 = tpu.matmul %256, %258, %cst_100 {dimension_numbers = #tpu.dot_dimension_numbers<[1], [0], [0], [1], [0, 0, 1, 1], [], []>} : vector<16x32xf32>, vector<32x32xf32>, vector<16x32xf32> -> vector<16x32xf32>
    %c1_101 = arith.constant 1 : index
    %c0_102 = arith.constant 0 : index
    %c0_103 = arith.constant 0 : index
    %260 = vector.load %arg6[%c1_101, %c0_102, %c0_103] : memref<2x1x32xf32, #tpu.memory_space<vmem>>, vector<1x1x32xf32>
    %261 = vector.shape_cast %260 : vector<1x1x32xf32> to vector<1x32xf32>
    %262 = vector.broadcast %261 : vector<1x32xf32> to vector<16x32xf32>
    %263 = arith.addf %259, %262 : vector<16x32xf32>
    %264 = arith.addf %173, %263 : vector<16x32xf32>
    %c1_104 = arith.constant 1 : index
    %c0_105 = arith.constant 0 : index
    %c0_106 = arith.constant 0 : index
    %265 = vector.load %arg7[%c1_104, %c0_105, %c0_106] : memref<2x1x32xf32, #tpu.memory_space<vmem>>, vector<1x1x32xf32>
    %266 = vector.shape_cast %265 : vector<1x1x32xf32> to vector<1x32xf32>
    %c1_107 = arith.constant 1 : index
    %c0_108 = arith.constant 0 : index
    %c0_109 = arith.constant 0 : index
    %267 = vector.load %arg8[%c1_107, %c0_108, %c0_109] : memref<2x1x32xf32, #tpu.memory_space<vmem>>, vector<1x1x32xf32>
    %268 = vector.shape_cast %267 : vector<1x1x32xf32> to vector<1x32xf32>
    %cst_110 = arith.constant dense<0.000000e+00> : vector<16xf32>
    %269 = vector.multi_reduction <add>, %264, %cst_110 [1] : vector<16x32xf32> to vector<16xf32>
    %270 = vector.shape_cast %269 : vector<16xf32> to vector<16x1xf32>
    %cst_111 = arith.constant 3.200000e+01 : f32
    %271 = vector.broadcast %cst_111 : f32 to vector<16x1xf32>
    %272 = arith.divf %270, %271 : vector<16x1xf32>
    %273 = vector.broadcast %272 : vector<16x1xf32> to vector<16x32xf32>
    %274 = arith.subf %264, %273 : vector<16x32xf32>
    %275 = arith.mulf %274, %274 : vector<16x32xf32>
    %cst_112 = arith.constant dense<0.000000e+00> : vector<16xf32>
    %276 = vector.multi_reduction <add>, %275, %cst_112 [1] : vector<16x32xf32> to vector<16xf32>
    %277 = vector.shape_cast %276 : vector<16xf32> to vector<16x1xf32>
    %cst_113 = arith.constant 3.200000e+01 : f32
    %278 = vector.broadcast %cst_113 : f32 to vector<16x1xf32>
    %279 = arith.divf %277, %278 : vector<16x1xf32>
    %cst_114 = arith.constant 9.99999974E-6 : f32
    %280 = vector.broadcast %cst_114 : f32 to vector<16x1xf32>
    %281 = arith.addf %279, %280 : vector<16x1xf32>
    %282 = math.rsqrt %281 : vector<16x1xf32>
    %283 = vector.broadcast %282 : vector<16x1xf32> to vector<16x32xf32>
    %284 = arith.mulf %274, %283 : vector<16x32xf32>
    %285 = vector.broadcast %266 : vector<1x32xf32> to vector<16x32xf32>
    %286 = arith.mulf %284, %285 : vector<16x32xf32>
    %287 = vector.broadcast %268 : vector<1x32xf32> to vector<16x32xf32>
    %288 = arith.addf %286, %287 : vector<16x32xf32>
    %c1_115 = arith.constant 1 : index
    %c0_116 = arith.constant 0 : index
    %c0_117 = arith.constant 0 : index
    %289 = vector.load %arg9[%c1_115, %c0_116, %c0_117] : memref<2x32x64xf32, #tpu.memory_space<vmem>>, vector<1x32x64xf32>
    %290 = vector.shape_cast %289 : vector<1x32x64xf32> to vector<32x64xf32>
    %cst_118 = arith.constant dense<0.000000e+00> : vector<16x64xf32>
    %291 = tpu.matmul %288, %290, %cst_118 {dimension_numbers = #tpu.dot_dimension_numbers<[1], [0], [0], [1], [0, 0, 1, 1], [], []>} : vector<16x32xf32>, vector<32x64xf32>, vector<16x64xf32> -> vector<16x64xf32>
    %c1_119 = arith.constant 1 : index
    %c0_120 = arith.constant 0 : index
    %c0_121 = arith.constant 0 : index
    %292 = vector.load %arg10[%c1_119, %c0_120, %c0_121] : memref<2x1x64xf32, #tpu.memory_space<vmem>>, vector<1x1x64xf32>
    %293 = vector.shape_cast %292 : vector<1x1x64xf32> to vector<1x64xf32>
    %294 = vector.broadcast %293 : vector<1x64xf32> to vector<16x64xf32>
    %295 = arith.addf %291, %294 : vector<16x64xf32>
    %cst_122 = arith.constant 0.000000e+00 : f32
    %296 = vector.broadcast %cst_122 : f32 to vector<16x64xf32>
    %297 = arith.maximumf %295, %296 : vector<16x64xf32>
    %c1_123 = arith.constant 1 : index
    %c0_124 = arith.constant 0 : index
    %c0_125 = arith.constant 0 : index
    %298 = vector.load %arg11[%c1_123, %c0_124, %c0_125] : memref<2x64x32xf32, #tpu.memory_space<vmem>>, vector<1x64x32xf32>
    %299 = vector.shape_cast %298 : vector<1x64x32xf32> to vector<64x32xf32>
    %cst_126 = arith.constant dense<0.000000e+00> : vector<16x32xf32>
    %300 = tpu.matmul %297, %299, %cst_126 {dimension_numbers = #tpu.dot_dimension_numbers<[1], [0], [0], [1], [0, 0, 1, 1], [], []>} : vector<16x64xf32>, vector<64x32xf32>, vector<16x32xf32> -> vector<16x32xf32>
    %c1_127 = arith.constant 1 : index
    %c0_128 = arith.constant 0 : index
    %c0_129 = arith.constant 0 : index
    %301 = vector.load %arg12[%c1_127, %c0_128, %c0_129] : memref<2x1x32xf32, #tpu.memory_space<vmem>>, vector<1x1x32xf32>
    %302 = vector.shape_cast %301 : vector<1x1x32xf32> to vector<1x32xf32>
    %303 = vector.broadcast %302 : vector<1x32xf32> to vector<16x32xf32>
    %304 = arith.addf %300, %303 : vector<16x32xf32>
    %305 = arith.addf %288, %304 : vector<16x32xf32>
    %c1_130 = arith.constant 1 : index
    %c0_131 = arith.constant 0 : index
    %c0_132 = arith.constant 0 : index
    %306 = vector.load %arg13[%c1_130, %c0_131, %c0_132] : memref<2x1x32xf32, #tpu.memory_space<vmem>>, vector<1x1x32xf32>
    %307 = vector.shape_cast %306 : vector<1x1x32xf32> to vector<1x32xf32>
    %c1_133 = arith.constant 1 : index
    %c0_134 = arith.constant 0 : index
    %c0_135 = arith.constant 0 : index
    %308 = vector.load %arg14[%c1_133, %c0_134, %c0_135] : memref<2x1x32xf32, #tpu.memory_space<vmem>>, vector<1x1x32xf32>
    %309 = vector.shape_cast %308 : vector<1x1x32xf32> to vector<1x32xf32>
    %cst_136 = arith.constant dense<0.000000e+00> : vector<16xf32>
    %310 = vector.multi_reduction <add>, %305, %cst_136 [1] : vector<16x32xf32> to vector<16xf32>
    %311 = vector.shape_cast %310 : vector<16xf32> to vector<16x1xf32>
    %cst_137 = arith.constant 3.200000e+01 : f32
    %312 = vector.broadcast %cst_137 : f32 to vector<16x1xf32>
    %313 = arith.divf %311, %312 : vector<16x1xf32>
    %314 = vector.broadcast %313 : vector<16x1xf32> to vector<16x32xf32>
    %315 = arith.subf %305, %314 : vector<16x32xf32>
    %316 = arith.mulf %315, %315 : vector<16x32xf32>
    %cst_138 = arith.constant dense<0.000000e+00> : vector<16xf32>
    %317 = vector.multi_reduction <add>, %316, %cst_138 [1] : vector<16x32xf32> to vector<16xf32>
    %318 = vector.shape_cast %317 : vector<16xf32> to vector<16x1xf32>
    %cst_139 = arith.constant 3.200000e+01 : f32
    %319 = vector.broadcast %cst_139 : f32 to vector<16x1xf32>
    %320 = arith.divf %318, %319 : vector<16x1xf32>
    %cst_140 = arith.constant 9.99999974E-6 : f32
    %321 = vector.broadcast %cst_140 : f32 to vector<16x1xf32>
    %322 = arith.addf %320, %321 : vector<16x1xf32>
    %323 = math.rsqrt %322 : vector<16x1xf32>
    %324 = vector.broadcast %323 : vector<16x1xf32> to vector<16x32xf32>
    %325 = arith.mulf %315, %324 : vector<16x32xf32>
    %326 = vector.broadcast %307 : vector<1x32xf32> to vector<16x32xf32>
    %327 = arith.mulf %325, %326 : vector<16x32xf32>
    %328 = vector.broadcast %309 : vector<1x32xf32> to vector<16x32xf32>
    %329 = arith.addf %327, %328 : vector<16x32xf32>
    %c0_141 = arith.constant 0 : index
    %c0_142 = arith.constant 0 : index
    %330 = vector.load %arg15[%c0_141, %c0_142] : memref<32x128xf32, #tpu.memory_space<vmem>>, vector<32x128xf32>
    %cst_143 = arith.constant dense<0.000000e+00> : vector<16x128xf32>
    %331 = tpu.matmul %329, %330, %cst_143 {dimension_numbers = #tpu.dot_dimension_numbers<[1], [0], [0], [1], [0, 0, 1, 1], [], []>} : vector<16x32xf32>, vector<32x128xf32>, vector<16x128xf32> -> vector<16x128xf32>
    %c0_144 = arith.constant 0 : index
    %c0_145 = arith.constant 0 : index
    %332 = vector.load %arg16[%c0_144, %c0_145] : memref<1x128xf32, #tpu.memory_space<vmem>>, vector<1x128xf32>
    %333 = vector.broadcast %332 : vector<1x128xf32> to vector<16x128xf32>
    %334 = arith.addf %331, %333 : vector<16x128xf32>
    %c0_146 = arith.constant 0 : index
    %c0_147 = arith.constant 0 : index
    %335 = vector.load %arg17[%c0_146, %c0_147] : memref<16x128xf32, #tpu.memory_space<vmem>>, vector<16x128xf32>
    tpu.vector_store %arg17[%c0_146, %c0_147], %334 {strides = array<i32>} : memref<16x128xf32, #tpu.memory_space<vmem>>, vector<16x128xf32>,
    return
  }
}

</mosaic_0001>

<llo_original>
// kernel: transformer_forward.1
$region0: #{transformer_forward.1}
  #allocation0 [shape = 'u32[]', space=smem, size = 0x4, offset = 0x4, fixed_abs, tag = 'smem constant byte address 0x4 - core index']
  #allocation1 [shape = 'u32[144,128]{1,0:T(1,128)}', space=vmem, size = 0x12000, scoped, tag = 'internal scratch']
  %s0 = inlined_call_operand.vmem [shape: s32[16,1], index: 0, kind: input, shape index: {}]
  %s1 = inlined_call_operand.vmem [shape: f32[50,32], index: 1, kind: input, shape index: {}]
  %s2 = inlined_call_operand.vmem [shape: f32[16,32], index: 2, kind: input, shape index: {}]
  %s3 = inlined_call_operand.vmem [shape: f32[2,32,96], index: 3, kind: input, shape index: {}]
  %s4 = inlined_call_operand.vmem [shape: f32[2,1,96], index: 4, kind: input, shape index: {}]
  %s5 = inlined_call_operand.vmem [shape: f32[2,32,32], index: 5, kind: input, shape index: {}]
  %s6 = inlined_call_operand.vmem [shape: f32[2,1,32], index: 6, kind: input, shape index: {}]
  %s7 = inlined_call_operand.vmem [shape: f32[2,1,32], index: 7, kind: input, shape index: {}]
  %s8 = inlined_call_operand.vmem [shape: f32[2,1,32], index: 8, kind: input, shape index: {}]
  %s9 = inlined_call_operand.vmem [shape: f32[2,32,64], index: 9, kind: input, shape index: {}]
  %s10 = inlined_call_operand.vmem [shape: f32[2,1,64], index: 10, kind: input, shape index: {}]
  %s11 = inlined_call_operand.vmem [shape: f32[2,64,32], index: 11, kind: input, shape index: {}]
  %s12 = inlined_call_operand.vmem [shape: f32[2,1,32], index: 12, kind: input, shape index: {}]
  %s13 = inlined_call_operand.vmem [shape: f32[2,1,32], index: 13, kind: input, shape index: {}]
  %s14 = inlined_call_operand.vmem [shape: f32[2,1,32], index: 14, kind: input, shape index: {}]
  %s15 = inlined_call_operand.vmem [shape: f32[32,128], index: 15, kind: input, shape index: {}]
  %s16 = inlined_call_operand.vmem [shape: f32[1,128], index: 16, kind: input, shape index: {}]
  %s17 = inlined_call_operand.vmem [shape: f32[16,128], index: 17, kind: output, shape index: {}]
  %s18 = sld [smem:[#allocation0]]
  $region78: #{transformer_forward.1} parent=0
    _
  %s20 = ssub.s32 1, %s18
  %s21 = scalar_select 0, %s20, %s18
  // Predicated region
  $region2: #{transformer_forward.1} parent=0 // pred_check
    _
  $region3: #{transformer_forward.1} parent=0 // pred_check_branch
    %23 = sbr.rel (0) target = $region5
  $region4: #{transformer_forward.1} parent=0 // pred_region
    _
  $region5: #{transformer_forward.1} parent=0 // pred_fallthru
    _
  // Predicated region
  $region6: #{transformer_forward.1} parent=0 // pred_check
    _
  $region7: #{transformer_forward.1} parent=0 // pred_check_branch
    %25 = sbr.rel (0) target = $region9
  $region8: #{transformer_forward.1} parent=0 // pred_region
    _
  $region9: #{transformer_forward.1} parent=0 // pred_fallthru
    _
  // Predicated region
  $region10: #{transformer_forward.1} parent=0 // pred_check
    _
  $region11: #{transformer_forward.1} parent=0 // pred_check_branch
    %27 = sbr.rel (0) target = $region13
  $region12: #{transformer_forward.1} parent=0 // pred_region
    _
  $region13: #{transformer_forward.1} parent=0 // pred_fallthru
    _
  // Predicated region
  $region14: #{transformer_forward.1} parent=0 // pred_check
    _
  $region15: #{transformer_forward.1} parent=0 // pred_check_branch
    %29 = sbr.rel (0) target = $region17
  $region16: #{transformer_forward.1} parent=0 // pred_region
    _
  $region17: #{transformer_forward.1} parent=0 // pred_fallthru
    _
  // Predicated region
  $region18: #{transformer_forward.1} parent=0 // pred_check
    _
  $region19: #{transformer_forward.1} parent=0 // pred_check_branch
    %31 = sbr.rel (0) target = $region21
  $region20: #{transformer_forward.1} parent=0 // pred_region
    _
  $region21: #{transformer_forward.1} parent=0 // pred_fallthru
    _
  // Predicated region
  $region22: #{transformer_forward.1} parent=0 // pred_check
    _
  $region23: #{transformer_forward.1} parent=0 // pred_check_branch
    %33 = sbr.rel (0) target = $region25
  $region24: #{transformer_forward.1} parent=0 // pred_region
    _
  $region25: #{transformer_forward.1} parent=0 // pred_fallthru
    _
  // Predicated region
  $region26: #{transformer_forward.1} parent=0 // pred_check
    _
  $region27: #{transformer_forward.1} parent=0 // pred_check_branch
    %35 = sbr.rel (0) target = $region29
  $region28: #{transformer_forward.1} parent=0 // pred_region
    _
  $region29: #{transformer_forward.1} parent=0 // pred_fallthru
    _
  // Predicated region
  $region30: #{transformer_forward.1} parent=0 // pred_check
    _
  $region31: #{transformer_forward.1} parent=0 // pred_check_branch
    %37 = sbr.rel (0) target = $region33
  $region32: #{transformer_forward.1} parent=0 // pred_region
    _
  $region33: #{transformer_forward.1} parent=0 // pred_fallthru
    _
  // Predicated region
  $region34: #{transformer_forward.1} parent=0 // pred_check
    _
  $region35: #{transformer_forward.1} parent=0 // pred_check_branch
    %39 = sbr.rel (0) target = $region37
  $region36: #{transformer_forward.1} parent=0 // pred_region
    _
  $region37: #{transformer_forward.1} parent=0 // pred_fallthru
    _
  // Predicated region
  $region38: #{transformer_forward.1} parent=0 // pred_check
    _
  $region39: #{transformer_forward.1} parent=0 // pred_check_branch
    %41 = sbr.rel (0) target = $region41
  $region40: #{transformer_forward.1} parent=0 // pred_region
    _
  $region41: #{transformer_forward.1} parent=0 // pred_fallthru
    _
  // Predicated region
  $region42: #{transformer_forward.1} parent=0 // pred_check
    _
  $region43: #{transformer_forward.1} parent=0 // pred_check_branch
    %43 = sbr.rel (0) target = $region45
  $region44: #{transformer_forward.1} parent=0 // pred_region
    _
  $region45: #{transformer_forward.1} parent=0 // pred_fallthru
    _
  // Predicated region
  $region46: #{transformer_forward.1} parent=0 // pred_check
    _
  $region47: #{transformer_forward.1} parent=0 // pred_check_branch
    %45 = sbr.rel (0) target = $region49
  $region48: #{transformer_forward.1} parent=0 // pred_region
    _
  $region49: #{transformer_forward.1} parent=0 // pred_fallthru
    _
  // Predicated region
  $region50: #{transformer_forward.1} parent=0 // pred_check
    _
  $region51: #{transformer_forward.1} parent=0 // pred_check_branch
    %47 = sbr.rel (0) target = $region53
  $region52: #{transformer_forward.1} parent=0 // pred_region
    _
  $region53: #{transformer_forward.1} parent=0 // pred_fallthru
    _
  // Predicated region
  $region54: #{transformer_forward.1} parent=0 // pred_check
    _
  $region55: #{transformer_forward.1} parent=0 // pred_check_branch
    %49 = sbr.rel (0) target = $region57
  $region56: #{transformer_forward.1} parent=0 // pred_region
    _
  $region57: #{transformer_forward.1} parent=0 // pred_fallthru
    _
  // Predicated region
  $region58: #{transformer_forward.1} parent=0 // pred_check
    _
  $region59: #{transformer_forward.1} parent=0 // pred_check_branch
    %51 = sbr.rel (0) target = $region61
  $region60: #{transformer_forward.1} parent=0 // pred_region
    _
  $region61: #{transformer_forward.1} parent=0 // pred_fallthru
    _
  // Predicated region
  $region62: #{transformer_forward.1} parent=0 // pred_check
    _
  $region63: #{transformer_forward.1} parent=0 // pred_check_branch
    %53 = sbr.rel (0) target = $region65
  $region64: #{transformer_forward.1} parent=0 // pred_region
    _
  $region65: #{transformer_forward.1} parent=0 // pred_fallthru
    _
  // Predicated region
  $region66: #{transformer_forward.1} parent=0 // pred_check
    _
  $region67: #{transformer_forward.1} parent=0 // pred_check_branch
    %55 = sbr.rel (0) target = $region69
  $region68: #{transformer_forward.1} parent=0 // pred_region
    _
  $region69: #{transformer_forward.1} parent=0 // pred_fallthru
    _
  %v56 = vld [vmem:[%s0] sm:$0xff]
  %v57 = vld [vmem:[%s0 + $0x8] sm:$0xff]
  %v58 = vlaneseq
  %v59 = vand.u32 %v58, 127
  %60 = vset.pattern.permute.xlu0 0
  %61 = vperm.xlu0 %60, %v56
  %v62 = vpop.permute.xlu0 %61
  %63 = vset.pattern.permute.xlu0 0
  %64 = vperm.xlu0 %63, %v57
  %v65 = vpop.permute.xlu0 %64
  %vm66 = vcmp.eq.s32.totalorder %v62, %v59
  %vm67 = vcmp.eq.s32.totalorder %v65, %v59
  %v68 = vsel %vm66, 1, 0
  %v69 = vsel %vm67, 1, 0
  %v70 = vcvt.s32.f32 %v68
  %v71 = vcvt.s32.f32 %v69
  %v72 = vld [vmem:[%s1] sm:$0xff]
  %v73 = vld [vmem:[%s1 + $0x8] sm:$0xff]
  %v74 = vld [vmem:[%s1 + $0x10] sm:$0xff]
  %v75 = vld [vmem:[%s1 + $0x18] sm:$0xff]
  %v76 = vld [vmem:[%s1 + $0x20] sm:$0xff]
  %v77 = vld [vmem:[%s1 + $0x28] sm:$0xff]
  %v78 = vld [vmem:[%s1 + $0x30] sm:$0x3]
  %vm79 = vcmask 408576
  %v81 = vsel %vm79, %v70, 0
  %v84 = vsel %vm79, %v71, 0
  %vm86 = vcmask 1041408
  %v88 = vsel %vm86, %v78, 0
  %90 = vmatprep.subr.mxu0 0.0
  %91 = vmatpush1.msra.mxu0 %v72
  %92 = vmatprep.subr.mxu0 0.0
  %93 = vmatpush1.msra.mxu0 %v73
  %94 = vmatprep.subr.mxu0 0.0
  %95 = vmatpush1.msra.mxu0 %v74
  %96 = vmatprep.subr.mxu0 0.0
  %97 = vmatpush1.msra.mxu0 %v75
  %98 = vmatprep.subr.mxu0 0.0
  %99 = vmatpush1.msra.mxu0 %v76
  %100 = vmatprep.subr.mxu0 0.0
  %101 = vmatpush1.msra.mxu0 %v77
  %102 = vmatprep.subr.mxu0 0.0
  %103 = vmatpush1.msra.mxu0 %v88
  %104 = vmatprep.subr.mxu0 0.0
  %105 = vmatpush1.msra.mxu0 0.0
  %106 = vmatprep.subr.mxu0 0.0
  %107 = vmatpush1.msra.mxu0 0.0
  %108 = vmatprep.subr.mxu0 0.0
  %109 = vmatpush1.msra.mxu0 0.0
  %110 = vmatprep.subr.mxu0 0.0
  %111 = vmatpush1.msra.mxu0 0.0
  %112 = vmatprep.subr.mxu0 0.0
  %113 = vmatpush1.msra.mxu0 0.0
  %114 = vmatprep.subr.mxu0 0.0
  %115 = vmatpush1.msra.mxu0 0.0
  %116 = vmatprep.subr.mxu0 0.0
  %117 = vmatpush1.msra.mxu0 0.0
  %118 = vmatprep.subr.mxu0 0.0
  %119 = vmatpush1.msra.mxu0 0.0
  %120 = vmatprep.subr.mxu0 0.0
  %121 = vmatpush1.msra.mxu0 0.0
  %122 = vmatprep.subr.mxu0 0.0
  %123 = vmatpush1.msra.mxu0 0.0
  %124 = vmatprep.subr.mxu0 0.0
  %125 = vmatpush1.msra.mxu0 0.0
  %126 = vmatprep.subr.mxu0 0.0
  %127 = vmatpush1.msra.mxu0 0.0
  %128 = vmatprep.subr.mxu0 0.0
  %129 = vmatpush1.msra.mxu0 0.0
  %130 = vmatprep.subr.mxu0 0.0
  %131 = vmatpush1.msra.mxu0 0.0
  %132 = vmatprep.subr.mxu0 0.0
  %133 = vmatpush1.msra.mxu0 0.0
  %134 = vmatprep.subr.mxu0 0.0
  %135 = vmatpush1.msra.mxu0 0.0
  %136 = vmatprep.subr.mxu0 0.0
  %137 = vmatpush1.msra.mxu0 0.0
  %138 = vmatprep.subr.mxu0 0.0
  %139 = vmatpush1.msra.mxu0 0.0
  %140 = vmatprep.subr.mxu0 0.0
  %141 = vmatpush1.msra.mxu0 0.0
  %142 = vmatprep.subr.mxu0 0.0
  %143 = vmatpush1.msra.mxu0 0.0
  %144 = vmatprep.subr.mxu0 0.0
  %145 = vmatpush1.msra.mxu0 0.0
  %146 = vmatprep.subr.mxu0 0.0
  %147 = vmatpush1.msra.mxu0 0.0
  %148 = vmatprep.subr.mxu0 0.0
  %149 = vmatpush1.msra.mxu0 0.0
  %150 = vmatprep.subr.mxu0 0.0
  %151 = vmatpush1.msra.mxu0 0.0
  %152 = vmatprep.subr.mxu0 0.0
  %153 = vmatpush1.msra.mxu0 0.0
  %154 = vmatprep.mubr.f32.mxu0 0.0
  %155 = vmatmul.mubr.f32.gmra.mrb[0].mxu0 %v81
  %v156 = vpop.f32.mrb[0].mxu0
  %v157 = vadd.f32 0.0, %v156
  %v158 = vpop.f32.mrb[0].mxu0
  %159 = vmatprep.mubr.f32.mxu0 0.0
  %160 = vmatmul.mubr.f32.gmra.mrb[0].mxu0 %v84
  %v161 = vpop.f32.mrb[0].mxu0
  %v162 = vadd.f32 0.0, %v161
  %v163 = vpop.f32.mrb[0].mxu0
  %164 = vdwg.mxu0
  %v165 = vmul.f32 %v157, 7.071068
  %v166 = vmul.f32 %v162, 7.071068
  %v167 = vld [vmem:[%s2] sm:$0xff]
  %v168 = vld [vmem:[%s2 + $0x8] sm:$0xff]
  %v169 = vadd.f32 %v165, %v167
  %v170 = vadd.f32 %v166, %v168
  %v171 = vlaneseq
  %v172 = vshrl.u32 %v171, 7
  %vm173 = vcmp.le.s32.totalorder %v59, %v172
  %v174 = vsel %vm173, 0.0, -1e+30
  %v175 = vld [vmem:[%s3] sm:$0xff]
  %v176 = vld [vmem:[%s3 + $0x8] sm:$0xff]
  %v177 = vld [vmem:[%s3 + $0x10] sm:$0xff]
  %v178 = vld [vmem:[%s3 + $0x18] sm:$0xff]
  %v179 = vld [vmem:[%s4] sm:$0x1]
  %v181 = vlaneseq
  %v182 = vshrl.u32 %v181, 7
  %v183 = vsub.s32 0, %v182
  %v184 = vrot.slane %v179, %v183
  %vm186 = vcmask 261120
  %v188 = vsel %vm186, %v169, 0
  %v191 = vsel %vm186, %v170, 0
  %193 = vmatprep.subr.mxu0 0.0
  %194 = vmatpush1.msra.mxu0 %v175
  %195 = vmatprep.subr.mxu0 0.0
  %196 = vmatpush1.msra.mxu0 %v176
  %197 = vmatprep.subr.mxu0 0.0
  %198 = vmatpush1.msra.mxu0 %v177
  %199 = vmatprep.subr.mxu0 0.0
  %200 = vmatpush1.msra.mxu0 %v178
  %201 = vmatprep.subr.mxu0 0.0
  %202 = vmatpush1.msra.mxu0 0.0
  %203 = vmatprep.subr.mxu0 0.0
  %204 = vmatpush1.msra.mxu0 0.0
  %205 = vmatprep.subr.mxu0 0.0
  %206 = vmatpush1.msra.mxu0 0.0
  %207 = vmatprep.subr.mxu0 0.0
  %208 = vmatpush1.msra.mxu0 0.0
  %209 = vmatprep.subr.mxu0 0.0
  %210 = vmatpush1.msra.mxu0 0.0
  %211 = vmatprep.subr.mxu0 0.0
  %212 = vmatpush1.msra.mxu0 0.0
  %213 = vmatprep.subr.mxu0 0.0
  %214 = vmatpush1.msra.mxu0 0.0
  %215 = vmatprep.subr.mxu0 0.0
  %216 = vmatpush1.msra.mxu0 0.0
  %217 = vmatprep.subr.mxu0 0.0
  %218 = vmatpush1.msra.mxu0 0.0
  %219 = vmatprep.subr.mxu0 0.0
  %220 = vmatpush1.msra.mxu0 0.0
  %221 = vmatprep.subr.mxu0 0.0
  %222 = vmatpush1.msra.mxu0 0.0
  %223 = vmatprep.subr.mxu0 0.0
  %224 = vmatpush1.msra.mxu0 0.0
  %225 = vmatprep.subr.mxu0 0.0
  %226 = vmatpush1.msra.mxu0 0.0
  %227 = vmatprep.subr.mxu0 0.0
  %228 = vmatpush1.msra.mxu0 0.0
  %229 = vmatprep.subr.mxu0 0.0
  %230 = vmatpush1.msra.mxu0 0.0
  %231 = vmatprep.subr.mxu0 0.0
  %232 = vmatpush1.msra.mxu0 0.0
  %233 = vmatprep.subr.mxu0 0.0
  %234 = vmatpush1.msra.mxu0 0.0
  %235 = vmatprep.subr.mxu0 0.0
  %236 = vmatpush1.msra.mxu0 0.0
  %237 = vmatprep.subr.mxu0 0.0
  %238 = vmatpush1.msra.mxu0 0.0
  %239 = vmatprep.subr.mxu0 0.0
  %240 = vmatpush1.msra.mxu0 0.0
  %241 = vmatprep.subr.mxu0 0.0
  %242 = vmatpush1.msra.mxu0 0.0
  %243 = vmatprep.subr.mxu0 0.0
  %244 = vmatpush1.msra.mxu0 0.0
  %245 = vmatprep.subr.mxu0 0.0
  %246 = vmatpush1.msra.mxu0 0.0
  %247 = vmatprep.subr.mxu0 0.0
  %248 = vmatpush1.msra.mxu0 0.0
  %249 = vmatprep.subr.mxu0 0.0
  %250 = vmatpush1.msra.mxu0 0.0
  %251 = vmatprep.subr.mxu0 0.0
  %252 = vmatpush1.msra.mxu0 0.0
  %253 = vmatprep.subr.mxu0 0.0
  %254 = vmatpush1.msra.mxu0 0.0
  %255 = vmatprep.subr.mxu0 0.0
  %256 = vmatpush1.msra.mxu0 0.0
  %257 = vmatprep.mubr.f32.mxu0 0.0
  %258 = vmatmul.mubr.f32.gmra.mrb[0].mxu0 %v188
  %v259 = vpop.f32.mrb[0].mxu0
  %v260 = vadd.f32 %v184, %v259
  %v261 = vpop.f32.mrb[0].mxu0
  %262 = vmatprep.mubr.f32.mxu0 0.0
  %263 = vmatmul.mubr.f32.gmra.mrb[0].mxu0 %v191
  %v264 = vpop.f32.mrb[0].mxu0
  %v265 = vadd.f32 %v184, %v264
  %v266 = vpop.f32.mrb[0].mxu0
  %267 = vdwg.mxu0
  %269 = vrot.lane.b32.xlu0 %v260, 96
  %v270 = vpop.permute.xlu0 %269
  %vm271 = vcmask 64512
  %v272 = vsel %vm271, %v260, 0
  %v274 = vsel %vm271, %v270, 0
  %276 = vmatprep.subr.mxu0 0.0
  %277 = vmatpush1.xpose.msra.mxu0 %v274
  %278 = vmatprep.subr.mxu0 0.0
  %279 = vmatpush1.xpose.msra.mxu0 0.0
  %280 = vmatprep.subr.mxu0 0.0
  %281 = vmatpush1.xpose.msra.mxu0 0.0
  %282 = vmatprep.subr.mxu0 0.0
  %283 = vmatpush1.xpose.msra.mxu0 0.0
  %284 = vmatprep.subr.mxu0 0.0
  %285 = vmatpush1.xpose.msra.mxu0 0.0
  %286 = vmatprep.subr.mxu0 0.0
  %287 = vmatpush1.xpose.msra.mxu0 0.0
  %288 = vmatprep.subr.mxu0 0.0
  %289 = vmatpush1.xpose.msra.mxu0 0.0
  %290 = vmatprep.subr.mxu0 0.0
  %291 = vmatpush1.xpose.msra.mxu0 0.0
  %292 = vmatprep.subr.mxu0 0.0
  %293 = vmatpush1.xpose.msra.mxu0 0.0
  %294 = vmatprep.subr.mxu0 0.0
  %295 = vmatpush1.xpose.msra.mxu0 0.0
  %296 = vmatprep.subr.mxu0 0.0
  %297 = vmatpush1.xpose.msra.mxu0 0.0
  %298 = vmatprep.subr.mxu0 0.0
  %299 = vmatpush1.xpose.msra.mxu0 0.0
  %300 = vmatprep.subr.mxu0 0.0
  %301 = vmatpush1.xpose.msra.mxu0 0.0
  %302 = vmatprep.subr.mxu0 0.0
  %303 = vmatpush1.xpose.msra.mxu0 0.0
  %304 = vmatprep.subr.mxu0 0.0
  %305 = vmatpush1.xpose.msra.mxu0 0.0
  %306 = vmatprep.subr.mxu0 0.0
  %307 = vmatpush1.xpose.msra.mxu0 0.0
  %308 = vmatprep.subr.mxu0 0.0
  %309 = vmatpush1.xpose.msra.mxu0 0.0
  %310 = vmatprep.subr.mxu0 0.0
  %311 = vmatpush1.xpose.msra.mxu0 0.0
  %312 = vmatprep.subr.mxu0 0.0
  %313 = vmatpush1.xpose.msra.mxu0 0.0
  %314 = vmatprep.subr.mxu0 0.0
  %315 = vmatpush1.xpose.msra.mxu0 0.0
  %316 = vmatprep.subr.mxu0 0.0
  %317 = vmatpush1.xpose.msra.mxu0 0.0
  %318 = vmatprep.subr.mxu0 0.0
  %319 = vmatpush1.xpose.msra.mxu0 0.0
  %320 = vmatprep.subr.mxu0 0.0
  %321 = vmatpush1.xpose.msra.mxu0 0.0
  %322 = vmatprep.subr.mxu0 0.0
  %323 = vmatpush1.xpose.msra.mxu0 0.0
  %324 = vmatprep.subr.mxu0 0.0
  %325 = vmatpush1.xpose.msra.mxu0 0.0
  %326 = vmatprep.subr.mxu0 0.0
  %327 = vmatpush1.xpose.msra.mxu0 0.0
  %328 = vmatprep.subr.mxu0 0.0
  %329 = vmatpush1.xpose.msra.mxu0 0.0
  %330 = vmatprep.subr.mxu0 0.0
  %331 = vmatpush1.xpose.msra.mxu0 0.0
  %332 = vmatprep.subr.mxu0 0.0
  %333 = vmatpush1.xpose.msra.mxu0 0.0
  %334 = vmatprep.subr.mxu0 0.0
  %335 = vmatpush1.xpose.msra.mxu0 0.0
  %336 = vmatprep.subr.mxu0 0.0
  %337 = vmatpush1.xpose.msra.mxu0 0.0
  %338 = vmatprep.subr.mxu0 0.0
  %339 = vmatpush1.xpose.msra.mxu0 0.0
  %340 = vmatprep.mubr.f32.mxu0 0.0
  %341 = vmatmul.mubr.f32.gmra.mrb[0].mxu0 %v272
  %v342 = vpop.f32.mrb[0].mxu0
  %v343 = vadd.f32 %v174, %v342
  %v344 = vpop.f32.mrb[0].mxu0
  %345 = vdwg.mxu0
  %347 = vrot.lane.b32.xlu0 %v265, 96
  %v348 = vpop.permute.xlu0 %347
  %v349 = vsel %vm271, %v265, 0
  %v351 = vsel %vm271, %v348, 0
  %353 = vmatprep.subr.mxu0 0.0
  %354 = vmatpush1.xpose.msra.mxu0 %v351
  %355 = vmatprep.subr.mxu0 0.0
  %356 = vmatpush1.xpose.msra.mxu0 0.0
  %357 = vmatprep.subr.mxu0 0.0
  %358 = vmatpush1.xpose.msra.mxu0 0.0
  %359 = vmatprep.subr.mxu0 0.0
  %360 = vmatpush1.xpose.msra.mxu0 0.0
  %361 = vmatprep.subr.mxu0 0.0
  %362 = vmatpush1.xpose.msra.mxu0 0.0
  %363 = vmatprep.subr.mxu0 0.0
  %364 = vmatpush1.xpose.msra.mxu0 0.0
  %365 = vmatprep.subr.mxu0 0.0
  %366 = vmatpush1.xpose.msra.mxu0 0.0
  %367 = vmatprep.subr.mxu0 0.0
  %368 = vmatpush1.xpose.msra.mxu0 0.0
  %369 = vmatprep.subr.mxu0 0.0
  %370 = vmatpush1.xpose.msra.mxu0 0.0
  %371 = vmatprep.subr.mxu0 0.0
  %372 = vmatpush1.xpose.msra.mxu0 0.0
  %373 = vmatprep.subr.mxu0 0.0
  %374 = vmatpush1.xpose.msra.mxu0 0.0
  %375 = vmatprep.subr.mxu0 0.0
  %376 = vmatpush1.xpose.msra.mxu0 0.0
  %377 = vmatprep.subr.mxu0 0.0
  %378 = vmatpush1.xpose.msra.mxu0 0.0
  %379 = vmatprep.subr.mxu0 0.0
  %380 = vmatpush1.xpose.msra.mxu0 0.0
  %381 = vmatprep.subr.mxu0 0.0
  %382 = vmatpush1.xpose.msra.mxu0 0.0
  %383 = vmatprep.subr.mxu0 0.0
  %384 = vmatpush1.xpose.msra.mxu0 0.0
  %385 = vmatprep.subr.mxu0 0.0
  %386 = vmatpush1.xpose.msra.mxu0 0.0
  %387 = vmatprep.subr.mxu0 0.0
  %388 = vmatpush1.xpose.msra.mxu0 0.0
  %389 = vmatprep.subr.mxu0 0.0
  %390 = vmatpush1.xpose.msra.mxu0 0.0
  %391 = vmatprep.subr.mxu0 0.0
  %392 = vmatpush1.xpose.msra.mxu0 0.0
  %393 = vmatprep.subr.mxu0 0.0
  %394 = vmatpush1.xpose.msra.mxu0 0.0
  %395 = vmatprep.subr.mxu0 0.0
  %396 = vmatpush1.xpose.msra.mxu0 0.0
  %397 = vmatprep.subr.mxu0 0.0
  %398 = vmatpush1.xpose.msra.mxu0 0.0
  %399 = vmatprep.subr.mxu0 0.0
  %400 = vmatpush1.xpose.msra.mxu0 0.0
  %401 = vmatprep.subr.mxu0 0.0
  %402 = vmatpush1.xpose.msra.mxu0 0.0
  %403 = vmatprep.subr.mxu0 0.0
  %404 = vmatpush1.xpose.msra.mxu0 0.0
  %405 = vmatprep.subr.mxu0 0.0
  %406 = vmatpush1.xpose.msra.mxu0 0.0
  %407 = vmatprep.subr.mxu0 0.0
  %408 = vmatpush1.xpose.msra.mxu0 0.0
  %409 = vmatprep.subr.mxu0 0.0
  %410 = vmatpush1.xpose.msra.mxu0 0.0
  %411 = vmatprep.subr.mxu0 0.0
  %412 = vmatpush1.xpose.msra.mxu0 0.0
  %413 = vmatprep.subr.mxu0 0.0
  %414 = vmatpush1.xpose.msra.mxu0 0.0
  %415 = vmatprep.subr.mxu0 0.0
  %416 = vmatpush1.xpose.msra.mxu0 0.0
  %417 = vmatprep.mubr.f32.mxu0 0.0
  %418 = vmatmul.mubr.f32.gmra.mrb[0].mxu0 %v349
  %v419 = vpop.f32.mrb[0].mxu0
  %v420 = vadd.f32 %v174, %v419
  %v421 = vpop.f32.mrb[0].mxu0
  %422 = vdwg.mxu0
  %v423 = vsel %vm271, %v343, -inf
  %424 = vmax.xlane.f32.xlu0 %v423
  %v425 = vpop.xlane.xlu0 %424
  %v426 = vsel %vm271, %v420, -inf
  %427 = vmax.xlane.f32.xlu0 %v426
  %v428 = vpop.xlane.xlu0 %427
  %v429 = vsub.f32 %v343, %v425
  %v430 = vsub.f32 %v420, %v428
  %v431 = vmul.f32 %v429, 1.442695
  %v432 = vpow.pop %v431
  %v433 = vmul.f32 %v430, 1.442695
  %v434 = vpow.pop %v433
  %v435 = vsel %vm271, %v432, 0.0
  %436 = vadd.xlane.f32.xlu0 %v435
  %v437 = vpop.xlane.xlu0 %436
  %v438 = vsel %vm271, %v434, 0.0
  %439 = vadd.xlane.f32.xlu0 %v438
  %v440 = vpop.xlane.xlu0 %439
  %v441 = vrcp.pop %v437
  %v442 = vmul.f32 %v432, %v441
  %v443 = vrcp.pop %v440
  %v444 = vmul.f32 %v434, %v443
  %445 = vrot.lane.b32.xlu0 %v260, 64
  %v446 = vpop.permute.xlu0 %445
  %v449 = vsel %vm271, %v442, 0
  %451 = vmatprep.subr.mxu0 0.0
  %452 = vmatpush1.msra.mxu0 %v446
  %453 = vmatprep.subr.mxu0 0.0
  %454 = vmatpush1.msra.mxu0 0.0
  %455 = vmatprep.subr.mxu0 0.0
  %456 = vmatpush1.msra.mxu0 0.0
  %457 = vmatprep.subr.mxu0 0.0
  %458 = vmatpush1.msra.mxu0 0.0
  %459 = vmatprep.subr.mxu0 0.0
  %460 = vmatpush1.msra.mxu0 0.0
  %461 = vmatprep.subr.mxu0 0.0
  %462 = vmatpush1.msra.mxu0 0.0
  %463 = vmatprep.subr.mxu0 0.0
  %464 = vmatpush1.msra.mxu0 0.0
  %465 = vmatprep.subr.mxu0 0.0
  %466 = vmatpush1.msra.mxu0 0.0
  %467 = vmatprep.subr.mxu0 0.0
  %468 = vmatpush1.msra.mxu0 0.0
  %469 = vmatprep.subr.mxu0 0.0
  %470 = vmatpush1.msra.mxu0 0.0
  %471 = vmatprep.subr.mxu0 0.0
  %472 = vmatpush1.msra.mxu0 0.0
  %473 = vmatprep.subr.mxu0 0.0
  %474 = vmatpush1.msra.mxu0 0.0
  %475 = vmatprep.subr.mxu0 0.0
  %476 = vmatpush1.msra.mxu0 0.0
  %477 = vmatprep.subr.mxu0 0.0
  %478 = vmatpush1.msra.mxu0 0.0
  %479 = vmatprep.subr.mxu0 0.0
  %480 = vmatpush1.msra.mxu0 0.0
  %481 = vmatprep.subr.mxu0 0.0
  %482 = vmatpush1.msra.mxu0 0.0
  %483 = vmatprep.subr.mxu0 0.0
  %484 = vmatpush1.msra.mxu0 0.0
  %485 = vmatprep.subr.mxu0 0.0
  %486 = vmatpush1.msra.mxu0 0.0
  %487 = vmatprep.subr.mxu0 0.0
  %488 = vmatpush1.msra.mxu0 0.0
  %489 = vmatprep.subr.mxu0 0.0
  %490 = vmatpush1.msra.mxu0 0.0
  %491 = vmatprep.subr.mxu0 0.0
  %492 = vmatpush1.msra.mxu0 0.0
  %493 = vmatprep.subr.mxu0 0.0
  %494 = vmatpush1.msra.mxu0 0.0
  %495 = vmatprep.subr.mxu0 0.0
  %496 = vmatpush1.msra.mxu0 0.0
  %497 = vmatprep.subr.mxu0 0.0
  %498 = vmatpush1.msra.mxu0 0.0
  %499 = vmatprep.subr.mxu0 0.0
  %500 = vmatpush1.msra.mxu0 0.0
  %501 = vmatprep.subr.mxu0 0.0
  %502 = vmatpush1.msra.mxu0 0.0
  %503 = vmatprep.subr.mxu0 0.0
  %504 = vmatpush1.msra.mxu0 0.0
  %505 = vmatprep.subr.mxu0 0.0
  %506 = vmatpush1.msra.mxu0 0.0
  %507 = vmatprep.subr.mxu0 0.0
  %508 = vmatpush1.msra.mxu0 0.0
  %509 = vmatprep.subr.mxu0 0.0
  %510 = vmatpush1.msra.mxu0 0.0
  %511 = vmatprep.subr.mxu0 0.0
  %512 = vmatpush1.msra.mxu0 0.0
  %513 = vmatprep.subr.mxu0 0.0
  %514 = vmatpush1.msra.mxu0 0.0
  %515 = vmatprep.mubr.f32.mxu0 0.0
  %516 = vmatmul.mubr.f32.gmra.mrb[0].mxu0 %v449
  %v517 = vpop.f32.mrb[0].mxu0
  %v518 = vadd.f32 0.0, %v517
  %v519 = vpop.f32.mrb[0].mxu0
  %520 = vdwg.mxu0
  %521 = vrot.lane.b32.xlu0 %v265, 64
  %v522 = vpop.permute.xlu0 %521
  %v525 = vsel %vm271, %v444, 0
  %527 = vmatprep.subr.mxu0 0.0
  %528 = vmatpush1.msra.mxu0 %v522
  %529 = vmatprep.subr.mxu0 0.0
  %530 = vmatpush1.msra.mxu0 0.0
  %531 = vmatprep.subr.mxu0 0.0
  %532 = vmatpush1.msra.mxu0 0.0
  %533 = vmatprep.subr.mxu0 0.0
  %534 = vmatpush1.msra.mxu0 0.0
  %535 = vmatprep.subr.mxu0 0.0
  %536 = vmatpush1.msra.mxu0 0.0
  %537 = vmatprep.subr.mxu0 0.0
  %538 = vmatpush1.msra.mxu0 0.0
  %539 = vmatprep.subr.mxu0 0.0
  %540 = vmatpush1.msra.mxu0 0.0
  %541 = vmatprep.subr.mxu0 0.0
  %542 = vmatpush1.msra.mxu0 0.0
  %543 = vmatprep.subr.mxu0 0.0
  %544 = vmatpush1.msra.mxu0 0.0
  %545 = vmatprep.subr.mxu0 0.0
  %546 = vmatpush1.msra.mxu0 0.0
  %547 = vmatprep.subr.mxu0 0.0
  %548 = vmatpush1.msra.mxu0 0.0
  %549 = vmatprep.subr.mxu0 0.0
  %550 = vmatpush1.msra.mxu0 0.0
  %551 = vmatprep.subr.mxu0 0.0
  %552 = vmatpush1.msra.mxu0 0.0
  %553 = vmatprep.subr.mxu0 0.0
  %554 = vmatpush1.msra.mxu0 0.0
  %555 = vmatprep.subr.mxu0 0.0
  %556 = vmatpush1.msra.mxu0 0.0
  %557 = vmatprep.subr.mxu0 0.0
  %558 = vmatpush1.msra.mxu0 0.0
  %559 = vmatprep.subr.mxu0 0.0
  %560 = vmatpush1.msra.mxu0 0.0
  %561 = vmatprep.subr.mxu0 0.0
  %562 = vmatpush1.msra.mxu0 0.0
  %563 = vmatprep.subr.mxu0 0.0
  %564 = vmatpush1.msra.mxu0 0.0
  %565 = vmatprep.subr.mxu0 0.0
  %566 = vmatpush1.msra.mxu0 0.0
  %567 = vmatprep.subr.mxu0 0.0
  %568 = vmatpush1.msra.mxu0 0.0
  %569 = vmatprep.subr.mxu0 0.0
  %570 = vmatpush1.msra.mxu0 0.0
  %571 = vmatprep.subr.mxu0 0.0
  %572 = vmatpush1.msra.mxu0 0.0
  %573 = vmatprep.subr.mxu0 0.0
  %574 = vmatpush1.msra.mxu0 0.0
  %575 = vmatprep.subr.mxu0 0.0
  %576 = vmatpush1.msra.mxu0 0.0
  %577 = vmatprep.subr.mxu0 0.0
  %578 = vmatpush1.msra.mxu0 0.0
  %579 = vmatprep.subr.mxu0 0.0
  %580 = vmatpush1.msra.mxu0 0.0
  %581 = vmatprep.subr.mxu0 0.0
  %582 = vmatpush1.msra.mxu0 0.0
  %583 = vmatprep.subr.mxu0 0.0
  %584 = vmatpush1.msra.mxu0 0.0
  %585 = vmatprep.subr.mxu0 0.0
  %586 = vmatpush1.msra.mxu0 0.0
  %587 = vmatprep.subr.mxu0 0.0
  %588 = vmatpush1.msra.mxu0 0.0
  %589 = vmatprep.subr.mxu0 0.0
  %590 = vmatpush1.msra.mxu0 0.0
  %591 = vmatprep.mubr.f32.mxu0 0.0
  %592 = vmatmul.mubr.f32.gmra.mrb[0].mxu0 %v525
  %v593 = vpop.f32.mrb[0].mxu0
  %v594 = vadd.f32 0.0, %v593
  %v595 = vpop.f32.mrb[0].mxu0
  %596 = vdwg.mxu0
  %597 = vrot.lane.b32.xlu0 %v260, 120
  %v598 = vpop.permute.xlu0 %597
  %599 = vrot.lane.b32.xlu0 %v260, 88
  %v600 = vpop.permute.xlu0 %599
  %v601 = vsel %vm271, %v598, 0
  %v603 = vsel %vm271, %v600, 0
  %605 = vmatprep.subr.mxu0 0.0
  %606 = vmatpush1.xpose.msra.mxu0 %v603
  %607 = vmatprep.subr.mxu0 0.0
  %608 = vmatpush1.xpose.msra.mxu0 0.0
  %609 = vmatprep.subr.mxu0 0.0
  %610 = vmatpush1.xpose.msra.mxu0 0.0
  %611 = vmatprep.subr.mxu0 0.0
  %612 = vmatpush1.xpose.msra.mxu0 0.0
  %613 = vmatprep.subr.mxu0 0.0
  %614 = vmatpush1.xpose.msra.mxu0 0.0
  %615 = vmatprep.subr.mxu0 0.0
  %616 = vmatpush1.xpose.msra.mxu0 0.0
  %617 = vmatprep.subr.mxu0 0.0
  %618 = vmatpush1.xpose.msra.mxu0 0.0
  %619 = vmatprep.subr.mxu0 0.0
  %620 = vmatpush1.xpose.msra.mxu0 0.0
  %621 = vmatprep.subr.mxu0 0.0
  %622 = vmatpush1.xpose.msra.mxu0 0.0
  %623 = vmatprep.subr.mxu0 0.0
  %624 = vmatpush1.xpose.msra.mxu0 0.0
  %625 = vmatprep.subr.mxu0 0.0
  %626 = vmatpush1.xpose.msra.mxu0 0.0
  %627 = vmatprep.subr.mxu0 0.0
  %628 = vmatpush1.xpose.msra.mxu0 0.0
  %629 = vmatprep.subr.mxu0 0.0
  %630 = vmatpush1.xpose.msra.mxu0 0.0
  %631 = vmatprep.subr.mxu0 0.0
  %632 = vmatpush1.xpose.msra.mxu0 0.0
  %633 = vmatprep.subr.mxu0 0.0
  %634 = vmatpush1.xpose.msra.mxu0 0.0
  %635 = vmatprep.subr.mxu0 0.0
  %636 = vmatpush1.xpose.msra.mxu0 0.0
  %637 = vmatprep.subr.mxu0 0.0
  %638 = vmatpush1.xpose.msra.mxu0 0.0
  %639 = vmatprep.subr.mxu0 0.0
  %640 = vmatpush1.xpose.msra.mxu0 0.0
  %641 = vmatprep.subr.mxu0 0.0
  %642 = vmatpush1.xpose.msra.mxu0 0.0
  %643 = vmatprep.subr.mxu0 0.0
  %644 = vmatpush1.xpose.msra.mxu0 0.0
  %645 = vmatprep.subr.mxu0 0.0
  %646 = vmatpush1.xpose.msra.mxu0 0.0
  %647 = vmatprep.subr.mxu0 0.0
  %648 = vmatpush1.xpose.msra.mxu0 0.0
  %649 = vmatprep.subr.mxu0 0.0
  %650 = vmatpush1.xpose.msra.mxu0 0.0
  %651 = vmatprep.subr.mxu0 0.0
  %652 = vmatpush1.xpose.msra.mxu0 0.0
  %653 = vmatprep.subr.mxu0 0.0
  %654 = vmatpush1.xpose.msra.mxu0 0.0
  %655 = vmatprep.subr.mxu0 0.0
  %656 = vmatpush1.xpose.msra.mxu0 0.0
  %657 = vmatprep.subr.mxu0 0.0
  %658 = vmatpush1.xpose.msra.mxu0 0.0
  %659 = vmatprep.subr.mxu0 0.0
  %660 = vmatpush1.xpose.msra.mxu0 0.0
  %661 = vmatprep.subr.mxu0 0.0
  %662 = vmatpush1.xpose.msra.mxu0 0.0
  %663 = vmatprep.subr.mxu0 0.0
  %664 = vmatpush1.xpose.msra.mxu0 0.0
  %665 = vmatprep.subr.mxu0 0.0
  %666 = vmatpush1.xpose.msra.mxu0 0.0
  %667 = vmatprep.subr.mxu0 0.0
  %668 = vmatpush1.xpose.msra.mxu0 0.0
  %669 = vmatprep.mubr.f32.mxu0 0.0
  %670 = vmatmul.mubr.f32.gmra.mrb[0].mxu0 %v601
  %v671 = vpop.f32.mrb[0].mxu0
  %v672 = vadd.f32 %v174, %v671
  %v673 = vpop.f32.mrb[0].mxu0
  %674 = vdwg.mxu0
  %675 = vrot.lane.b32.xlu0 %v265, 120
  %v676 = vpop.permute.xlu0 %675
  %677 = vrot.lane.b32.xlu0 %v265, 88
  %v678 = vpop.permute.xlu0 %677
  %v679 = vsel %vm271, %v676, 0
  %v681 = vsel %vm271, %v678, 0
  %683 = vmatprep.subr.mxu0 0.0
  %684 = vmatpush1.xpose.msra.mxu0 %v681
  %685 = vmatprep.subr.mxu0 0.0
  %686 = vmatpush1.xpose.msra.mxu0 0.0
  %687 = vmatprep.subr.mxu0 0.0
  %688 = vmatpush1.xpose.msra.mxu0 0.0
  %689 = vmatprep.subr.mxu0 0.0
  %690 = vmatpush1.xpose.msra.mxu0 0.0
  %691 = vmatprep.subr.mxu0 0.0
  %692 = vmatpush1.xpose.msra.mxu0 0.0
  %693 = vmatprep.subr.mxu0 0.0
  %694 = vmatpush1.xpose.msra.mxu0 0.0
  %695 = vmatprep.subr.mxu0 0.0
  %696 = vmatpush1.xpose.msra.mxu0 0.0
  %697 = vmatprep.subr.mxu0 0.0
  %698 = vmatpush1.xpose.msra.mxu0 0.0
  %699 = vmatprep.subr.mxu0 0.0
  %700 = vmatpush1.xpose.msra.mxu0 0.0
  %701 = vmatprep.subr.mxu0 0.0
  %702 = vmatpush1.xpose.msra.mxu0 0.0
  %703 = vmatprep.subr.mxu0 0.0
  %704 = vmatpush1.xpose.msra.mxu0 0.0
  %705 = vmatprep.subr.mxu0 0.0
  %706 = vmatpush1.xpose.msra.mxu0 0.0
  %707 = vmatprep.subr.mxu0 0.0
  %708 = vmatpush1.xpose.msra.mxu0 0.0
  %709 = vmatprep.subr.mxu0 0.0
  %710 = vmatpush1.xpose.msra.mxu0 0.0
  %711 = vmatprep.subr.mxu0 0.0
  %712 = vmatpush1.xpose.msra.mxu0 0.0
  %713 = vmatprep.subr.mxu0 0.0
  %714 = vmatpush1.xpose.msra.mxu0 0.0
  %715 = vmatprep.subr.mxu0 0.0
  %716 = vmatpush1.xpose.msra.mxu0 0.0
  %717 = vmatprep.subr.mxu0 0.0
  %718 = vmatpush1.xpose.msra.mxu0 0.0
  %719 = vmatprep.subr.mxu0 0.0
  %720 = vmatpush1.xpose.msra.mxu0 0.0
  %721 = vmatprep.subr.mxu0 0.0
  %722 = vmatpush1.xpose.msra.mxu0 0.0
  %723 = vmatprep.subr.mxu0 0.0
  %724 = vmatpush1.xpose.msra.mxu0 0.0
  %725 = vmatprep.subr.mxu0 0.0
  %726 = vmatpush1.xpose.msra.mxu0 0.0
  %727 = vmatprep.subr.mxu0 0.0
  %728 = vmatpush1.xpose.msra.mxu0 0.0
  %729 = vmatprep.subr.mxu0 0.0
  %730 = vmatpush1.xpose.msra.mxu0 0.0
  %731 = vmatprep.subr.mxu0 0.0
  %732 = vmatpush1.xpose.msra.mxu0 0.0
  %733 = vmatprep.subr.mxu0 0.0
  %734 = vmatpush1.xpose.msra.mxu0 0.0
  %735 = vmatprep.subr.mxu0 0.0
  %736 = vmatpush1.xpose.msra.mxu0 0.0
  %737 = vmatprep.subr.mxu0 0.0
  %738 = vmatpush1.xpose.msra.mxu0 0.0
  %739 = vmatprep.subr.mxu0 0.0
  %740 = vmatpush1.xpose.msra.mxu0 0.0
  %741 = vmatprep.subr.mxu0 0.0
  %742 = vmatpush1.xpose.msra.mxu0 0.0
  %743 = vmatprep.subr.mxu0 0.0
  %744 = vmatpush1.xpose.msra.mxu0 0.0
  %745 = vmatprep.subr.mxu0 0.0
  %746 = vmatpush1.xpose.msra.mxu0 0.0
  %747 = vmatprep.mubr.f32.mxu0 0.0
  %748 = vmatmul.mubr.f32.gmra.mrb[0].mxu0 %v679
  %v749 = vpop.f32.mrb[0].mxu0
  %v750 = vadd.f32 %v174, %v749
  %v751 = vpop.f32.mrb[0].mxu0
  %752 = vdwg.mxu0
  %v753 = vsel %vm271, %v672, -inf
  %754 = vmax.xlane.f32.xlu0 %v753
  %v755 = vpop.xlane.xlu0 %754
  %v756 = vsel %vm271, %v750, -inf
  %757 = vmax.xlane.f32.xlu0 %v756
  %v758 = vpop.xlane.xlu0 %757
  %v759 = vsub.f32 %v672, %v755
  %v760 = vsub.f32 %v750, %v758
  %v761 = vmul.f32 %v759, 1.442695
  %v762 = vpow.pop %v761
  %v763 = vmul.f32 %v760, 1.442695
  %v764 = vpow.pop %v763
  %v765 = vsel %vm271, %v762, 0.0
  %766 = vadd.xlane.f32.xlu0 %v765
  %v767 = vpop.xlane.xlu0 %766
  %v768 = vsel %vm271, %v764, 0.0
  %769 = vadd.xlane.f32.xlu0 %v768
  %v770 = vpop.xlane.xlu0 %769
  %v771 = vrcp.pop %v767
  %v772 = vmul.f32 %v762, %v771
  %v773 = vrcp.pop %v770
  %v774 = vmul.f32 %v764, %v773
  %775 = vrot.lane.b32.xlu0 %v260, 56
  %v776 = vpop.permute.xlu0 %775
  %v779 = vsel %vm271, %v772, 0
  %781 = vmatprep.subr.mxu0 0.0
  %782 = vmatpush1.msra.mxu0 %v776
  %783 = vmatprep.subr.mxu0 0.0
  %784 = vmatpush1.msra.mxu0 0.0
  %785 = vmatprep.subr.mxu0 0.0
  %786 = vmatpush1.msra.mxu0 0.0
  %787 = vmatprep.subr.mxu0 0.0
  %788 = vmatpush1.msra.mxu0 0.0
  %789 = vmatprep.subr.mxu0 0.0
  %790 = vmatpush1.msra.mxu0 0.0
  %791 = vmatprep.subr.mxu0 0.0
  %792 = vmatpush1.msra.mxu0 0.0
  %793 = vmatprep.subr.mxu0 0.0
  %794 = vmatpush1.msra.mxu0 0.0
  %795 = vmatprep.subr.mxu0 0.0
  %796 = vmatpush1.msra.mxu0 0.0
  %797 = vmatprep.subr.mxu0 0.0
  %798 = vmatpush1.msra.mxu0 0.0
  %799 = vmatprep.subr.mxu0 0.0
  %800 = vmatpush1.msra.mxu0 0.0
  %801 = vmatprep.subr.mxu0 0.0
  %802 = vmatpush1.msra.mxu0 0.0
  %803 = vmatprep.subr.mxu0 0.0
  %804 = vmatpush1.msra.mxu0 0.0
  %805 = vmatprep.subr.mxu0 0.0
  %806 = vmatpush1.msra.mxu0 0.0
  %807 = vmatprep.subr.mxu0 0.0
  %808 = vmatpush1.msra.mxu0 0.0
  %809 = vmatprep.subr.mxu0 0.0
  %810 = vmatpush1.msra.mxu0 0.0
  %811 = vmatprep.subr.mxu0 0.0
  %812 = vmatpush1.msra.mxu0 0.0
  %813 = vmatprep.subr.mxu0 0.0
  %814 = vmatpush1.msra.mxu0 0.0
  %815 = vmatprep.subr.mxu0 0.0
  %816 = vmatpush1.msra.mxu0 0.0
  %817 = vmatprep.subr.mxu0 0.0
  %818 = vmatpush1.msra.mxu0 0.0
  %819 = vmatprep.subr.mxu0 0.0
  %820 = vmatpush1.msra.mxu0 0.0
  %821 = vmatprep.subr.mxu0 0.0
  %822 = vmatpush1.msra.mxu0 0.0
  %823 = vmatprep.subr.mxu0 0.0
  %824 = vmatpush1.msra.mxu0 0.0
  %825 = vmatprep.subr.mxu0 0.0
  %826 = vmatpush1.msra.mxu0 0.0
  %827 = vmatprep.subr.mxu0 0.0
  %828 = vmatpush1.msra.mxu0 0.0
  %829 = vmatprep.subr.mxu0 0.0
  %830 = vmatpush1.msra.mxu0 0.0
  %831 = vmatprep.subr.mxu0 0.0
  %832 = vmatpush1.msra.mxu0 0.0
  %833 = vmatprep.subr.mxu0 0.0
  %834 = vmatpush1.msra.mxu0 0.0
  %835 = vmatprep.subr.mxu0 0.0
  %836 = vmatpush1.msra.mxu0 0.0
  %837 = vmatprep.subr.mxu0 0.0
  %838 = vmatpush1.msra.mxu0 0.0
  %839 = vmatprep.subr.mxu0 0.0
  %840 = vmatpush1.msra.mxu0 0.0
  %841 = vmatprep.subr.mxu0 0.0
  %842 = vmatpush1.msra.mxu0 0.0
  %843 = vmatprep.subr.mxu0 0.0
  %844 = vmatpush1.msra.mxu0 0.0
  %845 = vmatprep.mubr.f32.mxu0 0.0
  %846 = vmatmul.mubr.f32.gmra.mrb[0].mxu0 %v779
  %v847 = vpop.f32.mrb[0].mxu0
  %v848 = vadd.f32 0.0, %v847
  %v849 = vpop.f32.mrb[0].mxu0
  %850 = vdwg.mxu0
  %851 = vrot.lane.b32.xlu0 %v265, 56
  %v852 = vpop.permute.xlu0 %851
  %v855 = vsel %vm271, %v774, 0
  %857 = vmatprep.subr.mxu0 0.0
  %858 = vmatpush1.msra.mxu0 %v852
  %859 = vmatprep.subr.mxu0 0.0
  %860 = vmatpush1.msra.mxu0 0.0
  %861 = vmatprep.subr.mxu0 0.0
  %862 = vmatpush1.msra.mxu0 0.0
  %863 = vmatprep.subr.mxu0 0.0
  %864 = vmatpush1.msra.mxu0 0.0
  %865 = vmatprep.subr.mxu0 0.0
  %866 = vmatpush1.msra.mxu0 0.0
  %867 = vmatprep.subr.mxu0 0.0
  %868 = vmatpush1.msra.mxu0 0.0
  %869 = vmatprep.subr.mxu0 0.0
  %870 = vmatpush1.msra.mxu0 0.0
  %871 = vmatprep.subr.mxu0 0.0
  %872 = vmatpush1.msra.mxu0 0.0
  %873 = vmatprep.subr.mxu0 0.0
  %874 = vmatpush1.msra.mxu0 0.0
  %875 = vmatprep.subr.mxu0 0.0
  %876 = vmatpush1.msra.mxu0 0.0
  %877 = vmatprep.subr.mxu0 0.0
  %878 = vmatpush1.msra.mxu0 0.0
  %879 = vmatprep.subr.mxu0 0.0
  %880 = vmatpush1.msra.mxu0 0.0
  %881 = vmatprep.subr.mxu0 0.0
  %882 = vmatpush1.msra.mxu0 0.0
  %883 = vmatprep.subr.mxu0 0.0
  %884 = vmatpush1.msra.mxu0 0.0
  %885 = vmatprep.subr.mxu0 0.0
  %886 = vmatpush1.msra.mxu0 0.0
  %887 = vmatprep.subr.mxu0 0.0
  %888 = vmatpush1.msra.mxu0 0.0
  %889 = vmatprep.subr.mxu0 0.0
  %890 = vmatpush1.msra.mxu0 0.0
  %891 = vmatprep.subr.mxu0 0.0
  %892 = vmatpush1.msra.mxu0 0.0
  %893 = vmatprep.subr.mxu0 0.0
  %894 = vmatpush1.msra.mxu0 0.0
  %895 = vmatprep.subr.mxu0 0.0
  %896 = vmatpush1.msra.mxu0 0.0
  %897 = vmatprep.subr.mxu0 0.0
  %898 = vmatpush1.msra.mxu0 0.0
  %899 = vmatprep.subr.mxu0 0.0
  %900 = vmatpush1.msra.mxu0 0.0
  %901 = vmatprep.subr.mxu0 0.0
  %902 = vmatpush1.msra.mxu0 0.0
  %903 = vmatprep.subr.mxu0 0.0
  %904 = vmatpush1.msra.mxu0 0.0
  %905 = vmatprep.subr.mxu0 0.0
  %906 = vmatpush1.msra.mxu0 0.0
  %907 = vmatprep.subr.mxu0 0.0
  %908 = vmatpush1.msra.mxu0 0.0
  %909 = vmatprep.subr.mxu0 0.0
  %910 = vmatpush1.msra.mxu0 0.0
  %911 = vmatprep.subr.mxu0 0.0
  %912 = vmatpush1.msra.mxu0 0.0
  %913 = vmatprep.subr.mxu0 0.0
  %914 = vmatpush1.msra.mxu0 0.0
  %915 = vmatprep.subr.mxu0 0.0
  %916 = vmatpush1.msra.mxu0 0.0
  %917 = vmatprep.subr.mxu0 0.0
  %918 = vmatpush1.msra.mxu0 0.0
  %919 = vmatprep.subr.mxu0 0.0
  %920 = vmatpush1.msra.mxu0 0.0
  %921 = vmatprep.mubr.f32.mxu0 0.0
  %922 = vmatmul.mubr.f32.gmra.mrb[0].mxu0 %v855
  %v923 = vpop.f32.mrb[0].mxu0
  %v924 = vadd.f32 0.0, %v923
  %v925 = vpop.f32.mrb[0].mxu0
  %926 = vdwg.mxu0
  %927 = vrot.lane.b32.xlu0 %v260, 112
  %v928 = vpop.permute.xlu0 %927
  %929 = vrot.lane.b32.xlu0 %v260, 80
  %v930 = vpop.permute.xlu0 %929
  %v931 = vsel %vm271, %v928, 0
  %v933 = vsel %vm271, %v930, 0
  %935 = vmatprep.subr.mxu0 0.0
  %936 = vmatpush1.xpose.msra.mxu0 %v933
  %937 = vmatprep.subr.mxu0 0.0
  %938 = vmatpush1.xpose.msra.mxu0 0.0
  %939 = vmatprep.subr.mxu0 0.0
  %940 = vmatpush1.xpose.msra.mxu0 0.0
  %941 = vmatprep.subr.mxu0 0.0
  %942 = vmatpush1.xpose.msra.mxu0 0.0
  %943 = vmatprep.subr.mxu0 0.0
  %944 = vmatpush1.xpose.msra.mxu0 0.0
  %945 = vmatprep.subr.mxu0 0.0
  %946 = vmatpush1.xpose.msra.mxu0 0.0
  %947 = vmatprep.subr.mxu0 0.0
  %948 = vmatpush1.xpose.msra.mxu0 0.0
  %949 = vmatprep.subr.mxu0 0.0
  %950 = vmatpush1.xpose.msra.mxu0 0.0
  %951 = vmatprep.subr.mxu0 0.0
  %952 = vmatpush1.xpose.msra.mxu0 0.0
  %953 = vmatprep.subr.mxu0 0.0
  %954 = vmatpush1.xpose.msra.mxu0 0.0
  %955 = vmatprep.subr.mxu0 0.0
  %956 = vmatpush1.xpose.msra.mxu0 0.0
  %957 = vmatprep.subr.mxu0 0.0
  %958 = vmatpush1.xpose.msra.mxu0 0.0
  %959 = vmatprep.subr.mxu0 0.0
  %960 = vmatpush1.xpose.msra.mxu0 0.0
  %961 = vmatprep.subr.mxu0 0.0
  %962 = vmatpush1.xpose.msra.mxu0 0.0
  %963 = vmatprep.subr.mxu0 0.0
  %964 = vmatpush1.xpose.msra.mxu0 0.0
  %965 = vmatprep.subr.mxu0 0.0
  %966 = vmatpush1.xpose.msra.mxu0 0.0
  %967 = vmatprep.subr.mxu0 0.0
  %968 = vmatpush1.xpose.msra.mxu0 0.0
  %969 = vmatprep.subr.mxu0 0.0
  %970 = vmatpush1.xpose.msra.mxu0 0.0
  %971 = vmatprep.subr.mxu0 0.0
  %972 = vmatpush1.xpose.msra.mxu0 0.0
  %973 = vmatprep.subr.mxu0 0.0
  %974 = vmatpush1.xpose.msra.mxu0 0.0
  %975 = vmatprep.subr.mxu0 0.0
  %976 = vmatpush1.xpose.msra.mxu0 0.0
  %977 = vmatprep.subr.mxu0 0.0
  %978 = vmatpush1.xpose.msra.mxu0 0.0
  %979 = vmatprep.subr.mxu0 0.0
  %980 = vmatpush1.xpose.msra.mxu0 0.0
  %981 = vmatprep.subr.mxu0 0.0
  %982 = vmatpush1.xpose.msra.mxu0 0.0
  %983 = vmatprep.subr.mxu0 0.0
  %984 = vmatpush1.xpose.msra.mxu0 0.0
  %985 = vmatprep.subr.mxu0 0.0
  %986 = vmatpush1.xpose.msra.mxu0 0.0
  %987 = vmatprep.subr.mxu0 0.0
  %988 = vmatpush1.xpose.msra.mxu0 0.0
  %989 = vmatprep.subr.mxu0 0.0
  %990 = vmatpush1.xpose.msra.mxu0 0.0
  %991 = vmatprep.subr.mxu0 0.0
  %992 = vmatpush1.xpose.msra.mxu0 0.0
  %993 = vmatprep.subr.mxu0 0.0
  %994 = vmatpush1.xpose.msra.mxu0 0.0
  %995 = vmatprep.subr.mxu0 0.0
  %996 = vmatpush1.xpose.msra.mxu0 0.0
  %997 = vmatprep.subr.mxu0 0.0
  %998 = vmatpush1.xpose.msra.mxu0 0.0
  %999 = vmatprep.mubr.f32.mxu0 0.0
  %1000 = vmatmul.mubr.f32.gmra.mrb[0].mxu0 %v931
  %v1001 = vpop.f32.mrb[0].mxu0
  %v1002 = vadd.f32 %v174, %v1001
  %v1003 = vpop.f32.mrb[0].mxu0
  %1004 = vdwg.mxu0
  %1005 = vrot.lane.b32.xlu0 %v265, 112
  %v1006 = vpop.permute.xlu0 %1005
  %1007 = vrot.lane.b32.xlu0 %v265, 80
  %v1008 = vpop.permute.xlu0 %1007
  %v1009 = vsel %vm271, %v1006, 0
  %v1011 = vsel %vm271, %v1008, 0
  %1013 = vmatprep.subr.mxu0 0.0
  %1014 = vmatpush1.xpose.msra.mxu0 %v1011
  %1015 = vmatprep.subr.mxu0 0.0
  %1016 = vmatpush1.xpose.msra.mxu0 0.0
  %1017 = vmatprep.subr.mxu0 0.0
  %1018 = vmatpush1.xpose.msra.mxu0 0.0
  %1019 = vmatprep.subr.mxu0 0.0
  %1020 = vmatpush1.xpose.msra.mxu0 0.0
  %1021 = vmatprep.subr.mxu0 0.0
  %1022 = vmatpush1.xpose.msra.mxu0 0.0
  %1023 = vmatprep.subr.mxu0 0.0
  %1024 = vmatpush1.xpose.msra.mxu0 0.0
  %1025 = vmatprep.subr.mxu0 0.0
  %1026 = vmatpush1.xpose.msra.mxu0 0.0
  %1027 = vmatprep.subr.mxu0 0.0
  %1028 = vmatpush1.xpose.msra.mxu0 0.0
  %1029 = vmatprep.subr.mxu0 0.0
  %1030 = vmatpush1.xpose.msra.mxu0 0.0
  %1031 = vmatprep.subr.mxu0 0.0
  %1032 = vmatpush1.xpose.msra.mxu0 0.0
  %1033 = vmatprep.subr.mxu0 0.0
  %1034 = vmatpush1.xpose.msra.mxu0 0.0
  %1035 = vmatprep.subr.mxu0 0.0
  %1036 = vmatpush1.xpose.msra.mxu0 0.0
  %1037 = vmatprep.subr.mxu0 0.0
  %1038 = vmatpush1.xpose.msra.mxu0 0.0
  %1039 = vmatprep.subr.mxu0 0.0
  %1040 = vmatpush1.xpose.msra.mxu0 0.0
  %1041 = vmatprep.subr.mxu0 0.0
  %1042 = vmatpush1.xpose.msra.mxu0 0.0
  %1043 = vmatprep.subr.mxu0 0.0
  %1044 = vmatpush1.xpose.msra.mxu0 0.0
  %1045 = vmatprep.subr.mxu0 0.0
  %1046 = vmatpush1.xpose.msra.mxu0 0.0
  %1047 = vmatprep.subr.mxu0 0.0
  %1048 = vmatpush1.xpose.msra.mxu0 0.0
  %1049 = vmatprep.subr.mxu0 0.0
  %1050 = vmatpush1.xpose.msra.mxu0 0.0
  %1051 = vmatprep.subr.mxu0 0.0
  %1052 = vmatpush1.xpose.msra.mxu0 0.0
  %1053 = vmatprep.subr.mxu0 0.0
  %1054 = vmatpush1.xpose.msra.mxu0 0.0
  %1055 = vmatprep.subr.mxu0 0.0
  %1056 = vmatpush1.xpose.msra.mxu0 0.0
  %1057 = vmatprep.subr.mxu0 0.0
  %1058 = vmatpush1.xpose.msra.mxu0 0.0
  %1059 = vmatprep.subr.mxu0 0.0
  %1060 = vmatpush1.xpose.msra.mxu0 0.0
  %1061 = vmatprep.subr.mxu0 0.0
  %1062 = vmatpush1.xpose.msra.mxu0 0.0
  %1063 = vmatprep.subr.mxu0 0.0
  %1064 = vmatpush1.xpose.msra.mxu0 0.0
  %1065 = vmatprep.subr.mxu0 0.0
  %1066 = vmatpush1.xpose.msra.mxu0 0.0
  %1067 = vmatprep.subr.mxu0 0.0
  %1068 = vmatpush1.xpose.msra.mxu0 0.0
  %1069 = vmatprep.subr.mxu0 0.0
  %1070 = vmatpush1.xpose.msra.mxu0 0.0
  %1071 = vmatprep.subr.mxu0 0.0
  %1072 = vmatpush1.xpose.msra.mxu0 0.0
  %1073 = vmatprep.subr.mxu0 0.0
  %1074 = vmatpush1.xpose.msra.mxu0 0.0
  %1075 = vmatprep.subr.mxu0 0.0
  %1076 = vmatpush1.xpose.msra.mxu0 0.0
  %1077 = vmatprep.mubr.f32.mxu0 0.0
  %1078 = vmatmul.mubr.f32.gmra.mrb[0].mxu0 %v1009
  %v1079 = vpop.f32.mrb[0].mxu0
  %v1080 = vadd.f32 %v174, %v1079
  %v1081 = vpop.f32.mrb[0].mxu0
  %1082 = vdwg.mxu0
  %v1083 = vsel %vm271, %v1002, -inf
  %1084 = vmax.xlane.f32.xlu0 %v1083
  %v1085 = vpop.xlane.xlu0 %1084
  %v1086 = vsel %vm271, %v1080, -inf
  %1087 = vmax.xlane.f32.xlu0 %v1086
  %v1088 = vpop.xlane.xlu0 %1087
  %v1089 = vsub.f32 %v1002, %v1085
  %v1090 = vsub.f32 %v1080, %v1088
  %v1091 = vmul.f32 %v1089, 1.442695
  %v1092 = vpow.pop %v1091
  %v1093 = vmul.f32 %v1090, 1.442695
  %v1094 = vpow.pop %v1093
  %v1095 = vsel %vm271, %v1092, 0.0
  %1096 = vadd.xlane.f32.xlu0 %v1095
  %v1097 = vpop.xlane.xlu0 %1096
  %v1098 = vsel %vm271, %v1094, 0.0
  %1099 = vadd.xlane.f32.xlu0 %v1098
  %v1100 = vpop.xlane.xlu0 %1099
  %v1101 = vrcp.pop %v1097
  %v1102 = vmul.f32 %v1092, %v1101
  %v1103 = vrcp.pop %v1100
  %v1104 = vmul.f32 %v1094, %v1103
  %1105 = vrot.lane.b32.xlu0 %v260, 48
  %v1106 = vpop.permute.xlu0 %1105
  %v1109 = vsel %vm271, %v1102, 0
  %1111 = vmatprep.subr.mxu0 0.0
  %1112 = vmatpush1.msra.mxu0 %v1106
  %1113 = vmatprep.subr.mxu0 0.0
  %1114 = vmatpush1.msra.mxu0 0.0
  %1115 = vmatprep.subr.mxu0 0.0
  %1116 = vmatpush1.msra.mxu0 0.0
  %1117 = vmatprep.subr.mxu0 0.0
  %1118 = vmatpush1.msra.mxu0 0.0
  %1119 = vmatprep.subr.mxu0 0.0
  %1120 = vmatpush1.msra.mxu0 0.0
  %1121 = vmatprep.subr.mxu0 0.0
  %1122 = vmatpush1.msra.mxu0 0.0
  %1123 = vmatprep.subr.mxu0 0.0
  %1124 = vmatpush1.msra.mxu0 0.0
  %1125 = vmatprep.subr.mxu0 0.0
  %1126 = vmatpush1.msra.mxu0 0.0
  %1127 = vmatprep.subr.mxu0 0.0
  %1128 = vmatpush1.msra.mxu0 0.0
  %1129 = vmatprep.subr.mxu0 0.0
  %1130 = vmatpush1.msra.mxu0 0.0
  %1131 = vmatprep.subr.mxu0 0.0
  %1132 = vmatpush1.msra.mxu0 0.0
  %1133 = vmatprep.subr.mxu0 0.0
  %1134 = vmatpush1.msra.mxu0 0.0
  %1135 = vmatprep.subr.mxu0 0.0
  %1136 = vmatpush1.msra.mxu0 0.0
  %1137 = vmatprep.subr.mxu0 0.0
  %1138 = vmatpush1.msra.mxu0 0.0
  %1139 = vmatprep.subr.mxu0 0.0
  %1140 = vmatpush1.msra.mxu0 0.0
  %1141 = vmatprep.subr.mxu0 0.0
  %1142 = vmatpush1.msra.mxu0 0.0
  %1143 = vmatprep.subr.mxu0 0.0
  %1144 = vmatpush1.msra.mxu0 0.0
  %1145 = vmatprep.subr.mxu0 0.0
  %1146 = vmatpush1.msra.mxu0 0.0
  %1147 = vmatprep.subr.mxu0 0.0
  %1148 = vmatpush1.msra.mxu0 0.0
  %1149 = vmatprep.subr.mxu0 0.0
  %1150 = vmatpush1.msra.mxu0 0.0
  %1151 = vmatprep.subr.mxu0 0.0
  %1152 = vmatpush1.msra.mxu0 0.0
  %1153 = vmatprep.subr.mxu0 0.0
  %1154 = vmatpush1.msra.mxu0 0.0
  %1155 = vmatprep.subr.mxu0 0.0
  %1156 = vmatpush1.msra.mxu0 0.0
  %1157 = vmatprep.subr.mxu0 0.0
  %1158 = vmatpush1.msra.mxu0 0.0
  %1159 = vmatprep.subr.mxu0 0.0
  %1160 = vmatpush1.msra.mxu0 0.0
  %1161 = vmatprep.subr.mxu0 0.0
  %1162 = vmatpush1.msra.mxu0 0.0
  %1163 = vmatprep.subr.mxu0 0.0
  %1164 = vmatpush1.msra.mxu0 0.0
  %1165 = vmatprep.subr.mxu0 0.0
  %1166 = vmatpush1.msra.mxu0 0.0
  %1167 = vmatprep.subr.mxu0 0.0
  %1168 = vmatpush1.msra.mxu0 0.0
  %1169 = vmatprep.subr.mxu0 0.0
  %1170 = vmatpush1.msra.mxu0 0.0
  %1171 = vmatprep.subr.mxu0 0.0
  %1172 = vmatpush1.msra.mxu0 0.0
  %1173 = vmatprep.subr.mxu0 0.0
  %1174 = vmatpush1.msra.mxu0 0.0
  %1175 = vmatprep.mubr.f32.mxu0 0.0
  %1176 = vmatmul.mubr.f32.gmra.mrb[0].mxu0 %v1109
  %v1177 = vpop.f32.mrb[0].mxu0
  %v1178 = vadd.f32 0.0, %v1177
  %v1179 = vpop.f32.mrb[0].mxu0
  %1180 = vdwg.mxu0
  %1181 = vrot.lane.b32.xlu0 %v265, 48
  %v1182 = vpop.permute.xlu0 %1181
  %v1185 = vsel %vm271, %v1104, 0
  %1187 = vmatprep.subr.mxu0 0.0
  %1188 = vmatpush1.msra.mxu0 %v1182
  %1189 = vmatprep.subr.mxu0 0.0
  %1190 = vmatpush1.msra.mxu0 0.0
  %1191 = vmatprep.subr.mxu0 0.0
  %1192 = vmatpush1.msra.mxu0 0.0
  %1193 = vmatprep.subr.mxu0 0.0
  %1194 = vmatpush1.msra.mxu0 0.0
  %1195 = vmatprep.subr.mxu0 0.0
  %1196 = vmatpush1.msra.mxu0 0.0
  %1197 = vmatprep.subr.mxu0 0.0
  %1198 = vmatpush1.msra.mxu0 0.0
  %1199 = vmatprep.subr.mxu0 0.0
  %1200 = vmatpush1.msra.mxu0 0.0
  %1201 = vmatprep.subr.mxu0 0.0
  %1202 = vmatpush1.msra.mxu0 0.0
  %1203 = vmatprep.subr.mxu0 0.0
  %1204 = vmatpush1.msra.mxu0 0.0
  %1205 = vmatprep.subr.mxu0 0.0
  %1206 = vmatpush1.msra.mxu0 0.0
  %1207 = vmatprep.subr.mxu0 0.0
  %1208 = vmatpush1.msra.mxu0 0.0
  %1209 = vmatprep.subr.mxu0 0.0
  %1210 = vmatpush1.msra.mxu0 0.0
  %1211 = vmatprep.subr.mxu0 0.0
  %1212 = vmatpush1.msra.mxu0 0.0
  %1213 = vmatprep.subr.mxu0 0.0
  %1214 = vmatpush1.msra.mxu0 0.0
  %1215 = vmatprep.subr.mxu0 0.0
  %1216 = vmatpush1.msra.mxu0 0.0
  %1217 = vmatprep.subr.mxu0 0.0
  %1218 = vmatpush1.msra.mxu0 0.0
  %1219 = vmatprep.subr.mxu0 0.0
  %1220 = vmatpush1.msra.mxu0 0.0
  %1221 = vmatprep.subr.mxu0 0.0
  %1222 = vmatpush1.msra.mxu0 0.0
  %1223 = vmatprep.subr.mxu0 0.0
  %1224 = vmatpush1.msra.mxu0 0.0
  %1225 = vmatprep.subr.mxu0 0.0
  %1226 = vmatpush1.msra.mxu0 0.0
  %1227 = vmatprep.subr.mxu0 0.0
  %1228 = vmatpush1.msra.mxu0 0.0
  %1229 = vmatprep.subr.mxu0 0.0
  %1230 = vmatpush1.msra.mxu0 0.0
  %1231 = vmatprep.subr.mxu0 0.0
  %1232 = vmatpush1.msra.mxu0 0.0
  %1233 = vmatprep.subr.mxu0 0.0
  %1234 = vmatpush1.msra.mxu0 0.0
  %1235 = vmatprep.subr.mxu0 0.0
  %1236 = vmatpush1.msra.mxu0 0.0
  %1237 = vmatprep.subr.mxu0 0.0
  %1238 = vmatpush1.msra.mxu0 0.0
  %1239 = vmatprep.subr.mxu0 0.0
  %1240 = vmatpush1.msra.mxu0 0.0
  %1241 = vmatprep.subr.mxu0 0.0
  %1242 = vmatpush1.msra.mxu0 0.0
  %1243 = vmatprep.subr.mxu0 0.0
  %1244 = vmatpush1.msra.mxu0 0.0
  %1245 = vmatprep.subr.mxu0 0.0
  %1246 = vmatpush1.msra.mxu0 0.0
  %1247 = vmatprep.subr.mxu0 0.0
  %1248 = vmatpush1.msra.mxu0 0.0
  %1249 = vmatprep.subr.mxu0 0.0
  %1250 = vmatpush1.msra.mxu0 0.0
  %1251 = vmatprep.mubr.f32.mxu0 0.0
  %1252 = vmatmul.mubr.f32.gmra.mrb[0].mxu0 %v1185
  %v1253 = vpop.f32.mrb[0].mxu0
  %v1254 = vadd.f32 0.0, %v1253
  %v1255 = vpop.f32.mrb[0].mxu0
  %1256 = vdwg.mxu0
  %1257 = vrot.lane.b32.xlu0 %v260, 104
  %v1258 = vpop.permute.xlu0 %1257
  %1259 = vrot.lane.b32.xlu0 %v260, 72
  %v1260 = vpop.permute.xlu0 %1259
  %v1261 = vsel %vm271, %v1258, 0
  %v1263 = vsel %vm271, %v1260, 0
  %1265 = vmatprep.subr.mxu0 0.0
  %1266 = vmatpush1.xpose.msra.mxu0 %v1263
  %1267 = vmatprep.subr.mxu0 0.0
  %1268 = vmatpush1.xpose.msra.mxu0 0.0
  %1269 = vmatprep.subr.mxu0 0.0
  %1270 = vmatpush1.xpose.msra.mxu0 0.0
  %1271 = vmatprep.subr.mxu0 0.0
  %1272 = vmatpush1.xpose.msra.mxu0 0.0
  %1273 = vmatprep.subr.mxu0 0.0
  %1274 = vmatpush1.xpose.msra.mxu0 0.0
  %1275 = vmatprep.subr.mxu0 0.0
  %1276 = vmatpush1.xpose.msra.mxu0 0.0
  %1277 = vmatprep.subr.mxu0 0.0
  %1278 = vmatpush1.xpose.msra.mxu0 0.0
  %1279 = vmatprep.subr.mxu0 0.0
  %1280 = vmatpush1.xpose.msra.mxu0 0.0
  %1281 = vmatprep.subr.mxu0 0.0
  %1282 = vmatpush1.xpose.msra.mxu0 0.0
  %1283 = vmatprep.subr.mxu0 0.0
  %1284 = vmatpush1.xpose.msra.mxu0 0.0
  %1285 = vmatprep.subr.mxu0 0.0
  %1286 = vmatpush1.xpose.msra.mxu0 0.0
  %1287 = vmatprep.subr.mxu0 0.0
  %1288 = vmatpush1.xpose.msra.mxu0 0.0
  %1289 = vmatprep.subr.mxu0 0.0
  %1290 = vmatpush1.xpose.msra.mxu0 0.0
  %1291 = vmatprep.subr.mxu0 0.0
  %1292 = vmatpush1.xpose.msra.mxu0 0.0
  %1293 = vmatprep.subr.mxu0 0.0
  %1294 = vmatpush1.xpose.msra.mxu0 0.0
  %1295 = vmatprep.subr.mxu0 0.0
  %1296 = vmatpush1.xpose.msra.mxu0 0.0
  %1297 = vmatprep.subr.mxu0 0.0
  %1298 = vmatpush1.xpose.msra.mxu0 0.0
  %1299 = vmatprep.subr.mxu0 0.0
  %1300 = vmatpush1.xpose.msra.mxu0 0.0
  %1301 = vmatprep.subr.mxu0 0.0
  %1302 = vmatpush1.xpose.msra.mxu0 0.0
  %1303 = vmatprep.subr.mxu0 0.0
  %1304 = vmatpush1.xpose.msra.mxu0 0.0
  %1305 = vmatprep.subr.mxu0 0.0
  %1306 = vmatpush1.xpose.msra.mxu0 0.0
  %1307 = vmatprep.subr.mxu0 0.0
  %1308 = vmatpush1.xpose.msra.mxu0 0.0
  %1309 = vmatprep.subr.mxu0 0.0
  %1310 = vmatpush1.xpose.msra.mxu0 0.0
  %1311 = vmatprep.subr.mxu0 0.0
  %1312 = vmatpush1.xpose.msra.mxu0 0.0
  %1313 = vmatprep.subr.mxu0 0.0
  %1314 = vmatpush1.xpose.msra.mxu0 0.0
  %1315 = vmatprep.subr.mxu0 0.0
  %1316 = vmatpush1.xpose.msra.mxu0 0.0
  %1317 = vmatprep.subr.mxu0 0.0
  %1318 = vmatpush1.xpose.msra.mxu0 0.0
  %1319 = vmatprep.subr.mxu0 0.0
  %1320 = vmatpush1.xpose.msra.mxu0 0.0
  %1321 = vmatprep.subr.mxu0 0.0
  %1322 = vmatpush1.xpose.msra.mxu0 0.0
  %1323 = vmatprep.subr.mxu0 0.0
  %1324 = vmatpush1.xpose.msra.mxu0 0.0
  %1325 = vmatprep.subr.mxu0 0.0
  %1326 = vmatpush1.xpose.msra.mxu0 0.0
  %1327 = vmatprep.subr.mxu0 0.0
  %1328 = vmatpush1.xpose.msra.mxu0 0.0
  %1329 = vmatprep.mubr.f32.mxu0 0.0
  %1330 = vmatmul.mubr.f32.gmra.mrb[0].mxu0 %v1261
  %v1331 = vpop.f32.mrb[0].mxu0
  %v1332 = vadd.f32 %v174, %v1331
  %v1333 = vpop.f32.mrb[0].mxu0
  %1334 = vdwg.mxu0
  %1335 = vrot.lane.b32.xlu0 %v265, 104
  %v1336 = vpop.permute.xlu0 %1335
  %1337 = vrot.lane.b32.xlu0 %v265, 72
  %v1338 = vpop.permute.xlu0 %1337
  %v1339 = vsel %vm271, %v1336, 0
  %v1341 = vsel %vm271, %v1338, 0
  %1343 = vmatprep.subr.mxu0 0.0
  %1344 = vmatpush1.xpose.msra.mxu0 %v1341
  %1345 = vmatprep.subr.mxu0 0.0
  %1346 = vmatpush1.xpose.msra.mxu0 0.0
  %1347 = vmatprep.subr.mxu0 0.0
  %1348 = vmatpush1.xpose.msra.mxu0 0.0
  %1349 = vmatprep.subr.mxu0 0.0
  %1350 = vmatpush1.xpose.msra.mxu0 0.0
  %1351 = vmatprep.subr.mxu0 0.0
  %1352 = vmatpush1.xpose.msra.mxu0 0.0
  %1353 = vmatprep.subr.mxu0 0.0
  %1354 = vmatpush1.xpose.msra.mxu0 0.0
  %1355 = vmatprep.subr.mxu0 0.0
  %1356 = vmatpush1.xpose.msra.mxu0 0.0
  %1357 = vmatprep.subr.mxu0 0.0
  %1358 = vmatpush1.xpose.msra.mxu0 0.0
  %1359 = vmatprep.subr.mxu0 0.0
  %1360 = vmatpush1.xpose.msra.mxu0 0.0
  %1361 = vmatprep.subr.mxu0 0.0
  %1362 = vmatpush1.xpose.msra.mxu0 0.0
  %1363 = vmatprep.subr.mxu0 0.0
  %1364 = vmatpush1.xpose.msra.mxu0 0.0
  %1365 = vmatprep.subr.mxu0 0.0
  %1366 = vmatpush1.xpose.msra.mxu0 0.0
  %1367 = vmatprep.subr.mxu0 0.0
  %1368 = vmatpush1.xpose.msra.mxu0 0.0
  %1369 = vmatprep.subr.mxu0 0.0
  %1370 = vmatpush1.xpose.msra.mxu0 0.0
  %1371 = vmatprep.subr.mxu0 0.0
  %1372 = vmatpush1.xpose.msra.mxu0 0.0
  %1373 = vmatprep.subr.mxu0 0.0
  %1374 = vmatpush1.xpose.msra.mxu0 0.0
  %1375 = vmatprep.subr.mxu0 0.0
  %1376 = vmatpush1.xpose.msra.mxu0 0.0
  %1377 = vmatprep.subr.mxu0 0.0
  %1378 = vmatpush1.xpose.msra.mxu0 0.0
  %1379 = vmatprep.subr.mxu0 0.0
  %1380 = vmatpush1.xpose.msra.mxu0 0.0
  %1381 = vmatprep.subr.mxu0 0.0
  %1382 = vmatpush1.xpose.msra.mxu0 0.0
  %1383 = vmatprep.subr.mxu0 0.0
  %1384 = vmatpush1.xpose.msra.mxu0 0.0
  %1385 = vmatprep.subr.mxu0 0.0
  %1386 = vmatpush1.xpose.msra.mxu0 0.0
  %1387 = vmatprep.subr.mxu0 0.0
  %1388 = vmatpush1.xpose.msra.mxu0 0.0
  %1389 = vmatprep.subr.mxu0 0.0
  %1390 = vmatpush1.xpose.msra.mxu0 0.0
  %1391 = vmatprep.subr.mxu0 0.0
  %1392 = vmatpush1.xpose.msra.mxu0 0.0
  %1393 = vmatprep.subr.mxu0 0.0
  %1394 = vmatpush1.xpose.msra.mxu0 0.0
  %1395 = vmatprep.subr.mxu0 0.0
  %1396 = vmatpush1.xpose.msra.mxu0 0.0
  %1397 = vmatprep.subr.mxu0 0.0
  %1398 = vmatpush1.xpose.msra.mxu0 0.0
  %1399 = vmatprep.subr.mxu0 0.0
  %1400 = vmatpush1.xpose.msra.mxu0 0.0
  %1401 = vmatprep.subr.mxu0 0.0
  %1402 = vmatpush1.xpose.msra.mxu0 0.0
  %1403 = vmatprep.subr.mxu0 0.0
  %1404 = vmatpush1.xpose.msra.mxu0 0.0
  %1405 = vmatprep.subr.mxu0 0.0
  %1406 = vmatpush1.xpose.msra.mxu0 0.0
  %1407 = vmatprep.mubr.f32.mxu0 0.0
  %1408 = vmatmul.mubr.f32.gmra.mrb[0].mxu0 %v1339
  %v1409 = vpop.f32.mrb[0].mxu0
  %v1410 = vadd.f32 %v174, %v1409
  %v1411 = vpop.f32.mrb[0].mxu0
  %1412 = vdwg.mxu0
  %v1413 = vsel %vm271, %v1332, -inf
  %1414 = vmax.xlane.f32.xlu0 %v1413
  %v1415 = vpop.xlane.xlu0 %1414
  %v1416 = vsel %vm271, %v1410, -inf
  %1417 = vmax.xlane.f32.xlu0 %v1416
  %v1418 = vpop.xlane.xlu0 %1417
  %v1419 = vsub.f32 %v1332, %v1415
  %v1420 = vsub.f32 %v1410, %v1418
  %v1421 = vmul.f32 %v1419, 1.442695
  %v1422 = vpow.pop %v1421
  %v1423 = vmul.f32 %v1420, 1.442695
  %v1424 = vpow.pop %v1423
  %v1425 = vsel %vm271, %v1422, 0.0
  %1426 = vadd.xlane.f32.xlu0 %v1425
  %v1427 = vpop.xlane.xlu0 %1426
  %v1428 = vsel %vm271, %v1424, 0.0
  %1429 = vadd.xlane.f32.xlu0 %v1428
  %v1430 = vpop.xlane.xlu0 %1429
  %v1431 = vrcp.pop %v1427
  %v1432 = vmul.f32 %v1422, %v1431
  %v1433 = vrcp.pop %v1430
  %v1434 = vmul.f32 %v1424, %v1433
  %1435 = vrot.lane.b32.xlu0 %v260, 40
  %v1436 = vpop.permute.xlu0 %1435
  %v1439 = vsel %vm271, %v1432, 0
  %1441 = vmatprep.subr.mxu0 0.0
  %1442 = vmatpush1.msra.mxu0 %v1436
  %1443 = vmatprep.subr.mxu0 0.0
  %1444 = vmatpush1.msra.mxu0 0.0
  %1445 = vmatprep.subr.mxu0 0.0
  %1446 = vmatpush1.msra.mxu0 0.0
  %1447 = vmatprep.subr.mxu0 0.0
  %1448 = vmatpush1.msra.mxu0 0.0
  %1449 = vmatprep.subr.mxu0 0.0
  %1450 = vmatpush1.msra.mxu0 0.0
  %1451 = vmatprep.subr.mxu0 0.0
  %1452 = vmatpush1.msra.mxu0 0.0
  %1453 = vmatprep.subr.mxu0 0.0
  %1454 = vmatpush1.msra.mxu0 0.0
  %1455 = vmatprep.subr.mxu0 0.0
  %1456 = vmatpush1.msra.mxu0 0.0
  %1457 = vmatprep.subr.mxu0 0.0
  %1458 = vmatpush1.msra.mxu0 0.0
  %1459 = vmatprep.subr.mxu0 0.0
  %1460 = vmatpush1.msra.mxu0 0.0
  %1461 = vmatprep.subr.mxu0 0.0
  %1462 = vmatpush1.msra.mxu0 0.0
  %1463 = vmatprep.subr.mxu0 0.0
  %1464 = vmatpush1.msra.mxu0 0.0
  %1465 = vmatprep.subr.mxu0 0.0
  %1466 = vmatpush1.msra.mxu0 0.0
  %1467 = vmatprep.subr.mxu0 0.0
  %1468 = vmatpush1.msra.mxu0 0.0
  %1469 = vmatprep.subr.mxu0 0.0
  %1470 = vmatpush1.msra.mxu0 0.0
  %1471 = vmatprep.subr.mxu0 0.0
  %1472 = vmatpush1.msra.mxu0 0.0
  %1473 = vmatprep.subr.mxu0 0.0
  %1474 = vmatpush1.msra.mxu0 0.0
  %1475 = vmatprep.subr.mxu0 0.0
  %1476 = vmatpush1.msra.mxu0 0.0
  %1477 = vmatprep.subr.mxu0 0.0
  %1478 = vmatpush1.msra.mxu0 0.0
  %1479 = vmatprep.subr.mxu0 0.0
  %1480 = vmatpush1.msra.mxu0 0.0
  %1481 = vmatprep.subr.mxu0 0.0
  %1482 = vmatpush1.msra.mxu0 0.0
  %1483 = vmatprep.subr.mxu0 0.0
  %1484 = vmatpush1.msra.mxu0 0.0
  %1485 = vmatprep.subr.mxu0 0.0
  %1486 = vmatpush1.msra.mxu0 0.0
  %1487 = vmatprep.subr.mxu0 0.0
  %1488 = vmatpush1.msra.mxu0 0.0
  %1489 = vmatprep.subr.mxu0 0.0
  %1490 = vmatpush1.msra.mxu0 0.0
  %1491 = vmatprep.subr.mxu0 0.0
  %1492 = vmatpush1.msra.mxu0 0.0
  %1493 = vmatprep.subr.mxu0 0.0
  %1494 = vmatpush1.msra.mxu0 0.0
  %1495 = vmatprep.subr.mxu0 0.0
  %1496 = vmatpush1.msra.mxu0 0.0
  %1497 = vmatprep.subr.mxu0 0.0
  %1498 = vmatpush1.msra.mxu0 0.0
  %1499 = vmatprep.subr.mxu0 0.0
  %1500 = vmatpush1.msra.mxu0 0.0
  %1501 = vmatprep.subr.mxu0 0.0
  %1502 = vmatpush1.msra.mxu0 0.0
  %1503 = vmatprep.subr.mxu0 0.0
  %1504 = vmatpush1.msra.mxu0 0.0
  %1505 = vmatprep.mubr.f32.mxu0 0.0
  %1506 = vmatmul.mubr.f32.gmra.mrb[0].mxu0 %v1439
  %v1507 = vpop.f32.mrb[0].mxu0
  %v1508 = vadd.f32 0.0, %v1507
  %v1509 = vpop.f32.mrb[0].mxu0
  %1510 = vdwg.mxu0
  %1511 = vrot.lane.b32.xlu0 %v265, 40
  %v1512 = vpop.permute.xlu0 %1511
  %v1515 = vsel %vm271, %v1434, 0
  %1517 = vmatprep.subr.mxu0 0.0
  %1518 = vmatpush1.msra.mxu0 %v1512
  %1519 = vmatprep.subr.mxu0 0.0
  %1520 = vmatpush1.msra.mxu0 0.0
  %1521 = vmatprep.subr.mxu0 0.0
  %1522 = vmatpush1.msra.mxu0 0.0
  %1523 = vmatprep.subr.mxu0 0.0
  %1524 = vmatpush1.msra.mxu0 0.0
  %1525 = vmatprep.subr.mxu0 0.0
  %1526 = vmatpush1.msra.mxu0 0.0
  %1527 = vmatprep.subr.mxu0 0.0
  %1528 = vmatpush1.msra.mxu0 0.0
  %1529 = vmatprep.subr.mxu0 0.0
  %1530 = vmatpush1.msra.mxu0 0.0
  %1531 = vmatprep.subr.mxu0 0.0
  %1532 = vmatpush1.msra.mxu0 0.0
  %1533 = vmatprep.subr.mxu0 0.0
  %1534 = vmatpush1.msra.mxu0 0.0
  %1535 = vmatprep.subr.mxu0 0.0
  %1536 = vmatpush1.msra.mxu0 0.0
  %1537 = vmatprep.subr.mxu0 0.0
  %1538 = vmatpush1.msra.mxu0 0.0
  %1539 = vmatprep.subr.mxu0 0.0
  %1540 = vmatpush1.msra.mxu0 0.0
  %1541 = vmatprep.subr.mxu0 0.0
  %1542 = vmatpush1.msra.mxu0 0.0
  %1543 = vmatprep.subr.mxu0 0.0
  %1544 = vmatpush1.msra.mxu0 0.0
  %1545 = vmatprep.subr.mxu0 0.0
  %1546 = vmatpush1.msra.mxu0 0.0
  %1547 = vmatprep.subr.mxu0 0.0
  %1548 = vmatpush1.msra.mxu0 0.0
  %1549 = vmatprep.subr.mxu0 0.0
  %1550 = vmatpush1.msra.mxu0 0.0
  %1551 = vmatprep.subr.mxu0 0.0
  %1552 = vmatpush1.msra.mxu0 0.0
  %1553 = vmatprep.subr.mxu0 0.0
  %1554 = vmatpush1.msra.mxu0 0.0
  %1555 = vmatprep.subr.mxu0 0.0
  %1556 = vmatpush1.msra.mxu0 0.0
  %1557 = vmatprep.subr.mxu0 0.0
  %1558 = vmatpush1.msra.mxu0 0.0
  %1559 = vmatprep.subr.mxu0 0.0
  %1560 = vmatpush1.msra.mxu0 0.0
  %1561 = vmatprep.subr.mxu0 0.0
  %1562 = vmatpush1.msra.mxu0 0.0
  %1563 = vmatprep.subr.mxu0 0.0
  %1564 = vmatpush1.msra.mxu0 0.0
  %1565 = vmatprep.subr.mxu0 0.0
  %1566 = vmatpush1.msra.mxu0 0.0
  %1567 = vmatprep.subr.mxu0 0.0
  %1568 = vmatpush1.msra.mxu0 0.0
  %1569 = vmatprep.subr.mxu0 0.0
  %1570 = vmatpush1.msra.mxu0 0.0
  %1571 = vmatprep.subr.mxu0 0.0
  %1572 = vmatpush1.msra.mxu0 0.0
  %1573 = vmatprep.subr.mxu0 0.0
  %1574 = vmatpush1.msra.mxu0 0.0
  %1575 = vmatprep.subr.mxu0 0.0
  %1576 = vmatpush1.msra.mxu0 0.0
  %1577 = vmatprep.subr.mxu0 0.0
  %1578 = vmatpush1.msra.mxu0 0.0
  %1579 = vmatprep.subr.mxu0 0.0
  %1580 = vmatpush1.msra.mxu0 0.0
  %1581 = vmatprep.mubr.f32.mxu0 0.0
  %1582 = vmatmul.mubr.f32.gmra.mrb[0].mxu0 %v1515
  %v1583 = vpop.f32.mrb[0].mxu0
  %v1584 = vadd.f32 0.0, %v1583
  %v1585 = vpop.f32.mrb[0].mxu0
  %1586 = vdwg.mxu0
  %1589 = vrot.lane.b32.xlu0 %v848, 8
  %v1590 = vpop.permute.xlu0 %1589
  %1591 = vrot.lane.b32.xlu0 %v924, 8
  %v1592 = vpop.permute.xlu0 %1591
  %1597 = vrot.lane.b32.xlu0 %v1178, 16
  %v1598 = vpop.permute.xlu0 %1597
  %1599 = vrot.lane.b32.xlu0 %v1254, 16
  %v1600 = vpop.permute.xlu0 %1599
  %1605 = vrot.lane.b32.xlu0 %v1508, 24
  %v1606 = vpop.permute.xlu0 %1605
  %1607 = vrot.lane.b32.xlu0 %v1584, 24
  %v1608 = vpop.permute.xlu0 %1607
  %v1611 = vsel %vm271, %v518, %v1590
  %v1612 = vsel %vm271, %v594, %v1592
  %vm1613 = vcmask 130048
  %v1614 = vsel %vm1613, %v1611, %v1598
  %v1615 = vsel %vm1613, %v1612, %v1600
  %vm1616 = vcmask 195584
  %v1617 = vsel %vm1616, %v1614, %v1606
  %v1618 = vsel %vm1616, %v1615, %v1608
  %v1619 = vld [vmem:[%s5] sm:$0xff]
  %v1620 = vld [vmem:[%s5 + $0x8] sm:$0xff]
  %v1621 = vld [vmem:[%s5 + $0x10] sm:$0xff]
  %v1622 = vld [vmem:[%s5 + $0x18] sm:$0xff]
  %v1623 = vld [vmem:[%s6] sm:$0x1]
  %v1625 = vlaneseq
  %v1626 = vshrl.u32 %v1625, 7
  %v1627 = vsub.s32 0, %v1626
  %v1628 = vrot.slane %v1623, %v1627
  %v1631 = vsel %vm186, %v1617, 0
  %v1634 = vsel %vm186, %v1618, 0
  %1636 = vmatprep.subr.mxu0 0.0
  %1637 = vmatpush1.msra.mxu0 %v1619
  %1638 = vmatprep.subr.mxu0 0.0
  %1639 = vmatpush1.msra.mxu0 %v1620
  %1640 = vmatprep.subr.mxu0 0.0
  %1641 = vmatpush1.msra.mxu0 %v1621
  %1642 = vmatprep.subr.mxu0 0.0
  %1643 = vmatpush1.msra.mxu0 %v1622
  %1644 = vmatprep.subr.mxu0 0.0
  %1645 = vmatpush1.msra.mxu0 0.0
  %1646 = vmatprep.subr.mxu0 0.0
  %1647 = vmatpush1.msra.mxu0 0.0
  %1648 = vmatprep.subr.mxu0 0.0
  %1649 = vmatpush1.msra.mxu0 0.0
  %1650 = vmatprep.subr.mxu0 0.0
  %1651 = vmatpush1.msra.mxu0 0.0
  %1652 = vmatprep.subr.mxu0 0.0
  %1653 = vmatpush1.msra.mxu0 0.0
  %1654 = vmatprep.subr.mxu0 0.0
  %1655 = vmatpush1.msra.mxu0 0.0
  %1656 = vmatprep.subr.mxu0 0.0
  %1657 = vmatpush1.msra.mxu0 0.0
  %1658 = vmatprep.subr.mxu0 0.0
  %1659 = vmatpush1.msra.mxu0 0.0
  %1660 = vmatprep.subr.mxu0 0.0
  %1661 = vmatpush1.msra.mxu0 0.0
  %1662 = vmatprep.subr.mxu0 0.0
  %1663 = vmatpush1.msra.mxu0 0.0
  %1664 = vmatprep.subr.mxu0 0.0
  %1665 = vmatpush1.msra.mxu0 0.0
  %1666 = vmatprep.subr.mxu0 0.0
  %1667 = vmatpush1.msra.mxu0 0.0
  %1668 = vmatprep.subr.mxu0 0.0
  %1669 = vmatpush1.msra.mxu0 0.0
  %1670 = vmatprep.subr.mxu0 0.0
  %1671 = vmatpush1.msra.mxu0 0.0
  %1672 = vmatprep.subr.mxu0 0.0
  %1673 = vmatpush1.msra.mxu0 0.0
  %1674 = vmatprep.subr.mxu0 0.0
  %1675 = vmatpush1.msra.mxu0 0.0
  %1676 = vmatprep.subr.mxu0 0.0
  %1677 = vmatpush1.msra.mxu0 0.0
  %1678 = vmatprep.subr.mxu0 0.0
  %1679 = vmatpush1.msra.mxu0 0.0
  %1680 = vmatprep.subr.mxu0 0.0
  %1681 = vmatpush1.msra.mxu0 0.0
  %1682 = vmatprep.subr.mxu0 0.0
  %1683 = vmatpush1.msra.mxu0 0.0
  %1684 = vmatprep.subr.mxu0 0.0
  %1685 = vmatpush1.msra.mxu0 0.0
  %1686 = vmatprep.subr.mxu0 0.0
  %1687 = vmatpush1.msra.mxu0 0.0
  %1688 = vmatprep.subr.mxu0 0.0
  %1689 = vmatpush1.msra.mxu0 0.0
  %1690 = vmatprep.subr.mxu0 0.0
  %1691 = vmatpush1.msra.mxu0 0.0
  %1692 = vmatprep.subr.mxu0 0.0
  %1693 = vmatpush1.msra.mxu0 0.0
  %1694 = vmatprep.subr.mxu0 0.0
  %1695 = vmatpush1.msra.mxu0 0.0
  %1696 = vmatprep.subr.mxu0 0.0
  %1697 = vmatpush1.msra.mxu0 0.0
  %1698 = vmatprep.subr.mxu0 0.0
  %1699 = vmatpush1.msra.mxu0 0.0
  %1700 = vmatprep.mubr.f32.mxu0 0.0
  %1701 = vmatmul.mubr.f32.gmra.mrb[0].mxu0 %v1631
  %v1702 = vpop.f32.mrb[0].mxu0
  %v1703 = vadd.f32 %v1628, %v1702
  %v1704 = vpop.f32.mrb[0].mxu0
  %1705 = vmatprep.mubr.f32.mxu0 0.0
  %1706 = vmatmul.mubr.f32.gmra.mrb[0].mxu0 %v1634
  %v1707 = vpop.f32.mrb[0].mxu0
  %v1708 = vadd.f32 %v1628, %v1707
  %v1709 = vpop.f32.mrb[0].mxu0
  %1710 = vdwg.mxu0
  %v1711 = vadd.f32 %v169, %v1703
  %v1712 = vadd.f32 %v170, %v1708
  %v1713 = vld [vmem:[%s7] sm:$0x1]
  %v1714 = vld [vmem:[%s8] sm:$0x1]
  %v1715 = vsel %vm186, %v1711, 0.0
  %1716 = vadd.xlane.f32.xlu0 %v1715
  %v1717 = vpop.xlane.xlu0 %1716
  %v1718 = vsel %vm186, %v1712, 0.0
  %1719 = vadd.xlane.f32.xlu0 %v1718
  %v1720 = vpop.xlane.xlu0 %1719
  %v1721 = vrcp.pop 32.0
  %v1722 = vmul.f32 %v1717, %v1721
  %v1723 = vmul.f32 %v1720, %v1721
  %v1724 = vsub.f32 %v1711, %v1722
  %v1725 = vsub.f32 %v1712, %v1723
  %v1726 = vmul.f32 %v1724, %v1724
  %v1727 = vmul.f32 %v1725, %v1725
  %v1728 = vsel %vm186, %v1726, 0.0
  %1729 = vadd.xlane.f32.xlu0 %v1728
  %v1730 = vpop.xlane.xlu0 %1729
  %v1731 = vsel %vm186, %v1727, 0.0
  %1732 = vadd.xlane.f32.xlu0 %v1731
  %v1733 = vpop.xlane.xlu0 %1732
  %v1734 = vmul.f32 %v1730, %v1721
  %v1735 = vmul.f32 %v1733, %v1721
  %v1736 = vadd.f32 %v1734, 1e-05
  %v1737 = vadd.f32 %v1735, 1e-05
  %v1738 = vrsqrt.pop %v1736
  %v1739 = vrsqrt.pop %v1737
  %v1740 = vmul.f32 %v1724, %v1738
  %v1741 = vmul.f32 %v1725, %v1739
  %v1743 = vlaneseq
  %v1744 = vshrl.u32 %v1743, 7
  %v1745 = vsub.s32 0, %v1744
  %v1746 = vrot.slane %v1713, %v1745
  %v1748 = vmul.f32 %v1740, %v1746
  %v1749 = vmul.f32 %v1741, %v1746
  %v1751 = vlaneseq
  %v1752 = vshrl.u32 %v1751, 7
  %v1753 = vsub.s32 0, %v1752
  %v1754 = vrot.slane %v1714, %v1753
  %v1756 = vadd.f32 %v1748, %v1754
  %v1757 = vadd.f32 %v1749, %v1754
  %v1758 = vld [vmem:[%s9] sm:$0xff]
  %v1759 = vld [vmem:[%s9 + $0x8] sm:$0xff]
  %v1760 = vld [vmem:[%s9 + $0x10] sm:$0xff]
  %v1761 = vld [vmem:[%s9 + $0x18] sm:$0xff]
  %v1762 = vld [vmem:[%s10] sm:$0x1]
  %v1764 = vlaneseq
  %v1765 = vshrl.u32 %v1764, 7
  %v1766 = vsub.s32 0, %v1765
  %v1767 = vrot.slane %v1762, %v1766
  %v1770 = vsel %vm186, %v1756, 0
  %v1773 = vsel %vm186, %v1757, 0
  %1775 = vmatprep.subr.mxu0 0.0
  %1776 = vmatpush1.msra.mxu0 %v1758
  %1777 = vmatprep.subr.mxu0 0.0
  %1778 = vmatpush1.msra.mxu0 %v1759
  %1779 = vmatprep.subr.mxu0 0.0
  %1780 = vmatpush1.msra.mxu0 %v1760
  %1781 = vmatprep.subr.mxu0 0.0
  %1782 = vmatpush1.msra.mxu0 %v1761
  %1783 = vmatprep.subr.mxu0 0.0
  %1784 = vmatpush1.msra.mxu0 0.0
  %1785 = vmatprep.subr.mxu0 0.0
  %1786 = vmatpush1.msra.mxu0 0.0
  %1787 = vmatprep.subr.mxu0 0.0
  %1788 = vmatpush1.msra.mxu0 0.0
  %1789 = vmatprep.subr.mxu0 0.0
  %1790 = vmatpush1.msra.mxu0 0.0
  %1791 = vmatprep.subr.mxu0 0.0
  %1792 = vmatpush1.msra.mxu0 0.0
  %1793 = vmatprep.subr.mxu0 0.0
  %1794 = vmatpush1.msra.mxu0 0.0
  %1795 = vmatprep.subr.mxu0 0.0
  %1796 = vmatpush1.msra.mxu0 0.0
  %1797 = vmatprep.subr.mxu0 0.0
  %1798 = vmatpush1.msra.mxu0 0.0
  %1799 = vmatprep.subr.mxu0 0.0
  %1800 = vmatpush1.msra.mxu0 0.0
  %1801 = vmatprep.subr.mxu0 0.0
  %1802 = vmatpush1.msra.mxu0 0.0
  %1803 = vmatprep.subr.mxu0 0.0
  %1804 = vmatpush1.msra.mxu0 0.0
  %1805 = vmatprep.subr.mxu0 0.0
  %1806 = vmatpush1.msra.mxu0 0.0
  %1807 = vmatprep.subr.mxu0 0.0
  %1808 = vmatpush1.msra.mxu0 0.0
  %1809 = vmatprep.subr.mxu0 0.0
  %1810 = vmatpush1.msra.mxu0 0.0
  %1811 = vmatprep.subr.mxu0 0.0
  %1812 = vmatpush1.msra.mxu0 0.0
  %1813 = vmatprep.subr.mxu0 0.0
  %1814 = vmatpush1.msra.mxu0 0.0
  %1815 = vmatprep.subr.mxu0 0.0
  %1816 = vmatpush1.msra.mxu0 0.0
  %1817 = vmatprep.subr.mxu0 0.0
  %1818 = vmatpush1.msra.mxu0 0.0
  %1819 = vmatprep.subr.mxu0 0.0
  %1820 = vmatpush1.msra.mxu0 0.0
  %1821 = vmatprep.subr.mxu0 0.0
  %1822 = vmatpush1.msra.mxu0 0.0
  %1823 = vmatprep.subr.mxu0 0.0
  %1824 = vmatpush1.msra.mxu0 0.0
  %1825 = vmatprep.subr.mxu0 0.0
  %1826 = vmatpush1.msra.mxu0 0.0
  %1827 = vmatprep.subr.mxu0 0.0
  %1828 = vmatpush1.msra.mxu0 0.0
  %1829 = vmatprep.subr.mxu0 0.0
  %1830 = vmatpush1.msra.mxu0 0.0
  %1831 = vmatprep.subr.mxu0 0.0
  %1832 = vmatpush1.msra.mxu0 0.0
  %1833 = vmatprep.subr.mxu0 0.0
  %1834 = vmatpush1.msra.mxu0 0.0
  %1835 = vmatprep.subr.mxu0 0.0
  %1836 = vmatpush1.msra.mxu0 0.0
  %1837 = vmatprep.subr.mxu0 0.0
  %1838 = vmatpush1.msra.mxu0 0.0
  %1839 = vmatprep.mubr.f32.mxu0 0.0
  %1840 = vmatmul.mubr.f32.gmra.mrb[0].mxu0 %v1770
  %v1841 = vpop.f32.mrb[0].mxu0
  %v1842 = vadd.f32 %v1767, %v1841
  %v1843 = vpop.f32.mrb[0].mxu0
  %1844 = vmatprep.mubr.f32.mxu0 0.0
  %1845 = vmatmul.mubr.f32.gmra.mrb[0].mxu0 %v1773
  %v1846 = vpop.f32.mrb[0].mxu0
  %v1847 = vadd.f32 %v1767, %v1846
  %v1848 = vpop.f32.mrb[0].mxu0
  %1849 = vdwg.mxu0
  %v1850 = vmax.f32 %v1842, 0.0
  %v1851 = vmax.f32 %v1847, 0.0
  %v1852 = vld [vmem:[%s11] sm:$0xff]
  %v1853 = vld [vmem:[%s11 + $0x8] sm:$0xff]
  %v1854 = vld [vmem:[%s11 + $0x10] sm:$0xff]
  %v1855 = vld [vmem:[%s11 + $0x18] sm:$0xff]
  %v1856 = vld [vmem:[%s11 + $0x20] sm:$0xff]
  %v1857 = vld [vmem:[%s11 + $0x28] sm:$0xff]
  %v1858 = vld [vmem:[%s11 + $0x30] sm:$0xff]
  %v1859 = vld [vmem:[%s11 + $0x38] sm:$0xff]
  %v1860 = vld [vmem:[%s12] sm:$0x1]
  %v1862 = vlaneseq
  %v1863 = vshrl.u32 %v1862, 7
  %v1864 = vsub.s32 0, %v1863
  %v1865 = vrot.slane %v1860, %v1864
  %vm1867 = vcmask 523264
  %v1869 = vsel %vm1867, %v1850, 0
  %v1872 = vsel %vm1867, %v1851, 0
  %1874 = vmatprep.subr.mxu0 0.0
  %1875 = vmatpush1.msra.mxu0 %v1852
  %1876 = vmatprep.subr.mxu0 0.0
  %1877 = vmatpush1.msra.mxu0 %v1853
  %1878 = vmatprep.subr.mxu0 0.0
  %1879 = vmatpush1.msra.mxu0 %v1854
  %1880 = vmatprep.subr.mxu0 0.0
  %1881 = vmatpush1.msra.mxu0 %v1855
  %1882 = vmatprep.subr.mxu0 0.0
  %1883 = vmatpush1.msra.mxu0 %v1856
  %1884 = vmatprep.subr.mxu0 0.0
  %1885 = vmatpush1.msra.mxu0 %v1857
  %1886 = vmatprep.subr.mxu0 0.0
  %1887 = vmatpush1.msra.mxu0 %v1858
  %1888 = vmatprep.subr.mxu0 0.0
  %1889 = vmatpush1.msra.mxu0 %v1859
  %1890 = vmatprep.subr.mxu0 0.0
  %1891 = vmatpush1.msra.mxu0 0.0
  %1892 = vmatprep.subr.mxu0 0.0
  %1893 = vmatpush1.msra.mxu0 0.0
  %1894 = vmatprep.subr.mxu0 0.0
  %1895 = vmatpush1.msra.mxu0 0.0
  %1896 = vmatprep.subr.mxu0 0.0
  %1897 = vmatpush1.msra.mxu0 0.0
  %1898 = vmatprep.subr.mxu0 0.0
  %1899 = vmatpush1.msra.mxu0 0.0
  %1900 = vmatprep.subr.mxu0 0.0
  %1901 = vmatpush1.msra.mxu0 0.0
  %1902 = vmatprep.subr.mxu0 0.0
  %1903 = vmatpush1.msra.mxu0 0.0
  %1904 = vmatprep.subr.mxu0 0.0
  %1905 = vmatpush1.msra.mxu0 0.0
  %1906 = vmatprep.subr.mxu0 0.0
  %1907 = vmatpush1.msra.mxu0 0.0
  %1908 = vmatprep.subr.mxu0 0.0
  %1909 = vmatpush1.msra.mxu0 0.0
  %1910 = vmatprep.subr.mxu0 0.0
  %1911 = vmatpush1.msra.mxu0 0.0
  %1912 = vmatprep.subr.mxu0 0.0
  %1913 = vmatpush1.msra.mxu0 0.0
  %1914 = vmatprep.subr.mxu0 0.0
  %1915 = vmatpush1.msra.mxu0 0.0
  %1916 = vmatprep.subr.mxu0 0.0
  %1917 = vmatpush1.msra.mxu0 0.0
  %1918 = vmatprep.subr.mxu0 0.0
  %1919 = vmatpush1.msra.mxu0 0.0
  %1920 = vmatprep.subr.mxu0 0.0
  %1921 = vmatpush1.msra.mxu0 0.0
  %1922 = vmatprep.subr.mxu0 0.0
  %1923 = vmatpush1.msra.mxu0 0.0
  %1924 = vmatprep.subr.mxu0 0.0
  %1925 = vmatpush1.msra.mxu0 0.0
  %1926 = vmatprep.subr.mxu0 0.0
  %1927 = vmatpush1.msra.mxu0 0.0
  %1928 = vmatprep.subr.mxu0 0.0
  %1929 = vmatpush1.msra.mxu0 0.0
  %1930 = vmatprep.subr.mxu0 0.0
  %1931 = vmatpush1.msra.mxu0 0.0
  %1932 = vmatprep.subr.mxu0 0.0
  %1933 = vmatpush1.msra.mxu0 0.0
  %1934 = vmatprep.subr.mxu0 0.0
  %1935 = vmatpush1.msra.mxu0 0.0
  %1936 = vmatprep.subr.mxu0 0.0
  %1937 = vmatpush1.msra.mxu0 0.0
  %1938 = vmatprep.mubr.f32.mxu0 0.0
  %1939 = vmatmul.mubr.f32.gmra.mrb[0].mxu0 %v1869
  %v1940 = vpop.f32.mrb[0].mxu0
  %v1941 = vadd.f32 %v1865, %v1940
  %v1942 = vpop.f32.mrb[0].mxu0
  %1943 = vmatprep.mubr.f32.mxu0 0.0
  %1944 = vmatmul.mubr.f32.gmra.mrb[0].mxu0 %v1872
  %v1945 = vpop.f32.mrb[0].mxu0
  %v1946 = vadd.f32 %v1865, %v1945
  %v1947 = vpop.f32.mrb[0].mxu0
  %1948 = vdwg.mxu0
  %v1949 = vadd.f32 %v1756, %v1941
  %v1950 = vadd.f32 %v1757, %v1946
  %v1951 = vld [vmem:[%s13] sm:$0x1]
  %v1952 = vld [vmem:[%s14] sm:$0x1]
  %v1953 = vsel %vm186, %v1949, 0.0
  %1954 = vadd.xlane.f32.xlu0 %v1953
  %v1955 = vpop.xlane.xlu0 %1954
  %v1956 = vsel %vm186, %v1950, 0.0
  %1957 = vadd.xlane.f32.xlu0 %v1956
  %v1958 = vpop.xlane.xlu0 %1957
  %v1959 = vmul.f32 %v1955, %v1721
  %v1960 = vmul.f32 %v1958, %v1721
  %v1961 = vsub.f32 %v1949, %v1959
  %v1962 = vsub.f32 %v1950, %v1960
  %v1963 = vmul.f32 %v1961, %v1961
  %v1964 = vmul.f32 %v1962, %v1962
  %v1965 = vsel %vm186, %v1963, 0.0
  %1966 = vadd.xlane.f32.xlu0 %v1965
  %v1967 = vpop.xlane.xlu0 %1966
  %v1968 = vsel %vm186, %v1964, 0.0
  %1969 = vadd.xlane.f32.xlu0 %v1968
  %v1970 = vpop.xlane.xlu0 %1969
  %v1971 = vmul.f32 %v1967, %v1721
  %v1972 = vmul.f32 %v1970, %v1721
  %v1973 = vadd.f32 %v1971, 1e-05
  %v1974 = vadd.f32 %v1972, 1e-05
  %v1975 = vrsqrt.pop %v1973
  %v1976 = vrsqrt.pop %v1974
  %v1977 = vmul.f32 %v1961, %v1975
  %v1978 = vmul.f32 %v1962, %v1976
  %v1980 = vlaneseq
  %v1981 = vshrl.u32 %v1980, 7
  %v1982 = vsub.s32 0, %v1981
  %v1983 = vrot.slane %v1951, %v1982
  %v1985 = vmul.f32 %v1977, %v1983
  %v1986 = vmul.f32 %v1978, %v1983
  %v1988 = vlaneseq
  %v1989 = vshrl.u32 %v1988, 7
  %v1990 = vsub.s32 0, %v1989
  %v1991 = vrot.slane %v1952, %v1990
  %v1993 = vadd.f32 %v1985, %v1991
  %v1994 = vadd.f32 %v1986, %v1991
  %s1995 = scalar_lea.vmem %s3, 32
  %v1996 = vld [vmem:[%s1995] sm:$0xff]
  %v1997 = vld [vmem:[%s1995 + $0x8] sm:$0xff]
  %v1998 = vld [vmem:[%s1995 + $0x10] sm:$0xff]
  %v1999 = vld [vmem:[%s1995 + $0x18] sm:$0xff]
  %s2000 = scalar_lea.vmem %s4, 1
  %v2001 = vld [vmem:[%s2000] sm:$0x1]
  %v2003 = vlaneseq
  %v2004 = vshrl.u32 %v2003, 7
  %v2005 = vsub.s32 0, %v2004
  %v2006 = vrot.slane %v2001, %v2005
  %v2009 = vsel %vm186, %v1993, 0
  %v2012 = vsel %vm186, %v1994, 0
  %2014 = vmatprep.subr.mxu0 0.0
  %2015 = vmatpush1.msra.mxu0 %v1996
  %2016 = vmatprep.subr.mxu0 0.0
  %2017 = vmatpush1.msra.mxu0 %v1997
  %2018 = vmatprep.subr.mxu0 0.0
  %2019 = vmatpush1.msra.mxu0 %v1998
  %2020 = vmatprep.subr.mxu0 0.0
  %2021 = vmatpush1.msra.mxu0 %v1999
  %2022 = vmatprep.subr.mxu0 0.0
  %2023 = vmatpush1.msra.mxu0 0.0
  %2024 = vmatprep.subr.mxu0 0.0
  %2025 = vmatpush1.msra.mxu0 0.0
  %2026 = vmatprep.subr.mxu0 0.0
  %2027 = vmatpush1.msra.mxu0 0.0
  %2028 = vmatprep.subr.mxu0 0.0
  %2029 = vmatpush1.msra.mxu0 0.0
  %2030 = vmatprep.subr.mxu0 0.0
  %2031 = vmatpush1.msra.mxu0 0.0
  %2032 = vmatprep.subr.mxu0 0.0
  %2033 = vmatpush1.msra.mxu0 0.0
  %2034 = vmatprep.subr.mxu0 0.0
  %2035 = vmatpush1.msra.mxu0 0.0
  %2036 = vmatprep.subr.mxu0 0.0
  %2037 = vmatpush1.msra.mxu0 0.0
  %2038 = vmatprep.subr.mxu0 0.0
  %2039 = vmatpush1.msra.mxu0 0.0
  %2040 = vmatprep.subr.mxu0 0.0
  %2041 = vmatpush1.msra.mxu0 0.0
  %2042 = vmatprep.subr.mxu0 0.0
  %2043 = vmatpush1.msra.mxu0 0.0
  %2044 = vmatprep.subr.mxu0 0.0
  %2045 = vmatpush1.msra.mxu0 0.0
  %2046 = vmatprep.subr.mxu0 0.0
  %2047 = vmatpush1.msra.mxu0 0.0
  %2048 = vmatprep.subr.mxu0 0.0
  %2049 = vmatpush1.msra.mxu0 0.0
  %2050 = vmatprep.subr.mxu0 0.0
  %2051 = vmatpush1.msra.mxu0 0.0
  %2052 = vmatprep.subr.mxu0 0.0
  %2053 = vmatpush1.msra.mxu0 0.0
  %2054 = vmatprep.subr.mxu0 0.0
  %2055 = vmatpush1.msra.mxu0 0.0
  %2056 = vmatprep.subr.mxu0 0.0
  %2057 = vmatpush1.msra.mxu0 0.0
  %2058 = vmatprep.subr.mxu0 0.0
  %2059 = vmatpush1.msra.mxu0 0.0
  %2060 = vmatprep.subr.mxu0 0.0
  %2061 = vmatpush1.msra.mxu0 0.0
  %2062 = vmatprep.subr.mxu0 0.0
  %2063 = vmatpush1.msra.mxu0 0.0
  %2064 = vmatprep.subr.mxu0 0.0
  %2065 = vmatpush1.msra.mxu0 0.0
  %2066 = vmatprep.subr.mxu0 0.0
  %2067 = vmatpush1.msra.mxu0 0.0
  %2068 = vmatprep.subr.mxu0 0.0
  %2069 = vmatpush1.msra.mxu0 0.0
  %2070 = vmatprep.subr.mxu0 0.0
  %2071 = vmatpush1.msra.mxu0 0.0
  %2072 = vmatprep.subr.mxu0 0.0
  %2073 = vmatpush1.msra.mxu0 0.0
  %2074 = vmatprep.subr.mxu0 0.0
  %2075 = vmatpush1.msra.mxu0 0.0
  %2076 = vmatprep.subr.mxu0 0.0
  %2077 = vmatpush1.msra.mxu0 0.0
  %2078 = vmatprep.mubr.f32.mxu0 0.0
  %2079 = vmatmul.mubr.f32.gmra.mrb[0].mxu0 %v2009
  %v2080 = vpop.f32.mrb[0].mxu0
  %v2081 = vadd.f32 %v2006, %v2080
  %v2082 = vpop.f32.mrb[0].mxu0
  %2083 = vmatprep.mubr.f32.mxu0 0.0
  %2084 = vmatmul.mubr.f32.gmra.mrb[0].mxu0 %v2012
  %v2085 = vpop.f32.mrb[0].mxu0
  %v2086 = vadd.f32 %v2006, %v2085
  %v2087 = vpop.f32.mrb[0].mxu0
  %2088 = vdwg.mxu0
  %2090 = vrot.lane.b32.xlu0 %v2081, 96
  %v2091 = vpop.permute.xlu0 %2090
  %v2092 = vsel %vm271, %v2081, 0
  %v2094 = vsel %vm271, %v2091, 0
  %2096 = vmatprep.subr.mxu0 0.0
  %2097 = vmatpush1.xpose.msra.mxu0 %v2094
  %2098 = vmatprep.subr.mxu0 0.0
  %2099 = vmatpush1.xpose.msra.mxu0 0.0
  %2100 = vmatprep.subr.mxu0 0.0
  %2101 = vmatpush1.xpose.msra.mxu0 0.0
  %2102 = vmatprep.subr.mxu0 0.0
  %2103 = vmatpush1.xpose.msra.mxu0 0.0
  %2104 = vmatprep.subr.mxu0 0.0
  %2105 = vmatpush1.xpose.msra.mxu0 0.0
  %2106 = vmatprep.subr.mxu0 0.0
  %2107 = vmatpush1.xpose.msra.mxu0 0.0
  %2108 = vmatprep.subr.mxu0 0.0
  %2109 = vmatpush1.xpose.msra.mxu0 0.0
  %2110 = vmatprep.subr.mxu0 0.0
  %2111 = vmatpush1.xpose.msra.mxu0 0.0
  %2112 = vmatprep.subr.mxu0 0.0
  %2113 = vmatpush1.xpose.msra.mxu0 0.0
  %2114 = vmatprep.subr.mxu0 0.0
  %2115 = vmatpush1.xpose.msra.mxu0 0.0
  %2116 = vmatprep.subr.mxu0 0.0
  %2117 = vmatpush1.xpose.msra.mxu0 0.0
  %2118 = vmatprep.subr.mxu0 0.0
  %2119 = vmatpush1.xpose.msra.mxu0 0.0
  %2120 = vmatprep.subr.mxu0 0.0
  %2121 = vmatpush1.xpose.msra.mxu0 0.0
  %2122 = vmatprep.subr.mxu0 0.0
  %2123 = vmatpush1.xpose.msra.mxu0 0.0
  %2124 = vmatprep.subr.mxu0 0.0
  %2125 = vmatpush1.xpose.msra.mxu0 0.0
  %2126 = vmatprep.subr.mxu0 0.0
  %2127 = vmatpush1.xpose.msra.mxu0 0.0
  %2128 = vmatprep.subr.mxu0 0.0
  %2129 = vmatpush1.xpose.msra.mxu0 0.0
  %2130 = vmatprep.subr.mxu0 0.0
  %2131 = vmatpush1.xpose.msra.mxu0 0.0
  %2132 = vmatprep.subr.mxu0 0.0
  %2133 = vmatpush1.xpose.msra.mxu0 0.0
  %2134 = vmatprep.subr.mxu0 0.0
  %2135 = vmatpush1.xpose.msra.mxu0 0.0
  %2136 = vmatprep.subr.mxu0 0.0
  %2137 = vmatpush1.xpose.msra.mxu0 0.0
  %2138 = vmatprep.subr.mxu0 0.0
  %2139 = vmatpush1.xpose.msra.mxu0 0.0
  %2140 = vmatprep.subr.mxu0 0.0
  %2141 = vmatpush1.xpose.msra.mxu0 0.0
  %2142 = vmatprep.subr.mxu0 0.0
  %2143 = vmatpush1.xpose.msra.mxu0 0.0
  %2144 = vmatprep.subr.mxu0 0.0
  %2145 = vmatpush1.xpose.msra.mxu0 0.0
  %2146 = vmatprep.subr.mxu0 0.0
  %2147 = vmatpush1.xpose.msra.mxu0 0.0
  %2148 = vmatprep.subr.mxu0 0.0
  %2149 = vmatpush1.xpose.msra.mxu0 0.0
  %2150 = vmatprep.subr.mxu0 0.0
  %2151 = vmatpush1.xpose.msra.mxu0 0.0
  %2152 = vmatprep.subr.mxu0 0.0
  %2153 = vmatpush1.xpose.msra.mxu0 0.0
  %2154 = vmatprep.subr.mxu0 0.0
  %2155 = vmatpush1.xpose.msra.mxu0 0.0
  %2156 = vmatprep.subr.mxu0 0.0
  %2157 = vmatpush1.xpose.msra.mxu0 0.0
  %2158 = vmatprep.subr.mxu0 0.0
  %2159 = vmatpush1.xpose.msra.mxu0 0.0
  %2160 = vmatprep.mubr.f32.mxu0 0.0
  %2161 = vmatmul.mubr.f32.gmra.mrb[0].mxu0 %v2092
  %v2162 = vpop.f32.mrb[0].mxu0
  %v2163 = vadd.f32 %v174, %v2162
  %v2164 = vpop.f32.mrb[0].mxu0
  %2165 = vdwg.mxu0
  %2167 = vrot.lane.b32.xlu0 %v2086, 96
  %v2168 = vpop.permute.xlu0 %2167
  %v2169 = vsel %vm271, %v2086, 0
  %v2171 = vsel %vm271, %v2168, 0
  %2173 = vmatprep.subr.mxu0 0.0
  %2174 = vmatpush1.xpose.msra.mxu0 %v2171
  %2175 = vmatprep.subr.mxu0 0.0
  %2176 = vmatpush1.xpose.msra.mxu0 0.0
  %2177 = vmatprep.subr.mxu0 0.0
  %2178 = vmatpush1.xpose.msra.mxu0 0.0
  %2179 = vmatprep.subr.mxu0 0.0
  %2180 = vmatpush1.xpose.msra.mxu0 0.0
  %2181 = vmatprep.subr.mxu0 0.0
  %2182 = vmatpush1.xpose.msra.mxu0 0.0
  %2183 = vmatprep.subr.mxu0 0.0
  %2184 = vmatpush1.xpose.msra.mxu0 0.0
  %2185 = vmatprep.subr.mxu0 0.0
  %2186 = vmatpush1.xpose.msra.mxu0 0.0
  %2187 = vmatprep.subr.mxu0 0.0
  %2188 = vmatpush1.xpose.msra.mxu0 0.0
  %2189 = vmatprep.subr.mxu0 0.0
  %2190 = vmatpush1.xpose.msra.mxu0 0.0
  %2191 = vmatprep.subr.mxu0 0.0
  %2192 = vmatpush1.xpose.msra.mxu0 0.0
  %2193 = vmatprep.subr.mxu0 0.0
  %2194 = vmatpush1.xpose.msra.mxu0 0.0
  %2195 = vmatprep.subr.mxu0 0.0
  %2196 = vmatpush1.xpose.msra.mxu0 0.0
  %2197 = vmatprep.subr.mxu0 0.0
  %2198 = vmatpush1.xpose.msra.mxu0 0.0
  %2199 = vmatprep.subr.mxu0 0.0
  %2200 = vmatpush1.xpose.msra.mxu0 0.0
  %2201 = vmatprep.subr.mxu0 0.0
  %2202 = vmatpush1.xpose.msra.mxu0 0.0
  %2203 = vmatprep.subr.mxu0 0.0
  %2204 = vmatpush1.xpose.msra.mxu0 0.0
  %2205 = vmatprep.subr.mxu0 0.0
  %2206 = vmatpush1.xpose.msra.mxu0 0.0
  %2207 = vmatprep.subr.mxu0 0.0
  %2208 = vmatpush1.xpose.msra.mxu0 0.0
  %2209 = vmatprep.subr.mxu0 0.0
  %2210 = vmatpush1.xpose.msra.mxu0 0.0
  %2211 = vmatprep.subr.mxu0 0.0
  %2212 = vmatpush1.xpose.msra.mxu0 0.0
  %2213 = vmatprep.subr.mxu0 0.0
  %2214 = vmatpush1.xpose.msra.mxu0 0.0
  %2215 = vmatprep.subr.mxu0 0.0
  %2216 = vmatpush1.xpose.msra.mxu0 0.0
  %2217 = vmatprep.subr.mxu0 0.0
  %2218 = vmatpush1.xpose.msra.mxu0 0.0
  %2219 = vmatprep.subr.mxu0 0.0
  %2220 = vmatpush1.xpose.msra.mxu0 0.0
  %2221 = vmatprep.subr.mxu0 0.0
  %2222 = vmatpush1.xpose.msra.mxu0 0.0
  %2223 = vmatprep.subr.mxu0 0.0
  %2224 = vmatpush1.xpose.msra.mxu0 0.0
  %2225 = vmatprep.subr.mxu0 0.0
  %2226 = vmatpush1.xpose.msra.mxu0 0.0
  %2227 = vmatprep.subr.mxu0 0.0
  %2228 = vmatpush1.xpose.msra.mxu0 0.0
  %2229 = vmatprep.subr.mxu0 0.0
  %2230 = vmatpush1.xpose.msra.mxu0 0.0
  %2231 = vmatprep.subr.mxu0 0.0
  %2232 = vmatpush1.xpose.msra.mxu0 0.0
  %2233 = vmatprep.subr.mxu0 0.0
  %2234 = vmatpush1.xpose.msra.mxu0 0.0
  %2235 = vmatprep.subr.mxu0 0.0
  %2236 = vmatpush1.xpose.msra.mxu0 0.0
  %2237 = vmatprep.mubr.f32.mxu0 0.0
  %2238 = vmatmul.mubr.f32.gmra.mrb[0].mxu0 %v2169
  %v2239 = vpop.f32.mrb[0].mxu0
  %v2240 = vadd.f32 %v174, %v2239
  %v2241 = vpop.f32.mrb[0].mxu0
  %2242 = vdwg.mxu0
  %v2243 = vsel %vm271, %v2163, -inf
  %2244 = vmax.xlane.f32.xlu0 %v2243
  %v2245 = vpop.xlane.xlu0 %2244
  %v2246 = vsel %vm271, %v2240, -inf
  %2247 = vmax.xlane.f32.xlu0 %v2246
  %v2248 = vpop.xlane.xlu0 %2247
  %v2249 = vsub.f32 %v2163, %v2245
  %v2250 = vsub.f32 %v2240, %v2248
  %v2251 = vmul.f32 %v2249, 1.442695
  %v2252 = vpow.pop %v2251
  %v2253 = vmul.f32 %v2250, 1.442695
  %v2254 = vpow.pop %v2253
  %v2255 = vsel %vm271, %v2252, 0.0
  %2256 = vadd.xlane.f32.xlu0 %v2255
  %v2257 = vpop.xlane.xlu0 %2256
  %v2258 = vsel %vm271, %v2254, 0.0
  %2259 = vadd.xlane.f32.xlu0 %v2258
  %v2260 = vpop.xlane.xlu0 %2259
  %v2261 = vrcp.pop %v2257
  %v2262 = vmul.f32 %v2252, %v2261
  %v2263 = vrcp.pop %v2260
  %v2264 = vmul.f32 %v2254, %v2263
  %2265 = vrot.lane.b32.xlu0 %v2081, 64
  %v2266 = vpop.permute.xlu0 %2265
  %v2269 = vsel %vm271, %v2262, 0
  %2271 = vmatprep.subr.mxu0 0.0
  %2272 = vmatpush1.msra.mxu0 %v2266
  %2273 = vmatprep.subr.mxu0 0.0
  %2274 = vmatpush1.msra.mxu0 0.0
  %2275 = vmatprep.subr.mxu0 0.0
  %2276 = vmatpush1.msra.mxu0 0.0
  %2277 = vmatprep.subr.mxu0 0.0
  %2278 = vmatpush1.msra.mxu0 0.0
  %2279 = vmatprep.subr.mxu0 0.0
  %2280 = vmatpush1.msra.mxu0 0.0
  %2281 = vmatprep.subr.mxu0 0.0
  %2282 = vmatpush1.msra.mxu0 0.0
  %2283 = vmatprep.subr.mxu0 0.0
  %2284 = vmatpush1.msra.mxu0 0.0
  %2285 = vmatprep.subr.mxu0 0.0
  %2286 = vmatpush1.msra.mxu0 0.0
  %2287 = vmatprep.subr.mxu0 0.0
  %2288 = vmatpush1.msra.mxu0 0.0
  %2289 = vmatprep.subr.mxu0 0.0
  %2290 = vmatpush1.msra.mxu0 0.0
  %2291 = vmatprep.subr.mxu0 0.0
  %2292 = vmatpush1.msra.mxu0 0.0
  %2293 = vmatprep.subr.mxu0 0.0
  %2294 = vmatpush1.msra.mxu0 0.0
  %2295 = vmatprep.subr.mxu0 0.0
  %2296 = vmatpush1.msra.mxu0 0.0
  %2297 = vmatprep.subr.mxu0 0.0
  %2298 = vmatpush1.msra.mxu0 0.0
  %2299 = vmatprep.subr.mxu0 0.0
  %2300 = vmatpush1.msra.mxu0 0.0
  %2301 = vmatprep.subr.mxu0 0.0
  %2302 = vmatpush1.msra.mxu0 0.0
  %2303 = vmatprep.subr.mxu0 0.0
  %2304 = vmatpush1.msra.mxu0 0.0
  %2305 = vmatprep.subr.mxu0 0.0
  %2306 = vmatpush1.msra.mxu0 0.0
  %2307 = vmatprep.subr.mxu0 0.0
  %2308 = vmatpush1.msra.mxu0 0.0
  %2309 = vmatprep.subr.mxu0 0.0
  %2310 = vmatpush1.msra.mxu0 0.0
  %2311 = vmatprep.subr.mxu0 0.0
  %2312 = vmatpush1.msra.mxu0 0.0
  %2313 = vmatprep.subr.mxu0 0.0
  %2314 = vmatpush1.msra.mxu0 0.0
  %2315 = vmatprep.subr.mxu0 0.0
  %2316 = vmatpush1.msra.mxu0 0.0
  %2317 = vmatprep.subr.mxu0 0.0
  %2318 = vmatpush1.msra.mxu0 0.0
  %2319 = vmatprep.subr.mxu0 0.0
  %2320 = vmatpush1.msra.mxu0 0.0
  %2321 = vmatprep.subr.mxu0 0.0
  %2322 = vmatpush1.msra.mxu0 0.0
  %2323 = vmatprep.subr.mxu0 0.0
  %2324 = vmatpush1.msra.mxu0 0.0
  %2325 = vmatprep.subr.mxu0 0.0
  %2326 = vmatpush1.msra.mxu0 0.0
  %2327 = vmatprep.subr.mxu0 0.0
  %2328 = vmatpush1.msra.mxu0 0.0
  %2329 = vmatprep.subr.mxu0 0.0
  %2330 = vmatpush1.msra.mxu0 0.0
  %2331 = vmatprep.subr.mxu0 0.0
  %2332 = vmatpush1.msra.mxu0 0.0
  %2333 = vmatprep.subr.mxu0 0.0
  %2334 = vmatpush1.msra.mxu0 0.0
  %2335 = vmatprep.mubr.f32.mxu0 0.0
  %2336 = vmatmul.mubr.f32.gmra.mrb[0].mxu0 %v2269
  %v2337 = vpop.f32.mrb[0].mxu0
  %v2338 = vadd.f32 0.0, %v2337
  %v2339 = vpop.f32.mrb[0].mxu0
  %2340 = vdwg.mxu0
  %2341 = vrot.lane.b32.xlu0 %v2086, 64
  %v2342 = vpop.permute.xlu0 %2341
  %v2345 = vsel %vm271, %v2264, 0
  %2347 = vmatprep.subr.mxu0 0.0
  %2348 = vmatpush1.msra.mxu0 %v2342
  %2349 = vmatprep.subr.mxu0 0.0
  %2350 = vmatpush1.msra.mxu0 0.0
  %2351 = vmatprep.subr.mxu0 0.0
  %2352 = vmatpush1.msra.mxu0 0.0
  %2353 = vmatprep.subr.mxu0 0.0
  %2354 = vmatpush1.msra.mxu0 0.0
  %2355 = vmatprep.subr.mxu0 0.0
  %2356 = vmatpush1.msra.mxu0 0.0
  %2357 = vmatprep.subr.mxu0 0.0
  %2358 = vmatpush1.msra.mxu0 0.0
  %2359 = vmatprep.subr.mxu0 0.0
  %2360 = vmatpush1.msra.mxu0 0.0
  %2361 = vmatprep.subr.mxu0 0.0
  %2362 = vmatpush1.msra.mxu0 0.0
  %2363 = vmatprep.subr.mxu0 0.0
  %2364 = vmatpush1.msra.mxu0 0.0
  %2365 = vmatprep.subr.mxu0 0.0
  %2366 = vmatpush1.msra.mxu0 0.0
  %2367 = vmatprep.subr.mxu0 0.0
  %2368 = vmatpush1.msra.mxu0 0.0
  %2369 = vmatprep.subr.mxu0 0.0
  %2370 = vmatpush1.msra.mxu0 0.0
  %2371 = vmatprep.subr.mxu0 0.0
  %2372 = vmatpush1.msra.mxu0 0.0
  %2373 = vmatprep.subr.mxu0 0.0
  %2374 = vmatpush1.msra.mxu0 0.0
  %2375 = vmatprep.subr.mxu0 0.0
  %2376 = vmatpush1.msra.mxu0 0.0
  %2377 = vmatprep.subr.mxu0 0.0
  %2378 = vmatpush1.msra.mxu0 0.0
  %2379 = vmatprep.subr.mxu0 0.0
  %2380 = vmatpush1.msra.mxu0 0.0
  %2381 = vmatprep.subr.mxu0 0.0
  %2382 = vmatpush1.msra.mxu0 0.0
  %2383 = vmatprep.subr.mxu0 0.0
  %2384 = vmatpush1.msra.mxu0 0.0
  %2385 = vmatprep.subr.mxu0 0.0
  %2386 = vmatpush1.msra.mxu0 0.0
  %2387 = vmatprep.subr.mxu0 0.0
  %2388 = vmatpush1.msra.mxu0 0.0
  %2389 = vmatprep.subr.mxu0 0.0
  %2390 = vmatpush1.msra.mxu0 0.0
  %2391 = vmatprep.subr.mxu0 0.0
  %2392 = vmatpush1.msra.mxu0 0.0
  %2393 = vmatprep.subr.mxu0 0.0
  %2394 = vmatpush1.msra.mxu0 0.0
  %2395 = vmatprep.subr.mxu0 0.0
  %2396 = vmatpush1.msra.mxu0 0.0
  %2397 = vmatprep.subr.mxu0 0.0
  %2398 = vmatpush1.msra.mxu0 0.0
  %2399 = vmatprep.subr.mxu0 0.0
  %2400 = vmatpush1.msra.mxu0 0.0
  %2401 = vmatprep.subr.mxu0 0.0
  %2402 = vmatpush1.msra.mxu0 0.0
  %2403 = vmatprep.subr.mxu0 0.0
  %2404 = vmatpush1.msra.mxu0 0.0
  %2405 = vmatprep.subr.mxu0 0.0
  %2406 = vmatpush1.msra.mxu0 0.0
  %2407 = vmatprep.subr.mxu0 0.0
  %2408 = vmatpush1.msra.mxu0 0.0
  %2409 = vmatprep.subr.mxu0 0.0
  %2410 = vmatpush1.msra.mxu0 0.0
  %2411 = vmatprep.mubr.f32.mxu0 0.0
  %2412 = vmatmul.mubr.f32.gmra.mrb[0].mxu0 %v2345
  %v2413 = vpop.f32.mrb[0].mxu0
  %v2414 = vadd.f32 0.0, %v2413
  %v2415 = vpop.f32.mrb[0].mxu0
  %2416 = vdwg.mxu0
  %2417 = vrot.lane.b32.xlu0 %v2081, 120
  %v2418 = vpop.permute.xlu0 %2417
  %2419 = vrot.lane.b32.xlu0 %v2081, 88
  %v2420 = vpop.permute.xlu0 %2419
  %v2421 = vsel %vm271, %v2418, 0
  %v2423 = vsel %vm271, %v2420, 0
  %2425 = vmatprep.subr.mxu0 0.0
  %2426 = vmatpush1.xpose.msra.mxu0 %v2423
  %2427 = vmatprep.subr.mxu0 0.0
  %2428 = vmatpush1.xpose.msra.mxu0 0.0
  %2429 = vmatprep.subr.mxu0 0.0
  %2430 = vmatpush1.xpose.msra.mxu0 0.0
  %2431 = vmatprep.subr.mxu0 0.0
  %2432 = vmatpush1.xpose.msra.mxu0 0.0
  %2433 = vmatprep.subr.mxu0 0.0
  %2434 = vmatpush1.xpose.msra.mxu0 0.0
  %2435 = vmatprep.subr.mxu0 0.0
  %2436 = vmatpush1.xpose.msra.mxu0 0.0
  %2437 = vmatprep.subr.mxu0 0.0
  %2438 = vmatpush1.xpose.msra.mxu0 0.0
  %2439 = vmatprep.subr.mxu0 0.0
  %2440 = vmatpush1.xpose.msra.mxu0 0.0
  %2441 = vmatprep.subr.mxu0 0.0
  %2442 = vmatpush1.xpose.msra.mxu0 0.0
  %2443 = vmatprep.subr.mxu0 0.0
  %2444 = vmatpush1.xpose.msra.mxu0 0.0
  %2445 = vmatprep.subr.mxu0 0.0
  %2446 = vmatpush1.xpose.msra.mxu0 0.0
  %2447 = vmatprep.subr.mxu0 0.0
  %2448 = vmatpush1.xpose.msra.mxu0 0.0
  %2449 = vmatprep.subr.mxu0 0.0
  %2450 = vmatpush1.xpose.msra.mxu0 0.0
  %2451 = vmatprep.subr.mxu0 0.0
  %2452 = vmatpush1.xpose.msra.mxu0 0.0
  %2453 = vmatprep.subr.mxu0 0.0
  %2454 = vmatpush1.xpose.msra.mxu0 0.0
  %2455 = vmatprep.subr.mxu0 0.0
  %2456 = vmatpush1.xpose.msra.mxu0 0.0
  %2457 = vmatprep.subr.mxu0 0.0
  %2458 = vmatpush1.xpose.msra.mxu0 0.0
  %2459 = vmatprep.subr.mxu0 0.0
  %2460 = vmatpush1.xpose.msra.mxu0 0.0
  %2461 = vmatprep.subr.mxu0 0.0
  %2462 = vmatpush1.xpose.msra.mxu0 0.0
  %2463 = vmatprep.subr.mxu0 0.0
  %2464 = vmatpush1.xpose.msra.mxu0 0.0
  %2465 = vmatprep.subr.mxu0 0.0
  %2466 = vmatpush1.xpose.msra.mxu0 0.0
  %2467 = vmatprep.subr.mxu0 0.0
  %2468 = vmatpush1.xpose.msra.mxu0 0.0
  %2469 = vmatprep.subr.mxu0 0.0
  %2470 = vmatpush1.xpose.msra.mxu0 0.0
  %2471 = vmatprep.subr.mxu0 0.0
  %2472 = vmatpush1.xpose.msra.mxu0 0.0
  %2473 = vmatprep.subr.mxu0 0.0
  %2474 = vmatpush1.xpose.msra.mxu0 0.0
  %2475 = vmatprep.subr.mxu0 0.0
  %2476 = vmatpush1.xpose.msra.mxu0 0.0
  %2477 = vmatprep.subr.mxu0 0.0
  %2478 = vmatpush1.xpose.msra.mxu0 0.0
  %2479 = vmatprep.subr.mxu0 0.0
  %2480 = vmatpush1.xpose.msra.mxu0 0.0
  %2481 = vmatprep.subr.mxu0 0.0
  %2482 = vmatpush1.xpose.msra.mxu0 0.0
  %2483 = vmatprep.subr.mxu0 0.0
  %2484 = vmatpush1.xpose.msra.mxu0 0.0
  %2485 = vmatprep.subr.mxu0 0.0
  %2486 = vmatpush1.xpose.msra.mxu0 0.0
  %2487 = vmatprep.subr.mxu0 0.0
  %2488 = vmatpush1.xpose.msra.mxu0 0.0
  %2489 = vmatprep.mubr.f32.mxu0 0.0
  %2490 = vmatmul.mubr.f32.gmra.mrb[0].mxu0 %v2421
  %v2491 = vpop.f32.mrb[0].mxu0
  %v2492 = vadd.f32 %v174, %v2491
  %v2493 = vpop.f32.mrb[0].mxu0
  %2494 = vdwg.mxu0
  %2495 = vrot.lane.b32.xlu0 %v2086, 120
  %v2496 = vpop.permute.xlu0 %2495
  %2497 = vrot.lane.b32.xlu0 %v2086, 88
  %v2498 = vpop.permute.xlu0 %2497
  %v2499 = vsel %vm271, %v2496, 0
  %v2501 = vsel %vm271, %v2498, 0
  %2503 = vmatprep.subr.mxu0 0.0
  %2504 = vmatpush1.xpose.msra.mxu0 %v2501
  %2505 = vmatprep.subr.mxu0 0.0
  %2506 = vmatpush1.xpose.msra.mxu0 0.0
  %2507 = vmatprep.subr.mxu0 0.0
  %2508 = vmatpush1.xpose.msra.mxu0 0.0
  %2509 = vmatprep.subr.mxu0 0.0
  %2510 = vmatpush1.xpose.msra.mxu0 0.0
  %2511 = vmatprep.subr.mxu0 0.0
  %2512 = vmatpush1.xpose.msra.mxu0 0.0
  %2513 = vmatprep.subr.mxu0 0.0
  %2514 = vmatpush1.xpose.msra.mxu0 0.0
  %2515 = vmatprep.subr.mxu0 0.0
  %2516 = vmatpush1.xpose.msra.mxu0 0.0
  %2517 = vmatprep.subr.mxu0 0.0
  %2518 = vmatpush1.xpose.msra.mxu0 0.0
  %2519 = vmatprep.subr.mxu0 0.0
  %2520 = vmatpush1.xpose.msra.mxu0 0.0
  %2521 = vmatprep.subr.mxu0 0.0
  %2522 = vmatpush1.xpose.msra.mxu0 0.0
  %2523 = vmatprep.subr.mxu0 0.0
  %2524 = vmatpush1.xpose.msra.mxu0 0.0
  %2525 = vmatprep.subr.mxu0 0.0
  %2526 = vmatpush1.xpose.msra.mxu0 0.0
  %2527 = vmatprep.subr.mxu0 0.0
  %2528 = vmatpush1.xpose.msra.mxu0 0.0
  %2529 = vmatprep.subr.mxu0 0.0
  %2530 = vmatpush1.xpose.msra.mxu0 0.0
  %2531 = vmatprep.subr.mxu0 0.0
  %2532 = vmatpush1.xpose.msra.mxu0 0.0
  %2533 = vmatprep.subr.mxu0 0.0
  %2534 = vmatpush1.xpose.msra.mxu0 0.0
  %2535 = vmatprep.subr.mxu0 0.0
  %2536 = vmatpush1.xpose.msra.mxu0 0.0
  %2537 = vmatprep.subr.mxu0 0.0
  %2538 = vmatpush1.xpose.msra.mxu0 0.0
  %2539 = vmatprep.subr.mxu0 0.0
  %2540 = vmatpush1.xpose.msra.mxu0 0.0
  %2541 = vmatprep.subr.mxu0 0.0
  %2542 = vmatpush1.xpose.msra.mxu0 0.0
  %2543 = vmatprep.subr.mxu0 0.0
  %2544 = vmatpush1.xpose.msra.mxu0 0.0
  %2545 = vmatprep.subr.mxu0 0.0
  %2546 = vmatpush1.xpose.msra.mxu0 0.0
  %2547 = vmatprep.subr.mxu0 0.0
  %2548 = vmatpush1.xpose.msra.mxu0 0.0
  %2549 = vmatprep.subr.mxu0 0.0
  %2550 = vmatpush1.xpose.msra.mxu0 0.0
  %2551 = vmatprep.subr.mxu0 0.0
  %2552 = vmatpush1.xpose.msra.mxu0 0.0
  %2553 = vmatprep.subr.mxu0 0.0
  %2554 = vmatpush1.xpose.msra.mxu0 0.0
  %2555 = vmatprep.subr.mxu0 0.0
  %2556 = vmatpush1.xpose.msra.mxu0 0.0
  %2557 = vmatprep.subr.mxu0 0.0
  %2558 = vmatpush1.xpose.msra.mxu0 0.0
  %2559 = vmatprep.subr.mxu0 0.0
  %2560 = vmatpush1.xpose.msra.mxu0 0.0
  %2561 = vmatprep.subr.mxu0 0.0
  %2562 = vmatpush1.xpose.msra.mxu0 0.0
  %2563 = vmatprep.subr.mxu0 0.0
  %2564 = vmatpush1.xpose.msra.mxu0 0.0
  %2565 = vmatprep.subr.mxu0 0.0
  %2566 = vmatpush1.xpose.msra.mxu0 0.0
  %2567 = vmatprep.mubr.f32.mxu0 0.0
  %2568 = vmatmul.mubr.f32.gmra.mrb[0].mxu0 %v2499
  %v2569 = vpop.f32.mrb[0].mxu0
  %v2570 = vadd.f32 %v174, %v2569
  %v2571 = vpop.f32.mrb[0].mxu0
  %2572 = vdwg.mxu0
  %v2573 = vsel %vm271, %v2492, -inf
  %2574 = vmax.xlane.f32.xlu0 %v2573
  %v2575 = vpop.xlane.xlu0 %2574
  %v2576 = vsel %vm271, %v2570, -inf
  %2577 = vmax.xlane.f32.xlu0 %v2576
  %v2578 = vpop.xlane.xlu0 %2577
  %v2579 = vsub.f32 %v2492, %v2575
  %v2580 = vsub.f32 %v2570, %v2578
  %v2581 = vmul.f32 %v2579, 1.442695
  %v2582 = vpow.pop %v2581
  %v2583 = vmul.f32 %v2580, 1.442695
  %v2584 = vpow.pop %v2583
  %v2585 = vsel %vm271, %v2582, 0.0
  %2586 = vadd.xlane.f32.xlu0 %v2585
  %v2587 = vpop.xlane.xlu0 %2586
  %v2588 = vsel %vm271, %v2584, 0.0
  %2589 = vadd.xlane.f32.xlu0 %v2588
  %v2590 = vpop.xlane.xlu0 %2589
  %v2591 = vrcp.pop %v2587
  %v2592 = vmul.f32 %v2582, %v2591
  %v2593 = vrcp.pop %v2590
  %v2594 = vmul.f32 %v2584, %v2593
  %2595 = vrot.lane.b32.xlu0 %v2081, 56
  %v2596 = vpop.permute.xlu0 %2595
  %v2599 = vsel %vm271, %v2592, 0
  %2601 = vmatprep.subr.mxu0 0.0
  %2602 = vmatpush1.msra.mxu0 %v2596
  %2603 = vmatprep.subr.mxu0 0.0
  %2604 = vmatpush1.msra.mxu0 0.0
  %2605 = vmatprep.subr.mxu0 0.0
  %2606 = vmatpush1.msra.mxu0 0.0
  %2607 = vmatprep.subr.mxu0 0.0
  %2608 = vmatpush1.msra.mxu0 0.0
  %2609 = vmatprep.subr.mxu0 0.0
  %2610 = vmatpush1.msra.mxu0 0.0
  %2611 = vmatprep.subr.mxu0 0.0
  %2612 = vmatpush1.msra.mxu0 0.0
  %2613 = vmatprep.subr.mxu0 0.0
  %2614 = vmatpush1.msra.mxu0 0.0
  %2615 = vmatprep.subr.mxu0 0.0
  %2616 = vmatpush1.msra.mxu0 0.0
  %2617 = vmatprep.subr.mxu0 0.0
  %2618 = vmatpush1.msra.mxu0 0.0
  %2619 = vmatprep.subr.mxu0 0.0
  %2620 = vmatpush1.msra.mxu0 0.0
  %2621 = vmatprep.subr.mxu0 0.0
  %2622 = vmatpush1.msra.mxu0 0.0
  %2623 = vmatprep.subr.mxu0 0.0
  %2624 = vmatpush1.msra.mxu0 0.0
  %2625 = vmatprep.subr.mxu0 0.0
  %2626 = vmatpush1.msra.mxu0 0.0
  %2627 = vmatprep.subr.mxu0 0.0
  %2628 = vmatpush1.msra.mxu0 0.0
  %2629 = vmatprep.subr.mxu0 0.0
  %2630 = vmatpush1.msra.mxu0 0.0
  %2631 = vmatprep.subr.mxu0 0.0
  %2632 = vmatpush1.msra.mxu0 0.0
  %2633 = vmatprep.subr.mxu0 0.0
  %2634 = vmatpush1.msra.mxu0 0.0
  %2635 = vmatprep.subr.mxu0 0.0
  %2636 = vmatpush1.msra.mxu0 0.0
  %2637 = vmatprep.subr.mxu0 0.0
  %2638 = vmatpush1.msra.mxu0 0.0
  %2639 = vmatprep.subr.mxu0 0.0
  %2640 = vmatpush1.msra.mxu0 0.0
  %2641 = vmatprep.subr.mxu0 0.0
  %2642 = vmatpush1.msra.mxu0 0.0
  %2643 = vmatprep.subr.mxu0 0.0
  %2644 = vmatpush1.msra.mxu0 0.0
  %2645 = vmatprep.subr.mxu0 0.0
  %2646 = vmatpush1.msra.mxu0 0.0
  %2647 = vmatprep.subr.mxu0 0.0
  %2648 = vmatpush1.msra.mxu0 0.0
  %2649 = vmatprep.subr.mxu0 0.0
  %2650 = vmatpush1.msra.mxu0 0.0
  %2651 = vmatprep.subr.mxu0 0.0
  %2652 = vmatpush1.msra.mxu0 0.0
  %2653 = vmatprep.subr.mxu0 0.0
  %2654 = vmatpush1.msra.mxu0 0.0
  %2655 = vmatprep.subr.mxu0 0.0
  %2656 = vmatpush1.msra.mxu0 0.0
  %2657 = vmatprep.subr.mxu0 0.0
  %2658 = vmatpush1.msra.mxu0 0.0
  %2659 = vmatprep.subr.mxu0 0.0
  %2660 = vmatpush1.msra.mxu0 0.0
  %2661 = vmatprep.subr.mxu0 0.0
  %2662 = vmatpush1.msra.mxu0 0.0
  %2663 = vmatprep.subr.mxu0 0.0
  %2664 = vmatpush1.msra.mxu0 0.0
  %2665 = vmatprep.mubr.f32.mxu0 0.0
  %2666 = vmatmul.mubr.f32.gmra.mrb[0].mxu0 %v2599
  %v2667 = vpop.f32.mrb[0].mxu0
  %v2668 = vadd.f32 0.0, %v2667
  %v2669 = vpop.f32.mrb[0].mxu0
  %2670 = vdwg.mxu0
  %2671 = vrot.lane.b32.xlu0 %v2086, 56
  %v2672 = vpop.permute.xlu0 %2671
  %v2675 = vsel %vm271, %v2594, 0
  %2677 = vmatprep.subr.mxu0 0.0
  %2678 = vmatpush1.msra.mxu0 %v2672
  %2679 = vmatprep.subr.mxu0 0.0
  %2680 = vmatpush1.msra.mxu0 0.0
  %2681 = vmatprep.subr.mxu0 0.0
  %2682 = vmatpush1.msra.mxu0 0.0
  %2683 = vmatprep.subr.mxu0 0.0
  %2684 = vmatpush1.msra.mxu0 0.0
  %2685 = vmatprep.subr.mxu0 0.0
  %2686 = vmatpush1.msra.mxu0 0.0
  %2687 = vmatprep.subr.mxu0 0.0
  %2688 = vmatpush1.msra.mxu0 0.0
  %2689 = vmatprep.subr.mxu0 0.0
  %2690 = vmatpush1.msra.mxu0 0.0
  %2691 = vmatprep.subr.mxu0 0.0
  %2692 = vmatpush1.msra.mxu0 0.0
  %2693 = vmatprep.subr.mxu0 0.0
  %2694 = vmatpush1.msra.mxu0 0.0
  %2695 = vmatprep.subr.mxu0 0.0
  %2696 = vmatpush1.msra.mxu0 0.0
  %2697 = vmatprep.subr.mxu0 0.0
  %2698 = vmatpush1.msra.mxu0 0.0
  %2699 = vmatprep.subr.mxu0 0.0
  %2700 = vmatpush1.msra.mxu0 0.0
  %2701 = vmatprep.subr.mxu0 0.0
  %2702 = vmatpush1.msra.mxu0 0.0
  %2703 = vmatprep.subr.mxu0 0.0
  %2704 = vmatpush1.msra.mxu0 0.0
  %2705 = vmatprep.subr.mxu0 0.0
  %2706 = vmatpush1.msra.mxu0 0.0
  %2707 = vmatprep.subr.mxu0 0.0
  %2708 = vmatpush1.msra.mxu0 0.0
  %2709 = vmatprep.subr.mxu0 0.0
  %2710 = vmatpush1.msra.mxu0 0.0
  %2711 = vmatprep.subr.mxu0 0.0
  %2712 = vmatpush1.msra.mxu0 0.0
  %2713 = vmatprep.subr.mxu0 0.0
  %2714 = vmatpush1.msra.mxu0 0.0
  %2715 = vmatprep.subr.mxu0 0.0
  %2716 = vmatpush1.msra.mxu0 0.0
  %2717 = vmatprep.subr.mxu0 0.0
  %2718 = vmatpush1.msra.mxu0 0.0
  %2719 = vmatprep.subr.mxu0 0.0
  %2720 = vmatpush1.msra.mxu0 0.0
  %2721 = vmatprep.subr.mxu0 0.0
  %2722 = vmatpush1.msra.mxu0 0.0
  %2723 = vmatprep.subr.mxu0 0.0
  %2724 = vmatpush1.msra.mxu0 0.0
  %2725 = vmatprep.subr.mxu0 0.0
  %2726 = vmatpush1.msra.mxu0 0.0
  %2727 = vmatprep.subr.mxu0 0.0
  %2728 = vmatpush1.msra.mxu0 0.0
  %2729 = vmatprep.subr.mxu0 0.0
  %2730 = vmatpush1.msra.mxu0 0.0
  %2731 = vmatprep.subr.mxu0 0.0
  %2732 = vmatpush1.msra.mxu0 0.0
  %2733 = vmatprep.subr.mxu0 0.0
  %2734 = vmatpush1.msra.mxu0 0.0
  %2735 = vmatprep.subr.mxu0 0.0
  %2736 = vmatpush1.msra.mxu0 0.0
  %2737 = vmatprep.subr.mxu0 0.0
  %2738 = vmatpush1.msra.mxu0 0.0
  %2739 = vmatprep.subr.mxu0 0.0
  %2740 = vmatpush1.msra.mxu0 0.0
  %2741 = vmatprep.mubr.f32.mxu0 0.0
  %2742 = vmatmul.mubr.f32.gmra.mrb[0].mxu0 %v2675
  %v2743 = vpop.f32.mrb[0].mxu0
  %v2744 = vadd.f32 0.0, %v2743
  %v2745 = vpop.f32.mrb[0].mxu0
  %2746 = vdwg.mxu0
  %2747 = vrot.lane.b32.xlu0 %v2081, 112
  %v2748 = vpop.permute.xlu0 %2747
  %2749 = vrot.lane.b32.xlu0 %v2081, 80
  %v2750 = vpop.permute.xlu0 %2749
  %v2751 = vsel %vm271, %v2748, 0
  %v2753 = vsel %vm271, %v2750, 0
  %2755 = vmatprep.subr.mxu0 0.0
  %2756 = vmatpush1.xpose.msra.mxu0 %v2753
  %2757 = vmatprep.subr.mxu0 0.0
  %2758 = vmatpush1.xpose.msra.mxu0 0.0
  %2759 = vmatprep.subr.mxu0 0.0
  %2760 = vmatpush1.xpose.msra.mxu0 0.0
  %2761 = vmatprep.subr.mxu0 0.0
  %2762 = vmatpush1.xpose.msra.mxu0 0.0
  %2763 = vmatprep.subr.mxu0 0.0
  %2764 = vmatpush1.xpose.msra.mxu0 0.0
  %2765 = vmatprep.subr.mxu0 0.0
  %2766 = vmatpush1.xpose.msra.mxu0 0.0
  %2767 = vmatprep.subr.mxu0 0.0
  %2768 = vmatpush1.xpose.msra.mxu0 0.0
  %2769 = vmatprep.subr.mxu0 0.0
  %2770 = vmatpush1.xpose.msra.mxu0 0.0
  %2771 = vmatprep.subr.mxu0 0.0
  %2772 = vmatpush1.xpose.msra.mxu0 0.0
  %2773 = vmatprep.subr.mxu0 0.0
  %2774 = vmatpush1.xpose.msra.mxu0 0.0
  %2775 = vmatprep.subr.mxu0 0.0
  %2776 = vmatpush1.xpose.msra.mxu0 0.0
  %2777 = vmatprep.subr.mxu0 0.0
  %2778 = vmatpush1.xpose.msra.mxu0 0.0
  %2779 = vmatprep.subr.mxu0 0.0
  %2780 = vmatpush1.xpose.msra.mxu0 0.0
  %2781 = vmatprep.subr.mxu0 0.0
  %2782 = vmatpush1.xpose.msra.mxu0 0.0
  %2783 = vmatprep.subr.mxu0 0.0
  %2784 = vmatpush1.xpose.msra.mxu0 0.0
  %2785 = vmatprep.subr.mxu0 0.0
  %2786 = vmatpush1.xpose.msra.mxu0 0.0
  %2787 = vmatprep.subr.mxu0 0.0
  %2788 = vmatpush1.xpose.msra.mxu0 0.0
  %2789 = vmatprep.subr.mxu0 0.0
  %2790 = vmatpush1.xpose.msra.mxu0 0.0
  %2791 = vmatprep.subr.mxu0 0.0
  %2792 = vmatpush1.xpose.msra.mxu0 0.0
  %2793 = vmatprep.subr.mxu0 0.0
  %2794 = vmatpush1.xpose.msra.mxu0 0.0
  %2795 = vmatprep.subr.mxu0 0.0
  %2796 = vmatpush1.xpose.msra.mxu0 0.0
  %2797 = vmatprep.subr.mxu0 0.0
  %2798 = vmatpush1.xpose.msra.mxu0 0.0
  %2799 = vmatprep.subr.mxu0 0.0
  %2800 = vmatpush1.xpose.msra.mxu0 0.0
  %2801 = vmatprep.subr.mxu0 0.0
  %2802 = vmatpush1.xpose.msra.mxu0 0.0
  %2803 = vmatprep.subr.mxu0 0.0
  %2804 = vmatpush1.xpose.msra.mxu0 0.0
  %2805 = vmatprep.subr.mxu0 0.0
  %2806 = vmatpush1.xpose.msra.mxu0 0.0
  %2807 = vmatprep.subr.mxu0 0.0
  %2808 = vmatpush1.xpose.msra.mxu0 0.0
  %2809 = vmatprep.subr.mxu0 0.0
  %2810 = vmatpush1.xpose.msra.mxu0 0.0
  %2811 = vmatprep.subr.mxu0 0.0
  %2812 = vmatpush1.xpose.msra.mxu0 0.0
  %2813 = vmatprep.subr.mxu0 0.0
  %2814 = vmatpush1.xpose.msra.mxu0 0.0
  %2815 = vmatprep.subr.mxu0 0.0
  %2816 = vmatpush1.xpose.msra.mxu0 0.0
  %2817 = vmatprep.subr.mxu0 0.0
  %2818 = vmatpush1.xpose.msra.mxu0 0.0
  %2819 = vmatprep.mubr.f32.mxu0 0.0
  %2820 = vmatmul.mubr.f32.gmra.mrb[0].mxu0 %v2751
  %v2821 = vpop.f32.mrb[0].mxu0
  %v2822 = vadd.f32 %v174, %v2821
  %v2823 = vpop.f32.mrb[0].mxu0
  %2824 = vdwg.mxu0
  %2825 = vrot.lane.b32.xlu0 %v2086, 112
  %v2826 = vpop.permute.xlu0 %2825
  %2827 = vrot.lane.b32.xlu0 %v2086, 80
  %v2828 = vpop.permute.xlu0 %2827
  %v2829 = vsel %vm271, %v2826, 0
  %v2831 = vsel %vm271, %v2828, 0
  %2833 = vmatprep.subr.mxu0 0.0
  %2834 = vmatpush1.xpose.msra.mxu0 %v2831
  %2835 = vmatprep.subr.mxu0 0.0
  %2836 = vmatpush1.xpose.msra.mxu0 0.0
  %2837 = vmatprep.subr.mxu0 0.0
  %2838 = vmatpush1.xpose.msra.mxu0 0.0
  %2839 = vmatprep.subr.mxu0 0.0
  %2840 = vmatpush1.xpose.msra.mxu0 0.0
  %2841 = vmatprep.subr.mxu0 0.0
  %2842 = vmatpush1.xpose.msra.mxu0 0.0
  %2843 = vmatprep.subr.mxu0 0.0
  %2844 = vmatpush1.xpose.msra.mxu0 0.0
  %2845 = vmatprep.subr.mxu0 0.0
  %2846 = vmatpush1.xpose.msra.mxu0 0.0
  %2847 = vmatprep.subr.mxu0 0.0
  %2848 = vmatpush1.xpose.msra.mxu0 0.0
  %2849 = vmatprep.subr.mxu0 0.0
  %2850 = vmatpush1.xpose.msra.mxu0 0.0
  %2851 = vmatprep.subr.mxu0 0.0
  %2852 = vmatpush1.xpose.msra.mxu0 0.0
  %2853 = vmatprep.subr.mxu0 0.0
  %2854 = vmatpush1.xpose.msra.mxu0 0.0
  %2855 = vmatprep.subr.mxu0 0.0
  %2856 = vmatpush1.xpose.msra.mxu0 0.0
  %2857 = vmatprep.subr.mxu0 0.0
  %2858 = vmatpush1.xpose.msra.mxu0 0.0
  %2859 = vmatprep.subr.mxu0 0.0
  %2860 = vmatpush1.xpose.msra.mxu0 0.0
  %2861 = vmatprep.subr.mxu0 0.0
  %2862 = vmatpush1.xpose.msra.mxu0 0.0
  %2863 = vmatprep.subr.mxu0 0.0
  %2864 = vmatpush1.xpose.msra.mxu0 0.0
  %2865 = vmatprep.subr.mxu0 0.0
  %2866 = vmatpush1.xpose.msra.mxu0 0.0
  %2867 = vmatprep.subr.mxu0 0.0
  %2868 = vmatpush1.xpose.msra.mxu0 0.0
  %2869 = vmatprep.subr.mxu0 0.0
  %2870 = vmatpush1.xpose.msra.mxu0 0.0
  %2871 = vmatprep.subr.mxu0 0.0
  %2872 = vmatpush1.xpose.msra.mxu0 0.0
  %2873 = vmatprep.subr.mxu0 0.0
  %2874 = vmatpush1.xpose.msra.mxu0 0.0
  %2875 = vmatprep.subr.mxu0 0.0
  %2876 = vmatpush1.xpose.msra.mxu0 0.0
  %2877 = vmatprep.subr.mxu0 0.0
  %2878 = vmatpush1.xpose.msra.mxu0 0.0
  %2879 = vmatprep.subr.mxu0 0.0
  %2880 = vmatpush1.xpose.msra.mxu0 0.0
  %2881 = vmatprep.subr.mxu0 0.0
  %2882 = vmatpush1.xpose.msra.mxu0 0.0
  %2883 = vmatprep.subr.mxu0 0.0
  %2884 = vmatpush1.xpose.msra.mxu0 0.0
  %2885 = vmatprep.subr.mxu0 0.0
  %2886 = vmatpush1.xpose.msra.mxu0 0.0
  %2887 = vmatprep.subr.mxu0 0.0
  %2888 = vmatpush1.xpose.msra.mxu0 0.0
  %2889 = vmatprep.subr.mxu0 0.0
  %2890 = vmatpush1.xpose.msra.mxu0 0.0
  %2891 = vmatprep.subr.mxu0 0.0
  %2892 = vmatpush1.xpose.msra.mxu0 0.0
  %2893 = vmatprep.subr.mxu0 0.0
  %2894 = vmatpush1.xpose.msra.mxu0 0.0
  %2895 = vmatprep.subr.mxu0 0.0
  %2896 = vmatpush1.xpose.msra.mxu0 0.0
  %2897 = vmatprep.mubr.f32.mxu0 0.0
  %2898 = vmatmul.mubr.f32.gmra.mrb[0].mxu0 %v2829
  %v2899 = vpop.f32.mrb[0].mxu0
  %v2900 = vadd.f32 %v174, %v2899
  %v2901 = vpop.f32.mrb[0].mxu0
  %2902 = vdwg.mxu0
  %v2903 = vsel %vm271, %v2822, -inf
  %2904 = vmax.xlane.f32.xlu0 %v2903
  %v2905 = vpop.xlane.xlu0 %2904
  %v2906 = vsel %vm271, %v2900, -inf
  %2907 = vmax.xlane.f32.xlu0 %v2906
  %v2908 = vpop.xlane.xlu0 %2907
  %v2909 = vsub.f32 %v2822, %v2905
  %v2910 = vsub.f32 %v2900, %v2908
  %v2911 = vmul.f32 %v2909, 1.442695
  %v2912 = vpow.pop %v2911
  %v2913 = vmul.f32 %v2910, 1.442695
  %v2914 = vpow.pop %v2913
  %v2915 = vsel %vm271, %v2912, 0.0
  %2916 = vadd.xlane.f32.xlu0 %v2915
  %v2917 = vpop.xlane.xlu0 %2916
  %v2918 = vsel %vm271, %v2914, 0.0
  %2919 = vadd.xlane.f32.xlu0 %v2918
  %v2920 = vpop.xlane.xlu0 %2919
  %v2921 = vrcp.pop %v2917
  %v2922 = vmul.f32 %v2912, %v2921
  %v2923 = vrcp.pop %v2920
  %v2924 = vmul.f32 %v2914, %v2923
  %2925 = vrot.lane.b32.xlu0 %v2081, 48
  %v2926 = vpop.permute.xlu0 %2925
  %v2929 = vsel %vm271, %v2922, 0
  %2931 = vmatprep.subr.mxu0 0.0
  %2932 = vmatpush1.msra.mxu0 %v2926
  %2933 = vmatprep.subr.mxu0 0.0
  %2934 = vmatpush1.msra.mxu0 0.0
  %2935 = vmatprep.subr.mxu0 0.0
  %2936 = vmatpush1.msra.mxu0 0.0
  %2937 = vmatprep.subr.mxu0 0.0
  %2938 = vmatpush1.msra.mxu0 0.0
  %2939 = vmatprep.subr.mxu0 0.0
  %2940 = vmatpush1.msra.mxu0 0.0
  %2941 = vmatprep.subr.mxu0 0.0
  %2942 = vmatpush1.msra.mxu0 0.0
  %2943 = vmatprep.subr.mxu0 0.0
  %2944 = vmatpush1.msra.mxu0 0.0
  %2945 = vmatprep.subr.mxu0 0.0
  %2946 = vmatpush1.msra.mxu0 0.0
  %2947 = vmatprep.subr.mxu0 0.0
  %2948 = vmatpush1.msra.mxu0 0.0
  %2949 = vmatprep.subr.mxu0 0.0
  %2950 = vmatpush1.msra.mxu0 0.0
  %2951 = vmatprep.subr.mxu0 0.0
  %2952 = vmatpush1.msra.mxu0 0.0
  %2953 = vmatprep.subr.mxu0 0.0
  %2954 = vmatpush1.msra.mxu0 0.0
  %2955 = vmatprep.subr.mxu0 0.0
  %2956 = vmatpush1.msra.mxu0 0.0
  %2957 = vmatprep.subr.mxu0 0.0
  %2958 = vmatpush1.msra.mxu0 0.0
  %2959 = vmatprep.subr.mxu0 0.0
  %2960 = vmatpush1.msra.mxu0 0.0
  %2961 = vmatprep.subr.mxu0 0.0
  %2962 = vmatpush1.msra.mxu0 0.0
  %2963 = vmatprep.subr.mxu0 0.0
  %2964 = vmatpush1.msra.mxu0 0.0
  %2965 = vmatprep.subr.mxu0 0.0
  %2966 = vmatpush1.msra.mxu0 0.0
  %2967 = vmatprep.subr.mxu0 0.0
  %2968 = vmatpush1.msra.mxu0 0.0
  %2969 = vmatprep.subr.mxu0 0.0
  %2970 = vmatpush1.msra.mxu0 0.0
  %2971 = vmatprep.subr.mxu0 0.0
  %2972 = vmatpush1.msra.mxu0 0.0
  %2973 = vmatprep.subr.mxu0 0.0
  %2974 = vmatpush1.msra.mxu0 0.0
  %2975 = vmatprep.subr.mxu0 0.0
  %2976 = vmatpush1.msra.mxu0 0.0
  %2977 = vmatprep.subr.mxu0 0.0
  %2978 = vmatpush1.msra.mxu0 0.0
  %2979 = vmatprep.subr.mxu0 0.0
  %2980 = vmatpush1.msra.mxu0 0.0
  %2981 = vmatprep.subr.mxu0 0.0
  %2982 = vmatpush1.msra.mxu0 0.0
  %2983 = vmatprep.subr.mxu0 0.0
  %2984 = vmatpush1.msra.mxu0 0.0
  %2985 = vmatprep.subr.mxu0 0.0
  %2986 = vmatpush1.msra.mxu0 0.0
  %2987 = vmatprep.subr.mxu0 0.0
  %2988 = vmatpush1.msra.mxu0 0.0
  %2989 = vmatprep.subr.mxu0 0.0
  %2990 = vmatpush1.msra.mxu0 0.0
  %2991 = vmatprep.subr.mxu0 0.0
  %2992 = vmatpush1.msra.mxu0 0.0
  %2993 = vmatprep.subr.mxu0 0.0
  %2994 = vmatpush1.msra.mxu0 0.0
  %2995 = vmatprep.mubr.f32.mxu0 0.0
  %2996 = vmatmul.mubr.f32.gmra.mrb[0].mxu0 %v2929
  %v2997 = vpop.f32.mrb[0].mxu0
  %v2998 = vadd.f32 0.0, %v2997
  %v2999 = vpop.f32.mrb[0].mxu0
  %3000 = vdwg.mxu0
  %3001 = vrot.lane.b32.xlu0 %v2086, 48
  %v3002 = vpop.permute.xlu0 %3001
  %v3005 = vsel %vm271, %v2924, 0
  %3007 = vmatprep.subr.mxu0 0.0
  %3008 = vmatpush1.msra.mxu0 %v3002
  %3009 = vmatprep.subr.mxu0 0.0
  %3010 = vmatpush1.msra.mxu0 0.0
  %3011 = vmatprep.subr.mxu0 0.0
  %3012 = vmatpush1.msra.mxu0 0.0
  %3013 = vmatprep.subr.mxu0 0.0
  %3014 = vmatpush1.msra.mxu0 0.0
  %3015 = vmatprep.subr.mxu0 0.0
  %3016 = vmatpush1.msra.mxu0 0.0
  %3017 = vmatprep.subr.mxu0 0.0
  %3018 = vmatpush1.msra.mxu0 0.0
  %3019 = vmatprep.subr.mxu0 0.0
  %3020 = vmatpush1.msra.mxu0 0.0
  %3021 = vmatprep.subr.mxu0 0.0
  %3022 = vmatpush1.msra.mxu0 0.0
  %3023 = vmatprep.subr.mxu0 0.0
  %3024 = vmatpush1.msra.mxu0 0.0
  %3025 = vmatprep.subr.mxu0 0.0
  %3026 = vmatpush1.msra.mxu0 0.0
  %3027 = vmatprep.subr.mxu0 0.0
  %3028 = vmatpush1.msra.mxu0 0.0
  %3029 = vmatprep.subr.mxu0 0.0
  %3030 = vmatpush1.msra.mxu0 0.0
  %3031 = vmatprep.subr.mxu0 0.0
  %3032 = vmatpush1.msra.mxu0 0.0
  %3033 = vmatprep.subr.mxu0 0.0
  %3034 = vmatpush1.msra.mxu0 0.0
  %3035 = vmatprep.subr.mxu0 0.0
  %3036 = vmatpush1.msra.mxu0 0.0
  %3037 = vmatprep.subr.mxu0 0.0
  %3038 = vmatpush1.msra.mxu0 0.0
  %3039 = vmatprep.subr.mxu0 0.0
  %3040 = vmatpush1.msra.mxu0 0.0
  %3041 = vmatprep.subr.mxu0 0.0
  %3042 = vmatpush1.msra.mxu0 0.0
  %3043 = vmatprep.subr.mxu0 0.0
  %3044 = vmatpush1.msra.mxu0 0.0
  %3045 = vmatprep.subr.mxu0 0.0
  %3046 = vmatpush1.msra.mxu0 0.0
  %3047 = vmatprep.subr.mxu0 0.0
  %3048 = vmatpush1.msra.mxu0 0.0
  %3049 = vmatprep.subr.mxu0 0.0
  %3050 = vmatpush1.msra.mxu0 0.0
  %3051 = vmatprep.subr.mxu0 0.0
  %3052 = vmatpush1.msra.mxu0 0.0
  %3053 = vmatprep.subr.mxu0 0.0
  %3054 = vmatpush1.msra.mxu0 0.0
  %3055 = vmatprep.subr.mxu0 0.0
  %3056 = vmatpush1.msra.mxu0 0.0
  %3057 = vmatprep.subr.mxu0 0.0
  %3058 = vmatpush1.msra.mxu0 0.0
  %3059 = vmatprep.subr.mxu0 0.0
  %3060 = vmatpush1.msra.mxu0 0.0
  %3061 = vmatprep.subr.mxu0 0.0
  %3062 = vmatpush1.msra.mxu0 0.0
  %3063 = vmatprep.subr.mxu0 0.0
  %3064 = vmatpush1.msra.mxu0 0.0
  %3065 = vmatprep.subr.mxu0 0.0
  %3066 = vmatpush1.msra.mxu0 0.0
  %3067 = vmatprep.subr.mxu0 0.0
  %3068 = vmatpush1.msra.mxu0 0.0
  %3069 = vmatprep.subr.mxu0 0.0
  %3070 = vmatpush1.msra.mxu0 0.0
  %3071 = vmatprep.mubr.f32.mxu0 0.0
  %3072 = vmatmul.mubr.f32.gmra.mrb[0].mxu0 %v3005
  %v3073 = vpop.f32.mrb[0].mxu0
  %v3074 = vadd.f32 0.0, %v3073
  %v3075 = vpop.f32.mrb[0].mxu0
  %3076 = vdwg.mxu0
  %3077 = vrot.lane.b32.xlu0 %v2081, 104
  %v3078 = vpop.permute.xlu0 %3077
  %3079 = vrot.lane.b32.xlu0 %v2081, 72
  %v3080 = vpop.permute.xlu0 %3079
  %v3081 = vsel %vm271, %v3078, 0
  %v3083 = vsel %vm271, %v3080, 0
  %3085 = vmatprep.subr.mxu0 0.0
  %3086 = vmatpush1.xpose.msra.mxu0 %v3083
  %3087 = vmatprep.subr.mxu0 0.0
  %3088 = vmatpush1.xpose.msra.mxu0 0.0
  %3089 = vmatprep.subr.mxu0 0.0
  %3090 = vmatpush1.xpose.msra.mxu0 0.0
  %3091 = vmatprep.subr.mxu0 0.0
  %3092 = vmatpush1.xpose.msra.mxu0 0.0
  %3093 = vmatprep.subr.mxu0 0.0
  %3094 = vmatpush1.xpose.msra.mxu0 0.0
  %3095 = vmatprep.subr.mxu0 0.0
  %3096 = vmatpush1.xpose.msra.mxu0 0.0
  %3097 = vmatprep.subr.mxu0 0.0
  %3098 = vmatpush1.xpose.msra.mxu0 0.0
  %3099 = vmatprep.subr.mxu0 0.0
  %3100 = vmatpush1.xpose.msra.mxu0 0.0
  %3101 = vmatprep.subr.mxu0 0.0
  %3102 = vmatpush1.xpose.msra.mxu0 0.0
  %3103 = vmatprep.subr.mxu0 0.0
  %3104 = vmatpush1.xpose.msra.mxu0 0.0
  %3105 = vmatprep.subr.mxu0 0.0
  %3106 = vmatpush1.xpose.msra.mxu0 0.0
  %3107 = vmatprep.subr.mxu0 0.0
  %3108 = vmatpush1.xpose.msra.mxu0 0.0
  %3109 = vmatprep.subr.mxu0 0.0
  %3110 = vmatpush1.xpose.msra.mxu0 0.0
  %3111 = vmatprep.subr.mxu0 0.0
  %3112 = vmatpush1.xpose.msra.mxu0 0.0
  %3113 = vmatprep.subr.mxu0 0.0
  %3114 = vmatpush1.xpose.msra.mxu0 0.0
  %3115 = vmatprep.subr.mxu0 0.0
  %3116 = vmatpush1.xpose.msra.mxu0 0.0
  %3117 = vmatprep.subr.mxu0 0.0
  %3118 = vmatpush1.xpose.msra.mxu0 0.0
  %3119 = vmatprep.subr.mxu0 0.0
  %3120 = vmatpush1.xpose.msra.mxu0 0.0
  %3121 = vmatprep.subr.mxu0 0.0
  %3122 = vmatpush1.xpose.msra.mxu0 0.0
  %3123 = vmatprep.subr.mxu0 0.0
  %3124 = vmatpush1.xpose.msra.mxu0 0.0
  %3125 = vmatprep.subr.mxu0 0.0
  %3126 = vmatpush1.xpose.msra.mxu0 0.0
  %3127 = vmatprep.subr.mxu0 0.0
  %3128 = vmatpush1.xpose.msra.mxu0 0.0
  %3129 = vmatprep.subr.mxu0 0.0
  %3130 = vmatpush1.xpose.msra.mxu0 0.0
  %3131 = vmatprep.subr.mxu0 0.0
  %3132 = vmatpush1.xpose.msra.mxu0 0.0
  %3133 = vmatprep.subr.mxu0 0.0
  %3134 = vmatpush1.xpose.msra.mxu0 0.0
  %3135 = vmatprep.subr.mxu0 0.0
  %3136 = vmatpush1.xpose.msra.mxu0 0.0
  %3137 = vmatprep.subr.mxu0 0.0
  %3138 = vmatpush1.xpose.msra.mxu0 0.0
  %3139 = vmatprep.subr.mxu0 0.0
  %3140 = vmatpush1.xpose.msra.mxu0 0.0
  %3141 = vmatprep.subr.mxu0 0.0
  %3142 = vmatpush1.xpose.msra.mxu0 0.0
  %3143 = vmatprep.subr.mxu0 0.0
  %3144 = vmatpush1.xpose.msra.mxu0 0.0
  %3145 = vmatprep.subr.mxu0 0.0
  %3146 = vmatpush1.xpose.msra.mxu0 0.0
  %3147 = vmatprep.subr.mxu0 0.0
  %3148 = vmatpush1.xpose.msra.mxu0 0.0
  %3149 = vmatprep.mubr.f32.mxu0 0.0
  %3150 = vmatmul.mubr.f32.gmra.mrb[0].mxu0 %v3081
  %v3151 = vpop.f32.mrb[0].mxu0
  %v3152 = vadd.f32 %v174, %v3151
  %v3153 = vpop.f32.mrb[0].mxu0
  %3154 = vdwg.mxu0
  %3155 = vrot.lane.b32.xlu0 %v2086, 104
  %v3156 = vpop.permute.xlu0 %3155
  %3157 = vrot.lane.b32.xlu0 %v2086, 72
  %v3158 = vpop.permute.xlu0 %3157
  %v3159 = vsel %vm271, %v3156, 0
  %v3161 = vsel %vm271, %v3158, 0
  %3163 = vmatprep.subr.mxu0 0.0
  %3164 = vmatpush1.xpose.msra.mxu0 %v3161
  %3165 = vmatprep.subr.mxu0 0.0
  %3166 = vmatpush1.xpose.msra.mxu0 0.0
  %3167 = vmatprep.subr.mxu0 0.0
  %3168 = vmatpush1.xpose.msra.mxu0 0.0
  %3169 = vmatprep.subr.mxu0 0.0
  %3170 = vmatpush1.xpose.msra.mxu0 0.0
  %3171 = vmatprep.subr.mxu0 0.0
  %3172 = vmatpush1.xpose.msra.mxu0 0.0
  %3173 = vmatprep.subr.mxu0 0.0
  %3174 = vmatpush1.xpose.msra.mxu0 0.0
  %3175 = vmatprep.subr.mxu0 0.0
  %3176 = vmatpush1.xpose.msra.mxu0 0.0
  %3177 = vmatprep.subr.mxu0 0.0
  %3178 = vmatpush1.xpose.msra.mxu0 0.0
  %3179 = vmatprep.subr.mxu0 0.0
  %3180 = vmatpush1.xpose.msra.mxu0 0.0
  %3181 = vmatprep.subr.mxu0 0.0
  %3182 = vmatpush1.xpose.msra.mxu0 0.0
  %3183 = vmatprep.subr.mxu0 0.0
  %3184 = vmatpush1.xpose.msra.mxu0 0.0
  %3185 = vmatprep.subr.mxu0 0.0
  %3186 = vmatpush1.xpose.msra.mxu0 0.0
  %3187 = vmatprep.subr.mxu0 0.0
  %3188 = vmatpush1.xpose.msra.mxu0 0.0
  %3189 = vmatprep.subr.mxu0 0.0
  %3190 = vmatpush1.xpose.msra.mxu0 0.0
  %3191 = vmatprep.subr.mxu0 0.0
  %3192 = vmatpush1.xpose.msra.mxu0 0.0
  %3193 = vmatprep.subr.mxu0 0.0
  %3194 = vmatpush1.xpose.msra.mxu0 0.0
  %3195 = vmatprep.subr.mxu0 0.0
  %3196 = vmatpush1.xpose.msra.mxu0 0.0
  %3197 = vmatprep.subr.mxu0 0.0
  %3198 = vmatpush1.xpose.msra.mxu0 0.0
  %3199 = vmatprep.subr.mxu0 0.0
  %3200 = vmatpush1.xpose.msra.mxu0 0.0
  %3201 = vmatprep.subr.mxu0 0.0
  %3202 = vmatpush1.xpose.msra.mxu0 0.0
  %3203 = vmatprep.subr.mxu0 0.0
  %3204 = vmatpush1.xpose.msra.mxu0 0.0
  %3205 = vmatprep.subr.mxu0 0.0
  %3206 = vmatpush1.xpose.msra.mxu0 0.0
  %3207 = vmatprep.subr.mxu0 0.0
  %3208 = vmatpush1.xpose.msra.mxu0 0.0
  %3209 = vmatprep.subr.mxu0 0.0
  %3210 = vmatpush1.xpose.msra.mxu0 0.0
  %3211 = vmatprep.subr.mxu0 0.0
  %3212 = vmatpush1.xpose.msra.mxu0 0.0
  %3213 = vmatprep.subr.mxu0 0.0
  %3214 = vmatpush1.xpose.msra.mxu0 0.0
  %3215 = vmatprep.subr.mxu0 0.0
  %3216 = vmatpush1.xpose.msra.mxu0 0.0
  %3217 = vmatprep.subr.mxu0 0.0
  %3218 = vmatpush1.xpose.msra.mxu0 0.0
  %3219 = vmatprep.subr.mxu0 0.0
  %3220 = vmatpush1.xpose.msra.mxu0 0.0
  %3221 = vmatprep.subr.mxu0 0.0
  %3222 = vmatpush1.xpose.msra.mxu0 0.0
  %3223 = vmatprep.subr.mxu0 0.0
  %3224 = vmatpush1.xpose.msra.mxu0 0.0
  %3225 = vmatprep.subr.mxu0 0.0
  %3226 = vmatpush1.xpose.msra.mxu0 0.0
  %3227 = vmatprep.mubr.f32.mxu0 0.0
  %3228 = vmatmul.mubr.f32.gmra.mrb[0].mxu0 %v3159
  %v3229 = vpop.f32.mrb[0].mxu0
  %v3230 = vadd.f32 %v174, %v3229
  %v3231 = vpop.f32.mrb[0].mxu0
  %3232 = vdwg.mxu0
  %v3233 = vsel %vm271, %v3152, -inf
  %3234 = vmax.xlane.f32.xlu0 %v3233
  %v3235 = vpop.xlane.xlu0 %3234
  %v3236 = vsel %vm271, %v3230, -inf
  %3237 = vmax.xlane.f32.xlu0 %v3236
  %v3238 = vpop.xlane.xlu0 %3237
  %v3239 = vsub.f32 %v3152, %v3235
  %v3240 = vsub.f32 %v3230, %v3238
  %v3241 = vmul.f32 %v3239, 1.442695
  %v3242 = vpow.pop %v3241
  %v3243 = vmul.f32 %v3240, 1.442695
  %v3244 = vpow.pop %v3243
  %v3245 = vsel %vm271, %v3242, 0.0
  %3246 = vadd.xlane.f32.xlu0 %v3245
  %v3247 = vpop.xlane.xlu0 %3246
  %v3248 = vsel %vm271, %v3244, 0.0
  %3249 = vadd.xlane.f32.xlu0 %v3248
  %v3250 = vpop.xlane.xlu0 %3249
  %v3251 = vrcp.pop %v3247
  %v3252 = vmul.f32 %v3242, %v3251
  %v3253 = vrcp.pop %v3250
  %v3254 = vmul.f32 %v3244, %v3253
  %3255 = vrot.lane.b32.xlu0 %v2081, 40
  %v3256 = vpop.permute.xlu0 %3255
  %v3259 = vsel %vm271, %v3252, 0
  %3261 = vmatprep.subr.mxu0 0.0
  %3262 = vmatpush1.msra.mxu0 %v3256
  %3263 = vmatprep.subr.mxu0 0.0
  %3264 = vmatpush1.msra.mxu0 0.0
  %3265 = vmatprep.subr.mxu0 0.0
  %3266 = vmatpush1.msra.mxu0 0.0
  %3267 = vmatprep.subr.mxu0 0.0
  %3268 = vmatpush1.msra.mxu0 0.0
  %3269 = vmatprep.subr.mxu0 0.0
  %3270 = vmatpush1.msra.mxu0 0.0
  %3271 = vmatprep.subr.mxu0 0.0
  %3272 = vmatpush1.msra.mxu0 0.0
  %3273 = vmatprep.subr.mxu0 0.0
  %3274 = vmatpush1.msra.mxu0 0.0
  %3275 = vmatprep.subr.mxu0 0.0
  %3276 = vmatpush1.msra.mxu0 0.0
  %3277 = vmatprep.subr.mxu0 0.0
  %3278 = vmatpush1.msra.mxu0 0.0
  %3279 = vmatprep.subr.mxu0 0.0
  %3280 = vmatpush1.msra.mxu0 0.0
  %3281 = vmatprep.subr.mxu0 0.0
  %3282 = vmatpush1.msra.mxu0 0.0
  %3283 = vmatprep.subr.mxu0 0.0
  %3284 = vmatpush1.msra.mxu0 0.0
  %3285 = vmatprep.subr.mxu0 0.0
  %3286 = vmatpush1.msra.mxu0 0.0
  %3287 = vmatprep.subr.mxu0 0.0
  %3288 = vmatpush1.msra.mxu0 0.0
  %3289 = vmatprep.subr.mxu0 0.0
  %3290 = vmatpush1.msra.mxu0 0.0
  %3291 = vmatprep.subr.mxu0 0.0
  %3292 = vmatpush1.msra.mxu0 0.0
  %3293 = vmatprep.subr.mxu0 0.0
  %3294 = vmatpush1.msra.mxu0 0.0
  %3295 = vmatprep.subr.mxu0 0.0
  %3296 = vmatpush1.msra.mxu0 0.0
  %3297 = vmatprep.subr.mxu0 0.0
  %3298 = vmatpush1.msra.mxu0 0.0
  %3299 = vmatprep.subr.mxu0 0.0
  %3300 = vmatpush1.msra.mxu0 0.0
  %3301 = vmatprep.subr.mxu0 0.0
  %3302 = vmatpush1.msra.mxu0 0.0
  %3303 = vmatprep.subr.mxu0 0.0
  %3304 = vmatpush1.msra.mxu0 0.0
  %3305 = vmatprep.subr.mxu0 0.0
  %3306 = vmatpush1.msra.mxu0 0.0
  %3307 = vmatprep.subr.mxu0 0.0
  %3308 = vmatpush1.msra.mxu0 0.0
  %3309 = vmatprep.subr.mxu0 0.0
  %3310 = vmatpush1.msra.mxu0 0.0
  %3311 = vmatprep.subr.mxu0 0.0
  %3312 = vmatpush1.msra.mxu0 0.0
  %3313 = vmatprep.subr.mxu0 0.0
  %3314 = vmatpush1.msra.mxu0 0.0
  %3315 = vmatprep.subr.mxu0 0.0
  %3316 = vmatpush1.msra.mxu0 0.0
  %3317 = vmatprep.subr.mxu0 0.0
  %3318 = vmatpush1.msra.mxu0 0.0
  %3319 = vmatprep.subr.mxu0 0.0
  %3320 = vmatpush1.msra.mxu0 0.0
  %3321 = vmatprep.subr.mxu0 0.0
  %3322 = vmatpush1.msra.mxu0 0.0
  %3323 = vmatprep.subr.mxu0 0.0
  %3324 = vmatpush1.msra.mxu0 0.0
  %3325 = vmatprep.mubr.f32.mxu0 0.0
  %3326 = vmatmul.mubr.f32.gmra.mrb[0].mxu0 %v3259
  %v3327 = vpop.f32.mrb[0].mxu0
  %v3328 = vadd.f32 0.0, %v3327
  %v3329 = vpop.f32.mrb[0].mxu0
  %3330 = vdwg.mxu0
  %3331 = vrot.lane.b32.xlu0 %v2086, 40
  %v3332 = vpop.permute.xlu0 %3331
  %v3335 = vsel %vm271, %v3254, 0
  %3337 = vmatprep.subr.mxu0 0.0
  %3338 = vmatpush1.msra.mxu0 %v3332
  %3339 = vmatprep.subr.mxu0 0.0
  %3340 = vmatpush1.msra.mxu0 0.0
  %3341 = vmatprep.subr.mxu0 0.0
  %3342 = vmatpush1.msra.mxu0 0.0
  %3343 = vmatprep.subr.mxu0 0.0
  %3344 = vmatpush1.msra.mxu0 0.0
  %3345 = vmatprep.subr.mxu0 0.0
  %3346 = vmatpush1.msra.mxu0 0.0
  %3347 = vmatprep.subr.mxu0 0.0
  %3348 = vmatpush1.msra.mxu0 0.0
  %3349 = vmatprep.subr.mxu0 0.0
  %3350 = vmatpush1.msra.mxu0 0.0
  %3351 = vmatprep.subr.mxu0 0.0
  %3352 = vmatpush1.msra.mxu0 0.0
  %3353 = vmatprep.subr.mxu0 0.0
  %3354 = vmatpush1.msra.mxu0 0.0
  %3355 = vmatprep.subr.mxu0 0.0
  %3356 = vmatpush1.msra.mxu0 0.0
  %3357 = vmatprep.subr.mxu0 0.0
  %3358 = vmatpush1.msra.mxu0 0.0
  %3359 = vmatprep.subr.mxu0 0.0
  %3360 = vmatpush1.msra.mxu0 0.0
  %3361 = vmatprep.subr.mxu0 0.0
  %3362 = vmatpush1.msra.mxu0 0.0
  %3363 = vmatprep.subr.mxu0 0.0
  %3364 = vmatpush1.msra.mxu0 0.0
  %3365 = vmatprep.subr.mxu0 0.0
  %3366 = vmatpush1.msra.mxu0 0.0
  %3367 = vmatprep.subr.mxu0 0.0
  %3368 = vmatpush1.msra.mxu0 0.0
  %3369 = vmatprep.subr.mxu0 0.0
  %3370 = vmatpush1.msra.mxu0 0.0
  %3371 = vmatprep.subr.mxu0 0.0
  %3372 = vmatpush1.msra.mxu0 0.0
  %3373 = vmatprep.subr.mxu0 0.0
  %3374 = vmatpush1.msra.mxu0 0.0
  %3375 = vmatprep.subr.mxu0 0.0
  %3376 = vmatpush1.msra.mxu0 0.0
  %3377 = vmatprep.subr.mxu0 0.0
  %3378 = vmatpush1.msra.mxu0 0.0
  %3379 = vmatprep.subr.mxu0 0.0
  %3380 = vmatpush1.msra.mxu0 0.0
  %3381 = vmatprep.subr.mxu0 0.0
  %3382 = vmatpush1.msra.mxu0 0.0
  %3383 = vmatprep.subr.mxu0 0.0
  %3384 = vmatpush1.msra.mxu0 0.0
  %3385 = vmatprep.subr.mxu0 0.0
  %3386 = vmatpush1.msra.mxu0 0.0
  %3387 = vmatprep.subr.mxu0 0.0
  %3388 = vmatpush1.msra.mxu0 0.0
  %3389 = vmatprep.subr.mxu0 0.0
  %3390 = vmatpush1.msra.mxu0 0.0
  %3391 = vmatprep.subr.mxu0 0.0
  %3392 = vmatpush1.msra.mxu0 0.0
  %3393 = vmatprep.subr.mxu0 0.0
  %3394 = vmatpush1.msra.mxu0 0.0
  %3395 = vmatprep.subr.mxu0 0.0
  %3396 = vmatpush1.msra.mxu0 0.0
  %3397 = vmatprep.subr.mxu0 0.0
  %3398 = vmatpush1.msra.mxu0 0.0
  %3399 = vmatprep.subr.mxu0 0.0
  %3400 = vmatpush1.msra.mxu0 0.0
  %3401 = vmatprep.mubr.f32.mxu0 0.0
  %3402 = vmatmul.mubr.f32.gmra.mrb[0].mxu0 %v3335
  %v3403 = vpop.f32.mrb[0].mxu0
  %v3404 = vadd.f32 0.0, %v3403
  %v3405 = vpop.f32.mrb[0].mxu0
  %3406 = vdwg.mxu0
  %3409 = vrot.lane.b32.xlu0 %v2668, 8
  %v3410 = vpop.permute.xlu0 %3409
  %3411 = vrot.lane.b32.xlu0 %v2744, 8
  %v3412 = vpop.permute.xlu0 %3411
  %3417 = vrot.lane.b32.xlu0 %v2998, 16
  %v3418 = vpop.permute.xlu0 %3417
  %3419 = vrot.lane.b32.xlu0 %v3074, 16
  %v3420 = vpop.permute.xlu0 %3419
  %3425 = vrot.lane.b32.xlu0 %v3328, 24
  %v3426 = vpop.permute.xlu0 %3425
  %3427 = vrot.lane.b32.xlu0 %v3404, 24
  %v3428 = vpop.permute.xlu0 %3427
  %v3431 = vsel %vm271, %v2338, %v3410
  %v3432 = vsel %vm271, %v2414, %v3412
  %v3433 = vsel %vm1613, %v3431, %v3418
  %v3434 = vsel %vm1613, %v3432, %v3420
  %v3435 = vsel %vm1616, %v3433, %v3426
  %v3436 = vsel %vm1616, %v3434, %v3428
  %s3437 = scalar_lea.vmem %s5, 32
  %v3438 = vld [vmem:[%s3437] sm:$0xff]
  %v3439 = vld [vmem:[%s3437 + $0x8] sm:$0xff]
  %v3440 = vld [vmem:[%s3437 + $0x10] sm:$0xff]
  %v3441 = vld [vmem:[%s3437 + $0x18] sm:$0xff]
  %s3442 = scalar_lea.vmem %s6, 1
  %v3443 = vld [vmem:[%s3442] sm:$0x1]
  %v3445 = vlaneseq
  %v3446 = vshrl.u32 %v3445, 7
  %v3447 = vsub.s32 0, %v3446
  %v3448 = vrot.slane %v3443, %v3447
  %v3451 = vsel %vm186, %v3435, 0
  %v3454 = vsel %vm186, %v3436, 0
  %3456 = vmatprep.subr.mxu0 0.0
  %3457 = vmatpush1.msra.mxu0 %v3438
  %3458 = vmatprep.subr.mxu0 0.0
  %3459 = vmatpush1.msra.mxu0 %v3439
  %3460 = vmatprep.subr.mxu0 0.0
  %3461 = vmatpush1.msra.mxu0 %v3440
  %3462 = vmatprep.subr.mxu0 0.0
  %3463 = vmatpush1.msra.mxu0 %v3441
  %3464 = vmatprep.subr.mxu0 0.0
  %3465 = vmatpush1.msra.mxu0 0.0
  %3466 = vmatprep.subr.mxu0 0.0
  %3467 = vmatpush1.msra.mxu0 0.0
  %3468 = vmatprep.subr.mxu0 0.0
  %3469 = vmatpush1.msra.mxu0 0.0
  %3470 = vmatprep.subr.mxu0 0.0
  %3471 = vmatpush1.msra.mxu0 0.0
  %3472 = vmatprep.subr.mxu0 0.0
  %3473 = vmatpush1.msra.mxu0 0.0
  %3474 = vmatprep.subr.mxu0 0.0
  %3475 = vmatpush1.msra.mxu0 0.0
  %3476 = vmatprep.subr.mxu0 0.0
  %3477 = vmatpush1.msra.mxu0 0.0
  %3478 = vmatprep.subr.mxu0 0.0
  %3479 = vmatpush1.msra.mxu0 0.0
  %3480 = vmatprep.subr.mxu0 0.0
  %3481 = vmatpush1.msra.mxu0 0.0
  %3482 = vmatprep.subr.mxu0 0.0
  %3483 = vmatpush1.msra.mxu0 0.0
  %3484 = vmatprep.subr.mxu0 0.0
  %3485 = vmatpush1.msra.mxu0 0.0
  %3486 = vmatprep.subr.mxu0 0.0
  %3487 = vmatpush1.msra.mxu0 0.0
  %3488 = vmatprep.subr.mxu0 0.0
  %3489 = vmatpush1.msra.mxu0 0.0
  %3490 = vmatprep.subr.mxu0 0.0
  %3491 = vmatpush1.msra.mxu0 0.0
  %3492 = vmatprep.subr.mxu0 0.0
  %3493 = vmatpush1.msra.mxu0 0.0
  %3494 = vmatprep.subr.mxu0 0.0
  %3495 = vmatpush1.msra.mxu0 0.0
  %3496 = vmatprep.subr.mxu0 0.0
  %3497 = vmatpush1.msra.mxu0 0.0
  %3498 = vmatprep.subr.mxu0 0.0
  %3499 = vmatpush1.msra.mxu0 0.0
  %3500 = vmatprep.subr.mxu0 0.0
  %3501 = vmatpush1.msra.mxu0 0.0
  %3502 = vmatprep.subr.mxu0 0.0
  %3503 = vmatpush1.msra.mxu0 0.0
  %3504 = vmatprep.subr.mxu0 0.0
  %3505 = vmatpush1.msra.mxu0 0.0
  %3506 = vmatprep.subr.mxu0 0.0
  %3507 = vmatpush1.msra.mxu0 0.0
  %3508 = vmatprep.subr.mxu0 0.0
  %3509 = vmatpush1.msra.mxu0 0.0
  %3510 = vmatprep.subr.mxu0 0.0
  %3511 = vmatpush1.msra.mxu0 0.0
  %3512 = vmatprep.subr.mxu0 0.0
  %3513 = vmatpush1.msra.mxu0 0.0
  %3514 = vmatprep.subr.mxu0 0.0
  %3515 = vmatpush1.msra.mxu0 0.0
  %3516 = vmatprep.subr.mxu0 0.0
  %3517 = vmatpush1.msra.mxu0 0.0
  %3518 = vmatprep.subr.mxu0 0.0
  %3519 = vmatpush1.msra.mxu0 0.0
  %3520 = vmatprep.mubr.f32.mxu0 0.0
  %3521 = vmatmul.mubr.f32.gmra.mrb[0].mxu0 %v3451
  %v3522 = vpop.f32.mrb[0].mxu0
  %v3523 = vadd.f32 %v3448, %v3522
  %v3524 = vpop.f32.mrb[0].mxu0
  %3525 = vmatprep.mubr.f32.mxu0 0.0
  %3526 = vmatmul.mubr.f32.gmra.mrb[0].mxu0 %v3454
  %v3527 = vpop.f32.mrb[0].mxu0
  %v3528 = vadd.f32 %v3448, %v3527
  %v3529 = vpop.f32.mrb[0].mxu0
  %3530 = vdwg.mxu0
  %v3531 = vadd.f32 %v1993, %v3523
  %v3532 = vadd.f32 %v1994, %v3528
  %s3533 = scalar_lea.vmem %s7, 1
  %v3534 = vld [vmem:[%s3533] sm:$0x1]
  %s3535 = scalar_lea.vmem %s8, 1
  %v3536 = vld [vmem:[%s3535] sm:$0x1]
  %v3537 = vsel %vm186, %v3531, 0.0
  %3538 = vadd.xlane.f32.xlu0 %v3537
  %v3539 = vpop.xlane.xlu0 %3538
  %v3540 = vsel %vm186, %v3532, 0.0
  %3541 = vadd.xlane.f32.xlu0 %v3540
  %v3542 = vpop.xlane.xlu0 %3541
  %v3543 = vmul.f32 %v3539, %v1721
  %v3544 = vmul.f32 %v3542, %v1721
  %v3545 = vsub.f32 %v3531, %v3543
  %v3546 = vsub.f32 %v3532, %v3544
  %v3547 = vmul.f32 %v3545, %v3545
  %v3548 = vmul.f32 %v3546, %v3546
  %v3549 = vsel %vm186, %v3547, 0.0
  %3550 = vadd.xlane.f32.xlu0 %v3549
  %v3551 = vpop.xlane.xlu0 %3550
  %v3552 = vsel %vm186, %v3548, 0.0
  %3553 = vadd.xlane.f32.xlu0 %v3552
  %v3554 = vpop.xlane.xlu0 %3553
  %v3555 = vmul.f32 %v3551, %v1721
  %v3556 = vmul.f32 %v3554, %v1721
  %v3557 = vadd.f32 %v3555, 1e-05
  %v3558 = vadd.f32 %v3556, 1e-05
  %v3559 = vrsqrt.pop %v3557
  %v3560 = vrsqrt.pop %v3558
  %v3561 = vmul.f32 %v3545, %v3559
  %v3562 = vmul.f32 %v3546, %v3560
  %v3564 = vlaneseq
  %v3565 = vshrl.u32 %v3564, 7
  %v3566 = vsub.s32 0, %v3565
  %v3567 = vrot.slane %v3534, %v3566
  %v3569 = vmul.f32 %v3561, %v3567
  %v3570 = vmul.f32 %v3562, %v3567
  %v3572 = vlaneseq
  %v3573 = vshrl.u32 %v3572, 7
  %v3574 = vsub.s32 0, %v3573
  %v3575 = vrot.slane %v3536, %v3574
  %v3577 = vadd.f32 %v3569, %v3575
  %v3578 = vadd.f32 %v3570, %v3575
  %s3579 = scalar_lea.vmem %s9, 32
  %v3580 = vld [vmem:[%s3579] sm:$0xff]
  %v3581 = vld [vmem:[%s3579 + $0x8] sm:$0xff]
  %v3582 = vld [vmem:[%s3579 + $0x10] sm:$0xff]
  %v3583 = vld [vmem:[%s3579 + $0x18] sm:$0xff]
  %s3584 = scalar_lea.vmem %s10, 1
  %v3585 = vld [vmem:[%s3584] sm:$0x1]
  %v3587 = vlaneseq
  %v3588 = vshrl.u32 %v3587, 7
  %v3589 = vsub.s32 0, %v3588
  %v3590 = vrot.slane %v3585, %v3589
  %v3593 = vsel %vm186, %v3577, 0
  %v3596 = vsel %vm186, %v3578, 0
  %3598 = vmatprep.subr.mxu0 0.0
  %3599 = vmatpush1.msra.mxu0 %v3580
  %3600 = vmatprep.subr.mxu0 0.0
  %3601 = vmatpush1.msra.mxu0 %v3581
  %3602 = vmatprep.subr.mxu0 0.0
  %3603 = vmatpush1.msra.mxu0 %v3582
  %3604 = vmatprep.subr.mxu0 0.0
  %3605 = vmatpush1.msra.mxu0 %v3583
  %3606 = vmatprep.subr.mxu0 0.0
  %3607 = vmatpush1.msra.mxu0 0.0
  %3608 = vmatprep.subr.mxu0 0.0
  %3609 = vmatpush1.msra.mxu0 0.0
  %3610 = vmatprep.subr.mxu0 0.0
  %3611 = vmatpush1.msra.mxu0 0.0
  %3612 = vmatprep.subr.mxu0 0.0
  %3613 = vmatpush1.msra.mxu0 0.0
  %3614 = vmatprep.subr.mxu0 0.0
  %3615 = vmatpush1.msra.mxu0 0.0
  %3616 = vmatprep.subr.mxu0 0.0
  %3617 = vmatpush1.msra.mxu0 0.0
  %3618 = vmatprep.subr.mxu0 0.0
  %3619 = vmatpush1.msra.mxu0 0.0
  %3620 = vmatprep.subr.mxu0 0.0
  %3621 = vmatpush1.msra.mxu0 0.0
  %3622 = vmatprep.subr.mxu0 0.0
  %3623 = vmatpush1.msra.mxu0 0.0
  %3624 = vmatprep.subr.mxu0 0.0
  %3625 = vmatpush1.msra.mxu0 0.0
  %3626 = vmatprep.subr.mxu0 0.0
  %3627 = vmatpush1.msra.mxu0 0.0
  %3628 = vmatprep.subr.mxu0 0.0
  %3629 = vmatpush1.msra.mxu0 0.0
  %3630 = vmatprep.subr.mxu0 0.0
  %3631 = vmatpush1.msra.mxu0 0.0
  %3632 = vmatprep.subr.mxu0 0.0
  %3633 = vmatpush1.msra.mxu0 0.0
  %3634 = vmatprep.subr.mxu0 0.0
  %3635 = vmatpush1.msra.mxu0 0.0
  %3636 = vmatprep.subr.mxu0 0.0
  %3637 = vmatpush1.msra.mxu0 0.0
  %3638 = vmatprep.subr.mxu0 0.0
  %3639 = vmatpush1.msra.mxu0 0.0
  %3640 = vmatprep.subr.mxu0 0.0
  %3641 = vmatpush1.msra.mxu0 0.0
  %3642 = vmatprep.subr.mxu0 0.0
  %3643 = vmatpush1.msra.mxu0 0.0
  %3644 = vmatprep.subr.mxu0 0.0
  %3645 = vmatpush1.msra.mxu0 0.0
  %3646 = vmatprep.subr.mxu0 0.0
  %3647 = vmatpush1.msra.mxu0 0.0
  %3648 = vmatprep.subr.mxu0 0.0
  %3649 = vmatpush1.msra.mxu0 0.0
  %3650 = vmatprep.subr.mxu0 0.0
  %3651 = vmatpush1.msra.mxu0 0.0
  %3652 = vmatprep.subr.mxu0 0.0
  %3653 = vmatpush1.msra.mxu0 0.0
  %3654 = vmatprep.subr.mxu0 0.0
  %3655 = vmatpush1.msra.mxu0 0.0
  %3656 = vmatprep.subr.mxu0 0.0
  %3657 = vmatpush1.msra.mxu0 0.0
  %3658 = vmatprep.subr.mxu0 0.0
  %3659 = vmatpush1.msra.mxu0 0.0
  %3660 = vmatprep.subr.mxu0 0.0
  %3661 = vmatpush1.msra.mxu0 0.0
  %3662 = vmatprep.mubr.f32.mxu0 0.0
  %3663 = vmatmul.mubr.f32.gmra.mrb[0].mxu0 %v3593
  %v3664 = vpop.f32.mrb[0].mxu0
  %v3665 = vadd.f32 %v3590, %v3664
  %v3666 = vpop.f32.mrb[0].mxu0
  %3667 = vmatprep.mubr.f32.mxu0 0.0
  %3668 = vmatmul.mubr.f32.gmra.mrb[0].mxu0 %v3596
  %v3669 = vpop.f32.mrb[0].mxu0
  %v3670 = vadd.f32 %v3590, %v3669
  %v3671 = vpop.f32.mrb[0].mxu0
  %3672 = vdwg.mxu0
  %v3673 = vmax.f32 %v3665, 0.0
  %v3674 = vmax.f32 %v3670, 0.0
  %s3675 = scalar_lea.vmem %s11, 64
  %v3676 = vld [vmem:[%s3675] sm:$0xff]
  %v3677 = vld [vmem:[%s3675 + $0x8] sm:$0xff]
  %v3678 = vld [vmem:[%s3675 + $0x10] sm:$0xff]
  %v3679 = vld [vmem:[%s3675 + $0x18] sm:$0xff]
  %v3680 = vld [vmem:[%s3675 + $0x20] sm:$0xff]
  %v3681 = vld [vmem:[%s3675 + $0x28] sm:$0xff]
  %v3682 = vld [vmem:[%s3675 + $0x30] sm:$0xff]
  %v3683 = vld [vmem:[%s3675 + $0x38] sm:$0xff]
  %s3684 = scalar_lea.vmem %s12, 1
  %v3685 = vld [vmem:[%s3684] sm:$0x1]
  %v3687 = vlaneseq
  %v3688 = vshrl.u32 %v3687, 7
  %v3689 = vsub.s32 0, %v3688
  %v3690 = vrot.slane %v3685, %v3689
  %v3693 = vsel %vm1867, %v3673, 0
  %v3696 = vsel %vm1867, %v3674, 0
  %3698 = vmatprep.subr.mxu0 0.0
  %3699 = vmatpush1.msra.mxu0 %v3676
  %3700 = vmatprep.subr.mxu0 0.0
  %3701 = vmatpush1.msra.mxu0 %v3677
  %3702 = vmatprep.subr.mxu0 0.0
  %3703 = vmatpush1.msra.mxu0 %v3678
  %3704 = vmatprep.subr.mxu0 0.0
  %3705 = vmatpush1.msra.mxu0 %v3679
  %3706 = vmatprep.subr.mxu0 0.0
  %3707 = vmatpush1.msra.mxu0 %v3680
  %3708 = vmatprep.subr.mxu0 0.0
  %3709 = vmatpush1.msra.mxu0 %v3681
  %3710 = vmatprep.subr.mxu0 0.0
  %3711 = vmatpush1.msra.mxu0 %v3682
  %3712 = vmatprep.subr.mxu0 0.0
  %3713 = vmatpush1.msra.mxu0 %v3683
  %3714 = vmatprep.subr.mxu0 0.0
  %3715 = vmatpush1.msra.mxu0 0.0
  %3716 = vmatprep.subr.mxu0 0.0
  %3717 = vmatpush1.msra.mxu0 0.0
  %3718 = vmatprep.subr.mxu0 0.0
  %3719 = vmatpush1.msra.mxu0 0.0
  %3720 = vmatprep.subr.mxu0 0.0
  %3721 = vmatpush1.msra.mxu0 0.0
  %3722 = vmatprep.subr.mxu0 0.0
  %3723 = vmatpush1.msra.mxu0 0.0
  %3724 = vmatprep.subr.mxu0 0.0
  %3725 = vmatpush1.msra.mxu0 0.0
  %3726 = vmatprep.subr.mxu0 0.0
  %3727 = vmatpush1.msra.mxu0 0.0
  %3728 = vmatprep.subr.mxu0 0.0
  %3729 = vmatpush1.msra.mxu0 0.0
  %3730 = vmatprep.subr.mxu0 0.0
  %3731 = vmatpush1.msra.mxu0 0.0
  %3732 = vmatprep.subr.mxu0 0.0
  %3733 = vmatpush1.msra.mxu0 0.0
  %3734 = vmatprep.subr.mxu0 0.0
  %3735 = vmatpush1.msra.mxu0 0.0
  %3736 = vmatprep.subr.mxu0 0.0
  %3737 = vmatpush1.msra.mxu0 0.0
  %3738 = vmatprep.subr.mxu0 0.0
  %3739 = vmatpush1.msra.mxu0 0.0
  %3740 = vmatprep.subr.mxu0 0.0
  %3741 = vmatpush1.msra.mxu0 0.0
  %3742 = vmatprep.subr.mxu0 0.0
  %3743 = vmatpush1.msra.mxu0 0.0
  %3744 = vmatprep.subr.mxu0 0.0
  %3745 = vmatpush1.msra.mxu0 0.0
  %3746 = vmatprep.subr.mxu0 0.0
  %3747 = vmatpush1.msra.mxu0 0.0
  %3748 = vmatprep.subr.mxu0 0.0
  %3749 = vmatpush1.msra.mxu0 0.0
  %3750 = vmatprep.subr.mxu0 0.0
  %3751 = vmatpush1.msra.mxu0 0.0
  %3752 = vmatprep.subr.mxu0 0.0
  %3753 = vmatpush1.msra.mxu0 0.0
  %3754 = vmatprep.subr.mxu0 0.0
  %3755 = vmatpush1.msra.mxu0 0.0
  %3756 = vmatprep.subr.mxu0 0.0
  %3757 = vmatpush1.msra.mxu0 0.0
  %3758 = vmatprep.subr.mxu0 0.0
  %3759 = vmatpush1.msra.mxu0 0.0
  %3760 = vmatprep.subr.mxu0 0.0
  %3761 = vmatpush1.msra.mxu0 0.0
  %3762 = vmatprep.mubr.f32.mxu0 0.0
  %3763 = vmatmul.mubr.f32.gmra.mrb[0].mxu0 %v3693
  %v3764 = vpop.f32.mrb[0].mxu0
  %v3765 = vadd.f32 %v3690, %v3764
  %v3766 = vpop.f32.mrb[0].mxu0
  %3767 = vmatprep.mubr.f32.mxu0 0.0
  %3768 = vmatmul.mubr.f32.gmra.mrb[0].mxu0 %v3696
  %v3769 = vpop.f32.mrb[0].mxu0
  %v3770 = vadd.f32 %v3690, %v3769
  %v3771 = vpop.f32.mrb[0].mxu0
  %3772 = vdwg.mxu0
  %v3773 = vadd.f32 %v3577, %v3765
  %v3774 = vadd.f32 %v3578, %v3770
  %s3775 = scalar_lea.vmem %s13, 1
  %v3776 = vld [vmem:[%s3775] sm:$0x1]
  %s3777 = scalar_lea.vmem %s14, 1
  %v3778 = vld [vmem:[%s3777] sm:$0x1]
  %v3779 = vsel %vm186, %v3773, 0.0
  %3780 = vadd.xlane.f32.xlu0 %v3779
  %v3781 = vpop.xlane.xlu0 %3780
  %v3782 = vsel %vm186, %v3774, 0.0
  %3783 = vadd.xlane.f32.xlu0 %v3782
  %v3784 = vpop.xlane.xlu0 %3783
  %v3785 = vmul.f32 %v3781, %v1721
  %v3786 = vmul.f32 %v3784, %v1721
  %v3787 = vsub.f32 %v3773, %v3785
  %v3788 = vsub.f32 %v3774, %v3786
  %v3789 = vmul.f32 %v3787, %v3787
  %v3790 = vmul.f32 %v3788, %v3788
  %v3791 = vsel %vm186, %v3789, 0.0
  %3792 = vadd.xlane.f32.xlu0 %v3791
  %v3793 = vpop.xlane.xlu0 %3792
  %v3794 = vsel %vm186, %v3790, 0.0
  %3795 = vadd.xlane.f32.xlu0 %v3794
  %v3796 = vpop.xlane.xlu0 %3795
  %v3797 = vmul.f32 %v3793, %v1721
  %v3798 = vmul.f32 %v3796, %v1721
  %v3799 = vadd.f32 %v3797, 1e-05
  %v3800 = vadd.f32 %v3798, 1e-05
  %v3801 = vrsqrt.pop %v3799
  %v3802 = vrsqrt.pop %v3800
  %v3803 = vmul.f32 %v3787, %v3801
  %v3804 = vmul.f32 %v3788, %v3802
  %v3806 = vlaneseq
  %v3807 = vshrl.u32 %v3806, 7
  %v3808 = vsub.s32 0, %v3807
  %v3809 = vrot.slane %v3776, %v3808
  %v3811 = vmul.f32 %v3803, %v3809
  %v3812 = vmul.f32 %v3804, %v3809
  %v3814 = vlaneseq
  %v3815 = vshrl.u32 %v3814, 7
  %v3816 = vsub.s32 0, %v3815
  %v3817 = vrot.slane %v3778, %v3816
  %v3819 = vadd.f32 %v3811, %v3817
  %v3820 = vadd.f32 %v3812, %v3817
  %v3821 = vld [vmem:[%s15] sm:$0xff]
  %v3822 = vld [vmem:[%s15 + $0x8] sm:$0xff]
  %v3823 = vld [vmem:[%s15 + $0x10] sm:$0xff]
  %v3824 = vld [vmem:[%s15 + $0x18] sm:$0xff]
  %v3825 = vld [vmem:[%s16] sm:$0x1]
  %v3827 = vlaneseq
  %v3828 = vshrl.u32 %v3827, 7
  %v3829 = vsub.s32 0, %v3828
  %v3830 = vrot.slane %v3825, %v3829
  %v3833 = vsel %vm186, %v3819, 0
  %v3836 = vsel %vm186, %v3820, 0
  %3838 = vmatprep.subr.mxu0 0.0
  %3839 = vmatpush1.msra.mxu0 %v3821
  %3840 = vmatprep.subr.mxu0 0.0
  %3841 = vmatpush1.msra.mxu0 %v3822
  %3842 = vmatprep.subr.mxu0 0.0
  %3843 = vmatpush1.msra.mxu0 %v3823
  %3844 = vmatprep.subr.mxu0 0.0
  %3845 = vmatpush1.msra.mxu0 %v3824
  %3846 = vmatprep.subr.mxu0 0.0
  %3847 = vmatpush1.msra.mxu0 0.0
  %3848 = vmatprep.subr.mxu0 0.0
  %3849 = vmatpush1.msra.mxu0 0.0
  %3850 = vmatprep.subr.mxu0 0.0
  %3851 = vmatpush1.msra.mxu0 0.0
  %3852 = vmatprep.subr.mxu0 0.0
  %3853 = vmatpush1.msra.mxu0 0.0
  %3854 = vmatprep.subr.mxu0 0.0
  %3855 = vmatpush1.msra.mxu0 0.0
  %3856 = vmatprep.subr.mxu0 0.0
  %3857 = vmatpush1.msra.mxu0 0.0
  %3858 = vmatprep.subr.mxu0 0.0
  %3859 = vmatpush1.msra.mxu0 0.0
  %3860 = vmatprep.subr.mxu0 0.0
  %3861 = vmatpush1.msra.mxu0 0.0
  %3862 = vmatprep.subr.mxu0 0.0
  %3863 = vmatpush1.msra.mxu0 0.0
  %3864 = vmatprep.subr.mxu0 0.0
  %3865 = vmatpush1.msra.mxu0 0.0
  %3866 = vmatprep.subr.mxu0 0.0
  %3867 = vmatpush1.msra.mxu0 0.0
  %3868 = vmatprep.subr.mxu0 0.0
  %3869 = vmatpush1.msra.mxu0 0.0
  %3870 = vmatprep.subr.mxu0 0.0
  %3871 = vmatpush1.msra.mxu0 0.0
  %3872 = vmatprep.subr.mxu0 0.0
  %3873 = vmatpush1.msra.mxu0 0.0
  %3874 = vmatprep.subr.mxu0 0.0
  %3875 = vmatpush1.msra.mxu0 0.0
  %3876 = vmatprep.subr.mxu0 0.0
  %3877 = vmatpush1.msra.mxu0 0.0
  %3878 = vmatprep.subr.mxu0 0.0
  %3879 = vmatpush1.msra.mxu0 0.0
  %3880 = vmatprep.subr.mxu0 0.0
  %3881 = vmatpush1.msra.mxu0 0.0
  %3882 = vmatprep.subr.mxu0 0.0
  %3883 = vmatpush1.msra.mxu0 0.0
  %3884 = vmatprep.subr.mxu0 0.0
  %3885 = vmatpush1.msra.mxu0 0.0
  %3886 = vmatprep.subr.mxu0 0.0
  %3887 = vmatpush1.msra.mxu0 0.0
  %3888 = vmatprep.subr.mxu0 0.0
  %3889 = vmatpush1.msra.mxu0 0.0
  %3890 = vmatprep.subr.mxu0 0.0
  %3891 = vmatpush1.msra.mxu0 0.0
  %3892 = vmatprep.subr.mxu0 0.0
  %3893 = vmatpush1.msra.mxu0 0.0
  %3894 = vmatprep.subr.mxu0 0.0
  %3895 = vmatpush1.msra.mxu0 0.0
  %3896 = vmatprep.subr.mxu0 0.0
  %3897 = vmatpush1.msra.mxu0 0.0
  %3898 = vmatprep.subr.mxu0 0.0
  %3899 = vmatpush1.msra.mxu0 0.0
  %3900 = vmatprep.subr.mxu0 0.0
  %3901 = vmatpush1.msra.mxu0 0.0
  %3902 = vmatprep.mubr.f32.mxu0 0.0
  %3903 = vmatmul.mubr.f32.gmra.mrb[0].mxu0 %v3833
  %v3904 = vpop.f32.mrb[0].mxu0
  %v3905 = vadd.f32 %v3830, %v3904
  %v3906 = vpop.f32.mrb[0].mxu0
  %3907 = vmatprep.mubr.f32.mxu0 0.0
  %3908 = vmatmul.mubr.f32.gmra.mrb[0].mxu0 %v3836
  %v3909 = vpop.f32.mrb[0].mxu0
  %v3910 = vadd.f32 %v3830, %v3909
  %v3911 = vpop.f32.mrb[0].mxu0
  %3912 = vdwg.mxu0
  %3913 = vst [vmem:[%s17] sm:$0xff] %v3905
  %3914 = vst [vmem:[%s17 + $0x8] sm:$0xff] %v3910
  // Predicated region
  $region70: #{transformer_forward.1} parent=0 // pred_check
    _
  $region71: #{transformer_forward.1} parent=0 // pred_check_branch
    %3916 = sbr.rel (0) target = $region73
  $region72: #{transformer_forward.1} parent=0 // pred_region
    _
  $region73: #{transformer_forward.1} parent=0 // pred_fallthru
    _
  // Predicated region
  $region74: #{transformer_forward.1} parent=0 // pred_check
    _
  $region75: #{transformer_forward.1} parent=0 // pred_check_branch
    %3918 = sbr.rel (0) target = $region77
  $region76: #{transformer_forward.1} parent=0 // pred_region
    _
  $region77: #{transformer_forward.1} parent=0 // pred_fallthru
    _

</llo_original>
